<compile_context>
chip_gen: v7x
topology: tpu7x:2x2x1
jax: 0.10.0
libtpu: 0.0.40
codegen_flags: <defaults>
</compile_context>

<pallas_src>
import functools

import jax
import jax.numpy as jnp
from jax.experimental import pallas as pl
from jax.experimental.pallas import tpu as pltpu

EPS = 1e-5  # nn.BatchNorm2d default eps


# ----------------------------- Pallas kernel -------------------------------- #

def _conv_bn_relu_branch(x_ref, pad_ref, w_ref, g_ref, b_ref, o_ref):
    """3x3 'same' conv (one im2col matmul) + training-mode BN + ReLU for one branch.

    x_ref  : (N, H, W, Cin)      NHWC input, f32
    pad_ref: (N, H+2, W+2, Cin)  VMEM scratch used for in-kernel zero padding
    w_ref  : (9*Cin, Cout)       im2col weights (column order: dy, dx, cin)
    g_ref  : (Cout, 1)           BN gamma
    b_ref  : (Cout, 1)           BN beta
    o_ref  : (N, Cout, H*W)      output slab (free row-major reshape to NCHW outside)
    """
    N, H, W, Cin = x_ref.shape
    Cout = w_ref.shape[1]
    M = N * H * W
    HW = H * W

    # Zero-pad inside the kernel (no XLA pad -> no extra HBM round trip).
    pad_ref[...] = jnp.zeros(pad_ref.shape, pad_ref.dtype)
    pad_ref[:, 1:H + 1, 1:W + 1, :] = x_ref[...]

    # im2col: build (M, 9*Cin) patch matrix; leading-dim reshapes only (layout-free).
    cols = []
    for dy in range(3):
        for dx in range(3):
            cols.append(pad_ref[:, dy:dy + H, dx:dx + W, :].reshape(M, Cin))
    patches = jnp.concatenate(cols, axis=1)                               # (M, 9*Cin)

    # Single MXU matmul with f32 accumulation; transpose so spatial sits on lanes.
    y = jnp.dot(patches, w_ref[...], preferred_element_type=jnp.float32)  # (M, Cout)
    yt = y.T                                                              # (Cout, M)

    # Training-mode BatchNorm2d (biased batch stats over N,H,W) + ReLU, lane dense.
    mean = jnp.mean(yt, axis=1, keepdims=True)
    var = jnp.mean(jnp.square(yt - mean), axis=1, keepdims=True)
    yn = (yt - mean) * jax.lax.rsqrt(var + EPS)
    out = jnp.maximum(yn * g_ref[...] + b_ref[...], 0.0)                  # (Cout, M)

    # Store per batch element as a lane-dense (Cout, H*W) slab -> NCHW for free outside.
    for n in range(N):
        o_ref[n] = out[:, n * HW:(n + 1) * HW].astype(o_ref.dtype)


def _first_octave_cbr_kernel(x_ref, xp_ref, wh_ref, wl_ref,
                             gh_ref, bh_ref, gl_ref, bl_ref,
                             oh_ref, ol_ref, padh_ref, padl_ref):
    # High-frequency branch: full-resolution input.
    _conv_bn_relu_branch(x_ref, padh_ref, wh_ref, gh_ref, bh_ref, oh_ref)
    # Low-frequency branch: 2x2 average-pooled input.
    _conv_bn_relu_branch(xp_ref, padl_ref, wl_ref, gl_ref, bl_ref, ol_ref)


# ------------------------------ Wrapper -------------------------------------- #

def _avg_pool2_nhwc(x):
    # (N, H, W, C) -> (N, H//2, W//2, C); matches nn.AvgPool2d((2, 2), stride=2).
    N, H, W, C = x.shape
    return x.reshape(N, H // 2, 2, W // 2, 2, C).mean(axis=(2, 4))


@jax.jit
def _first_octave_cbr_impl(x_nchw, w_h, w_l, gamma_h, beta_h, gamma_l, beta_l):
    N, Cin, H, W = x_nchw.shape
    Ch = w_h.shape[1]
    Cl = w_l.shape[1]
    Hh, Wh = H // 2, W // 2

    # One NCHW -> NHWC boundary transpose (keep the surrounding model NHWC to drop it).
    x_nhwc = jnp.transpose(x_nchw, (0, 2, 3, 1)).astype(jnp.float32)
    x_pool = _avg_pool2_nhwc(x_nhwc)

    vmem = pl.BlockSpec(memory_space=pltpu.MemorySpace.VMEM)  # whole array in VMEM
    yh_flat, yl_flat = pl.pallas_call(
        _first_octave_cbr_kernel,
        out_shape=(jax.ShapeDtypeStruct((N, Ch, H * W), jnp.float32),
                   jax.ShapeDtypeStruct((N, Cl, Hh * Wh), jnp.float32)),
        in_specs=[vmem] * 8,
        out_specs=(vmem, vmem),
        scratch_shapes=[pltpu.VMEM((N, H + 2, W + 2, Cin), jnp.float32),
                        pltpu.VMEM((N, Hh + 2, Wh + 2, Cin), jnp.float32)],
    )(x_nhwc, x_pool, w_h, w_l, gamma_h, beta_h, gamma_l, beta_l)

    # Row-major reshape only (no data movement) to the PyTorch NCHW convention.
    return yh_flat.reshape(N, Ch, H, W), yl_flat.reshape(N, Cl, Hh, Wh)


def init_first_octave_cbr_params(key, in_channels, out_channels,
                                 alpha_in=0.0, alpha_out=0.5):
    end_h_x = int(in_channels * (1 - alpha_in))   # == in_channels for alpha_in = 0.0
    end_h_y = int(out_channels * (1 - alpha_out))
    w = 0.1 * jax.random.normal(key, (out_channels, in_channels, 3, 3), jnp.float32)
    # Pre-transpose/slice once: (Cout, Cin, kh, kw) -> (kh, kw, Cin, Cout) -> (9*Cin, Cout).
    w_k = jnp.transpose(w, (2, 3, 1, 0))
    w_h = w_k[:, :, :end_h_x, :end_h_y].reshape(9 * end_h_x, end_h_y)
    w_l = w_k[:, :, :end_h_x, end_h_y:].reshape(9 * end_h_x, out_channels - end_h_y)
    return dict(
        weights=w,                                   # torch-layout weights (for reference)
        w_h=w_h, w_l=w_l,
        gamma_h=jnp.ones((end_h_y, 1), jnp.float32),
        beta_h=jnp.zeros((end_h_y, 1), jnp.float32),
        gamma_l=jnp.ones((out_channels - end_h_y, 1), jnp.float32),
        beta_l=jnp.zeros((out_channels - end_h_y, 1), jnp.float32),
        end_h_x=end_h_x, end_h_y=end_h_y,
    )


def first_octave_cbr_forward(x, params):
    """x: (N, in_channels, H, W) NCHW -> (y_h NCHW, y_l NCHW) like FirstOctaveCBR."""
    return _first_octave_cbr_impl(
        x, params["w_h"], params["w_l"],
        params["gamma_h"], params["beta_h"], params["gamma_l"], params["beta_l"])


# ------------------------- Pure-JAX reference (check) ------------------------ #

def _reference_first_octave_cbr(x, params):
    w = params["weights"]
    end_h_x, end_h_y = params["end_h_x"], params["end_h_y"]
    N, C, H, W = x.shape
    xp = x.reshape(N, C, H // 2, 2, W // 2, 2).mean(axis=(3, 5))
    conv = functools.partial(
        jax.lax.conv_general_dilated,
        window_strides=(1, 1), padding=((1, 1), (1, 1)),
        dimension_numbers=("NCHW", "OIHW", "NCHW"),
        precision=jax.lax.Precision.HIGHEST)
    ch = conv(x, w[:end_h_y, :end_h_x])
    cl = conv(xp, w[end_h_y:, :end_h_x])

    def bn_relu(z, g, b):
        mu = z.mean(axis=(0, 2, 3), keepdims=True)
        var = jnp.square(z - mu).mean(axis=(0, 2, 3), keepdims=True)
        zn = (z - mu) * jax.lax.rsqrt(var + EPS)
        return jnp.maximum(zn * g.reshape(1, -1, 1, 1) + b.reshape(1, -1, 1, 1), 0.0)

    return (bn_relu(ch, params["gamma_h"], params["beta_h"]),
            bn_relu(cl, params["gamma_l"], params["beta_l"]))


if __name__ == "__main__":
    key = jax.random.PRNGKey(0)
    k_w, k_x, k_g1, k_b1, k_g2, k_b2 = jax.random.split(key, 6)

    batch, in_channels, out_channels, H, W = 2, 4, 8, 16, 16
    alpha_in, alpha_out = 0.0, 0.5                 # FirstOctaveCBR defaults
    c_h_out = int(out_channels * (1 - alpha_out))  # 4
    c_l_out = out_channels - c_h_out               # 4

    x = jax.random.normal(k_x, (batch, in_channels, H, W), dtype=jnp.float32)
    params = init_first_octave_cbr_params(k_w, in_channels, out_channels,
                                          alpha_in, alpha_out)
    # Non-trivial BN affine parameters so the parity check exercises gamma/beta.
    params["gamma_h"] = 1.0 + 0.1 * jax.random.normal(k_g1, (c_h_out, 1), jnp.float32)
    params["beta_h"] = 0.1 * jax.random.normal(k_b1, (c_h_out, 1), jnp.float32)
    params["gamma_l"] = 1.0 + 0.1 * jax.random.normal(k_g2, (c_l_out, 1), jnp.float32)
    params["beta_l"] = 0.1 * jax.random.normal(k_b2, (c_l_out, 1), jnp.float32)

    y_h, y_l = first_octave_cbr_forward(x, params)
    jax.block_until_ready((y_h, y_l))

    assert y_h.shape == (batch, c_h_out, H, W)
    assert y_l.shape == (batch, c_l_out, H // 2, W // 2)

    r_h, r_l = _reference_first_octave_cbr(x, params)
    assert jnp.allclose(y_h, r_h, atol=2e-3, rtol=2e-3), float(jnp.max(jnp.abs(y_h - r_h)))
    assert jnp.allclose(y_l, r_l, atol=2e-3, rtol=2e-3), float(jnp.max(jnp.abs(y_l - r_l)))

    print("KERNEL_OK")
</pallas_src>

<mosaic_0001>
module attributes {stable_mosaic.version = 11 : i64} {
  func.func @_first_octave_cbr_kernel(%arg0: memref<2x16x16x4xf32, #tpu.memory_space<vmem>>, %arg1: memref<2x8x8x4xf32, #tpu.memory_space<vmem>>, %arg2: memref<36x4xf32, #tpu.memory_space<vmem>>, %arg3: memref<36x4xf32, #tpu.memory_space<vmem>>, %arg4: memref<4x1xf32, #tpu.memory_space<vmem>>, %arg5: memref<4x1xf32, #tpu.memory_space<vmem>>, %arg6: memref<4x1xf32, #tpu.memory_space<vmem>>, %arg7: memref<4x1xf32, #tpu.memory_space<vmem>>, %arg8: memref<2x4x256xf32, #tpu.memory_space<vmem>>, %arg9: memref<2x4x64xf32, #tpu.memory_space<vmem>>, %arg10: memref<2x18x18x4xf32, #tpu.memory_space<vmem>>, %arg11: memref<2x10x10x4xf32, #tpu.memory_space<vmem>>) attributes {dimension_semantics = [], scalar_prefetch = 0 : i64, scratch_operands = 2 : i64, tpu.core_type = #tpu.core_type<tc>} {
    %cst = arith.constant 0.000000e+00 : f32
    %0 = vector.broadcast %cst : f32 to vector<2x18x18x4xf32>
    %c0 = arith.constant 0 : index
    %c0_0 = arith.constant 0 : index
    %c0_1 = arith.constant 0 : index
    %c0_2 = arith.constant 0 : index
    %1 = vector.load %arg10[%c0, %c0_0, %c0_1, %c0_2] : memref<2x18x18x4xf32, #tpu.memory_space<vmem>>, vector<2x18x18x4xf32>
    tpu.vector_store %arg10[%c0, %c0_0, %c0_1, %c0_2], %0 {strides = array<i32>} : memref<2x18x18x4xf32, #tpu.memory_space<vmem>>, vector<2x18x18x4xf32>,
    %c0_3 = arith.constant 0 : index
    %c0_4 = arith.constant 0 : index
    %c0_5 = arith.constant 0 : index
    %c0_6 = arith.constant 0 : index
    %2 = vector.load %arg0[%c0_3, %c0_4, %c0_5, %c0_6] : memref<2x16x16x4xf32, #tpu.memory_space<vmem>>, vector<2x16x16x4xf32>
    %c0_7 = arith.constant 0 : index
    %c1 = arith.constant 1 : index
    %c1_8 = arith.constant 1 : index
    %c0_9 = arith.constant 0 : index
    %3 = vector.load %arg10[%c0_7, %c1, %c1_8, %c0_9] : memref<2x18x18x4xf32, #tpu.memory_space<vmem>>, vector<2x16x16x4xf32>
    tpu.vector_store %arg10[%c0_7, %c1, %c1_8, %c0_9], %2 {strides = array<i32>} : memref<2x18x18x4xf32, #tpu.memory_space<vmem>>, vector<2x16x16x4xf32>,
    %c0_10 = arith.constant 0 : index
    %c0_11 = arith.constant 0 : index
    %c0_12 = arith.constant 0 : index
    %c0_13 = arith.constant 0 : index
    %4 = vector.load %arg10[%c0_10, %c0_11, %c0_12, %c0_13] : memref<2x18x18x4xf32, #tpu.memory_space<vmem>>, vector<2x16x16x4xf32>
    %5 = vector.shape_cast %4 : vector<2x16x16x4xf32> to vector<512x4xf32>
    %c0_14 = arith.constant 0 : index
    %c0_15 = arith.constant 0 : index
    %c1_16 = arith.constant 1 : index
    %c0_17 = arith.constant 0 : index
    %6 = vector.load %arg10[%c0_14, %c0_15, %c1_16, %c0_17] : memref<2x18x18x4xf32, #tpu.memory_space<vmem>>, vector<2x16x16x4xf32>
    %7 = vector.shape_cast %6 : vector<2x16x16x4xf32> to vector<512x4xf32>
    %c0_18 = arith.constant 0 : index
    %c0_19 = arith.constant 0 : index
    %c2 = arith.constant 2 : index
    %c0_20 = arith.constant 0 : index
    %8 = vector.load %arg10[%c0_18, %c0_19, %c2, %c0_20] : memref<2x18x18x4xf32, #tpu.memory_space<vmem>>, vector<2x16x16x4xf32>
    %9 = vector.shape_cast %8 : vector<2x16x16x4xf32> to vector<512x4xf32>
    %c0_21 = arith.constant 0 : index
    %c1_22 = arith.constant 1 : index
    %c0_23 = arith.constant 0 : index
    %c0_24 = arith.constant 0 : index
    %10 = vector.load %arg10[%c0_21, %c1_22, %c0_23, %c0_24] : memref<2x18x18x4xf32, #tpu.memory_space<vmem>>, vector<2x16x16x4xf32>
    %11 = vector.shape_cast %10 : vector<2x16x16x4xf32> to vector<512x4xf32>
    %c0_25 = arith.constant 0 : index
    %c1_26 = arith.constant 1 : index
    %c1_27 = arith.constant 1 : index
    %c0_28 = arith.constant 0 : index
    %12 = vector.load %arg10[%c0_25, %c1_26, %c1_27, %c0_28] : memref<2x18x18x4xf32, #tpu.memory_space<vmem>>, vector<2x16x16x4xf32>
    %13 = vector.shape_cast %12 : vector<2x16x16x4xf32> to vector<512x4xf32>
    %c0_29 = arith.constant 0 : index
    %c1_30 = arith.constant 1 : index
    %c2_31 = arith.constant 2 : index
    %c0_32 = arith.constant 0 : index
    %14 = vector.load %arg10[%c0_29, %c1_30, %c2_31, %c0_32] : memref<2x18x18x4xf32, #tpu.memory_space<vmem>>, vector<2x16x16x4xf32>
    %15 = vector.shape_cast %14 : vector<2x16x16x4xf32> to vector<512x4xf32>
    %c0_33 = arith.constant 0 : index
    %c2_34 = arith.constant 2 : index
    %c0_35 = arith.constant 0 : index
    %c0_36 = arith.constant 0 : index
    %16 = vector.load %arg10[%c0_33, %c2_34, %c0_35, %c0_36] : memref<2x18x18x4xf32, #tpu.memory_space<vmem>>, vector<2x16x16x4xf32>
    %17 = vector.shape_cast %16 : vector<2x16x16x4xf32> to vector<512x4xf32>
    %c0_37 = arith.constant 0 : index
    %c2_38 = arith.constant 2 : index
    %c1_39 = arith.constant 1 : index
    %c0_40 = arith.constant 0 : index
    %18 = vector.load %arg10[%c0_37, %c2_38, %c1_39, %c0_40] : memref<2x18x18x4xf32, #tpu.memory_space<vmem>>, vector<2x16x16x4xf32>
    %19 = vector.shape_cast %18 : vector<2x16x16x4xf32> to vector<512x4xf32>
    %c0_41 = arith.constant 0 : index
    %c2_42 = arith.constant 2 : index
    %c2_43 = arith.constant 2 : index
    %c0_44 = arith.constant 0 : index
    %20 = vector.load %arg10[%c0_41, %c2_42, %c2_43, %c0_44] : memref<2x18x18x4xf32, #tpu.memory_space<vmem>>, vector<2x16x16x4xf32>
    %21 = vector.shape_cast %20 : vector<2x16x16x4xf32> to vector<512x4xf32>
    %22 = tpu.concatenate %5, %7, %9, %11, %13, %15, %17, %19, %21 in 1 : vector<512x4xf32>, vector<512x4xf32>, vector<512x4xf32>, vector<512x4xf32>, vector<512x4xf32>, vector<512x4xf32>, vector<512x4xf32>, vector<512x4xf32>, vector<512x4xf32> -> vector<512x36xf32>
    %c0_45 = arith.constant 0 : index
    %c0_46 = arith.constant 0 : index
    %23 = vector.load %arg2[%c0_45, %c0_46] : memref<36x4xf32, #tpu.memory_space<vmem>>, vector<36x4xf32>
    %cst_47 = arith.constant dense<0.000000e+00> : vector<512x4xf32>
    %24 = tpu.matmul %22, %23, %cst_47 {dimension_numbers = #tpu.dot_dimension_numbers<[1], [0], [0], [1], [0, 0, 1, 1], [], []>} : vector<512x36xf32>, vector<36x4xf32>, vector<512x4xf32> -> vector<512x4xf32>
    %25 = tpu.transpose %24, [1, 0] : vector<512x4xf32> -> vector<4x512xf32>
    %cst_48 = arith.constant dense<0.000000e+00> : vector<4xf32>
    %26 = vector.multi_reduction <add>, %25, %cst_48 [1] : vector<4x512xf32> to vector<4xf32>
    %27 = vector.shape_cast %26 : vector<4xf32> to vector<4x1xf32>
    %cst_49 = arith.constant 5.120000e+02 : f32
    %28 = vector.broadcast %cst_49 : f32 to vector<4x1xf32>
    %29 = arith.divf %27, %28 : vector<4x1xf32>
    %30 = vector.broadcast %29 : vector<4x1xf32> to vector<4x512xf32>
    %31 = arith.subf %25, %30 : vector<4x512xf32>
    %32 = arith.mulf %31, %31 : vector<4x512xf32>
    %cst_50 = arith.constant dense<0.000000e+00> : vector<4xf32>
    %33 = vector.multi_reduction <add>, %32, %cst_50 [1] : vector<4x512xf32> to vector<4xf32>
    %34 = vector.shape_cast %33 : vector<4xf32> to vector<4x1xf32>
    %cst_51 = arith.constant 5.120000e+02 : f32
    %35 = vector.broadcast %cst_51 : f32 to vector<4x1xf32>
    %36 = arith.divf %34, %35 : vector<4x1xf32>
    %37 = vector.broadcast %29 : vector<4x1xf32> to vector<4x512xf32>
    %38 = arith.subf %25, %37 : vector<4x512xf32>
    %cst_52 = arith.constant 9.99999974E-6 : f32
    %39 = vector.broadcast %cst_52 : f32 to vector<4x1xf32>
    %40 = arith.addf %36, %39 : vector<4x1xf32>
    %41 = math.rsqrt %40 : vector<4x1xf32>
    %42 = vector.broadcast %41 : vector<4x1xf32> to vector<4x512xf32>
    %43 = arith.mulf %38, %42 : vector<4x512xf32>
    %c0_53 = arith.constant 0 : index
    %c0_54 = arith.constant 0 : index
    %44 = vector.load %arg4[%c0_53, %c0_54] : memref<4x1xf32, #tpu.memory_space<vmem>>, vector<4x1xf32>
    %45 = vector.broadcast %44 : vector<4x1xf32> to vector<4x512xf32>
    %46 = arith.mulf %43, %45 : vector<4x512xf32>
    %c0_55 = arith.constant 0 : index
    %c0_56 = arith.constant 0 : index
    %47 = vector.load %arg5[%c0_55, %c0_56] : memref<4x1xf32, #tpu.memory_space<vmem>>, vector<4x1xf32>
    %48 = vector.broadcast %47 : vector<4x1xf32> to vector<4x512xf32>
    %49 = arith.addf %46, %48 : vector<4x512xf32>
    %cst_57 = arith.constant 0.000000e+00 : f32
    %50 = vector.broadcast %cst_57 : f32 to vector<4x512xf32>
    %51 = arith.maximumf %49, %50 : vector<4x512xf32>
    %52 = vector.extract_strided_slice %51 {offsets = [0, 0], sizes = [4, 256], strides = [1, 1]} : vector<4x512xf32> to vector<4x256xf32>
    %c0_58 = arith.constant 0 : index
    %c0_59 = arith.constant 0 : index
    %c0_60 = arith.constant 0 : index
    %53 = vector.load %arg8[%c0_58, %c0_59, %c0_60] : memref<2x4x256xf32, #tpu.memory_space<vmem>>, vector<1x4x256xf32>
    %54 = vector.shape_cast %53 : vector<1x4x256xf32> to vector<4x256xf32>
    %55 = vector.shape_cast %52 : vector<4x256xf32> to vector<1x4x256xf32>
    tpu.vector_store %arg8[%c0_58, %c0_59, %c0_60], %55 {strides = array<i32>} : memref<2x4x256xf32, #tpu.memory_space<vmem>>, vector<1x4x256xf32>,
    %56 = vector.extract_strided_slice %51 {offsets = [0, 256], sizes = [4, 256], strides = [1, 1]} : vector<4x512xf32> to vector<4x256xf32>
    %c1_61 = arith.constant 1 : index
    %c0_62 = arith.constant 0 : index
    %c0_63 = arith.constant 0 : index
    %57 = vector.load %arg8[%c1_61, %c0_62, %c0_63] : memref<2x4x256xf32, #tpu.memory_space<vmem>>, vector<1x4x256xf32>
    %58 = vector.shape_cast %57 : vector<1x4x256xf32> to vector<4x256xf32>
    %59 = vector.shape_cast %56 : vector<4x256xf32> to vector<1x4x256xf32>
    tpu.vector_store %arg8[%c1_61, %c0_62, %c0_63], %59 {strides = array<i32>} : memref<2x4x256xf32, #tpu.memory_space<vmem>>, vector<1x4x256xf32>,
    %cst_64 = arith.constant 0.000000e+00 : f32
    %60 = vector.broadcast %cst_64 : f32 to vector<2x10x10x4xf32>
    %c0_65 = arith.constant 0 : index
    %c0_66 = arith.constant 0 : index
    %c0_67 = arith.constant 0 : index
    %c0_68 = arith.constant 0 : index
    %61 = vector.load %arg11[%c0_65, %c0_66, %c0_67, %c0_68] : memref<2x10x10x4xf32, #tpu.memory_space<vmem>>, vector<2x10x10x4xf32>
    tpu.vector_store %arg11[%c0_65, %c0_66, %c0_67, %c0_68], %60 {strides = array<i32>} : memref<2x10x10x4xf32, #tpu.memory_space<vmem>>, vector<2x10x10x4xf32>,
    %c0_69 = arith.constant 0 : index
    %c0_70 = arith.constant 0 : index
    %c0_71 = arith.constant 0 : index
    %c0_72 = arith.constant 0 : index
    %62 = vector.load %arg1[%c0_69, %c0_70, %c0_71, %c0_72] : memref<2x8x8x4xf32, #tpu.memory_space<vmem>>, vector<2x8x8x4xf32>
    %c0_73 = arith.constant 0 : index
    %c1_74 = arith.constant 1 : index
    %c1_75 = arith.constant 1 : index
    %c0_76 = arith.constant 0 : index
    %63 = vector.load %arg11[%c0_73, %c1_74, %c1_75, %c0_76] : memref<2x10x10x4xf32, #tpu.memory_space<vmem>>, vector<2x8x8x4xf32>
    tpu.vector_store %arg11[%c0_73, %c1_74, %c1_75, %c0_76], %62 {strides = array<i32>} : memref<2x10x10x4xf32, #tpu.memory_space<vmem>>, vector<2x8x8x4xf32>,
    %c0_77 = arith.constant 0 : index
    %c0_78 = arith.constant 0 : index
    %c0_79 = arith.constant 0 : index
    %c0_80 = arith.constant 0 : index
    %64 = vector.load %arg11[%c0_77, %c0_78, %c0_79, %c0_80] : memref<2x10x10x4xf32, #tpu.memory_space<vmem>>, vector<2x8x8x4xf32>
    %65 = vector.shape_cast %64 : vector<2x8x8x4xf32> to vector<128x4xf32>
    %c0_81 = arith.constant 0 : index
    %c0_82 = arith.constant 0 : index
    %c1_83 = arith.constant 1 : index
    %c0_84 = arith.constant 0 : index
    %66 = vector.load %arg11[%c0_81, %c0_82, %c1_83, %c0_84] : memref<2x10x10x4xf32, #tpu.memory_space<vmem>>, vector<2x8x8x4xf32>
    %67 = vector.shape_cast %66 : vector<2x8x8x4xf32> to vector<128x4xf32>
    %c0_85 = arith.constant 0 : index
    %c0_86 = arith.constant 0 : index
    %c2_87 = arith.constant 2 : index
    %c0_88 = arith.constant 0 : index
    %68 = vector.load %arg11[%c0_85, %c0_86, %c2_87, %c0_88] : memref<2x10x10x4xf32, #tpu.memory_space<vmem>>, vector<2x8x8x4xf32>
    %69 = vector.shape_cast %68 : vector<2x8x8x4xf32> to vector<128x4xf32>
    %c0_89 = arith.constant 0 : index
    %c1_90 = arith.constant 1 : index
    %c0_91 = arith.constant 0 : index
    %c0_92 = arith.constant 0 : index
    %70 = vector.load %arg11[%c0_89, %c1_90, %c0_91, %c0_92] : memref<2x10x10x4xf32, #tpu.memory_space<vmem>>, vector<2x8x8x4xf32>
    %71 = vector.shape_cast %70 : vector<2x8x8x4xf32> to vector<128x4xf32>
    %c0_93 = arith.constant 0 : index
    %c1_94 = arith.constant 1 : index
    %c1_95 = arith.constant 1 : index
    %c0_96 = arith.constant 0 : index
    %72 = vector.load %arg11[%c0_93, %c1_94, %c1_95, %c0_96] : memref<2x10x10x4xf32, #tpu.memory_space<vmem>>, vector<2x8x8x4xf32>
    %73 = vector.shape_cast %72 : vector<2x8x8x4xf32> to vector<128x4xf32>
    %c0_97 = arith.constant 0 : index
    %c1_98 = arith.constant 1 : index
    %c2_99 = arith.constant 2 : index
    %c0_100 = arith.constant 0 : index
    %74 = vector.load %arg11[%c0_97, %c1_98, %c2_99, %c0_100] : memref<2x10x10x4xf32, #tpu.memory_space<vmem>>, vector<2x8x8x4xf32>
    %75 = vector.shape_cast %74 : vector<2x8x8x4xf32> to vector<128x4xf32>
    %c0_101 = arith.constant 0 : index
    %c2_102 = arith.constant 2 : index
    %c0_103 = arith.constant 0 : index
    %c0_104 = arith.constant 0 : index
    %76 = vector.load %arg11[%c0_101, %c2_102, %c0_103, %c0_104] : memref<2x10x10x4xf32, #tpu.memory_space<vmem>>, vector<2x8x8x4xf32>
    %77 = vector.shape_cast %76 : vector<2x8x8x4xf32> to vector<128x4xf32>
    %c0_105 = arith.constant 0 : index
    %c2_106 = arith.constant 2 : index
    %c1_107 = arith.constant 1 : index
    %c0_108 = arith.constant 0 : index
    %78 = vector.load %arg11[%c0_105, %c2_106, %c1_107, %c0_108] : memref<2x10x10x4xf32, #tpu.memory_space<vmem>>, vector<2x8x8x4xf32>
    %79 = vector.shape_cast %78 : vector<2x8x8x4xf32> to vector<128x4xf32>
    %c0_109 = arith.constant 0 : index
    %c2_110 = arith.constant 2 : index
    %c2_111 = arith.constant 2 : index
    %c0_112 = arith.constant 0 : index
    %80 = vector.load %arg11[%c0_109, %c2_110, %c2_111, %c0_112] : memref<2x10x10x4xf32, #tpu.memory_space<vmem>>, vector<2x8x8x4xf32>
    %81 = vector.shape_cast %80 : vector<2x8x8x4xf32> to vector<128x4xf32>
    %82 = tpu.concatenate %65, %67, %69, %71, %73, %75, %77, %79, %81 in 1 : vector<128x4xf32>, vector<128x4xf32>, vector<128x4xf32>, vector<128x4xf32>, vector<128x4xf32>, vector<128x4xf32>, vector<128x4xf32>, vector<128x4xf32>, vector<128x4xf32> -> vector<128x36xf32>
    %c0_113 = arith.constant 0 : index
    %c0_114 = arith.constant 0 : index
    %83 = vector.load %arg3[%c0_113, %c0_114] : memref<36x4xf32, #tpu.memory_space<vmem>>, vector<36x4xf32>
    %cst_115 = arith.constant dense<0.000000e+00> : vector<128x4xf32>
    %84 = tpu.matmul %82, %83, %cst_115 {dimension_numbers = #tpu.dot_dimension_numbers<[1], [0], [0], [1], [0, 0, 1, 1], [], []>} : vector<128x36xf32>, vector<36x4xf32>, vector<128x4xf32> -> vector<128x4xf32>
    %85 = tpu.transpose %84, [1, 0] : vector<128x4xf32> -> vector<4x128xf32>
    %cst_116 = arith.constant dense<0.000000e+00> : vector<4xf32>
    %86 = vector.multi_reduction <add>, %85, %cst_116 [1] : vector<4x128xf32> to vector<4xf32>
    %87 = vector.shape_cast %86 : vector<4xf32> to vector<4x1xf32>
    %cst_117 = arith.constant 1.280000e+02 : f32
    %88 = vector.broadcast %cst_117 : f32 to vector<4x1xf32>
    %89 = arith.divf %87, %88 : vector<4x1xf32>
    %90 = vector.broadcast %89 : vector<4x1xf32> to vector<4x128xf32>
    %91 = arith.subf %85, %90 : vector<4x128xf32>
    %92 = arith.mulf %91, %91 : vector<4x128xf32>
    %cst_118 = arith.constant dense<0.000000e+00> : vector<4xf32>
    %93 = vector.multi_reduction <add>, %92, %cst_118 [1] : vector<4x128xf32> to vector<4xf32>
    %94 = vector.shape_cast %93 : vector<4xf32> to vector<4x1xf32>
    %cst_119 = arith.constant 1.280000e+02 : f32
    %95 = vector.broadcast %cst_119 : f32 to vector<4x1xf32>
    %96 = arith.divf %94, %95 : vector<4x1xf32>
    %97 = vector.broadcast %89 : vector<4x1xf32> to vector<4x128xf32>
    %98 = arith.subf %85, %97 : vector<4x128xf32>
    %cst_120 = arith.constant 9.99999974E-6 : f32
    %99 = vector.broadcast %cst_120 : f32 to vector<4x1xf32>
    %100 = arith.addf %96, %99 : vector<4x1xf32>
    %101 = math.rsqrt %100 : vector<4x1xf32>
    %102 = vector.broadcast %101 : vector<4x1xf32> to vector<4x128xf32>
    %103 = arith.mulf %98, %102 : vector<4x128xf32>
    %c0_121 = arith.constant 0 : index
    %c0_122 = arith.constant 0 : index
    %104 = vector.load %arg6[%c0_121, %c0_122] : memref<4x1xf32, #tpu.memory_space<vmem>>, vector<4x1xf32>
    %105 = vector.broadcast %104 : vector<4x1xf32> to vector<4x128xf32>
    %106 = arith.mulf %103, %105 : vector<4x128xf32>
    %c0_123 = arith.constant 0 : index
    %c0_124 = arith.constant 0 : index
    %107 = vector.load %arg7[%c0_123, %c0_124] : memref<4x1xf32, #tpu.memory_space<vmem>>, vector<4x1xf32>
    %108 = vector.broadcast %107 : vector<4x1xf32> to vector<4x128xf32>
    %109 = arith.addf %106, %108 : vector<4x128xf32>
    %cst_125 = arith.constant 0.000000e+00 : f32
    %110 = vector.broadcast %cst_125 : f32 to vector<4x128xf32>
    %111 = arith.maximumf %109, %110 : vector<4x128xf32>
    %112 = vector.extract_strided_slice %111 {offsets = [0, 0], sizes = [4, 64], strides = [1, 1]} : vector<4x128xf32> to vector<4x64xf32>
    %c0_126 = arith.constant 0 : index
    %c0_127 = arith.constant 0 : index
    %c0_128 = arith.constant 0 : index
    %113 = vector.load %arg9[%c0_126, %c0_127, %c0_128] : memref<2x4x64xf32, #tpu.memory_space<vmem>>, vector<1x4x64xf32>
    %114 = vector.shape_cast %113 : vector<1x4x64xf32> to vector<4x64xf32>
    %115 = vector.shape_cast %112 : vector<4x64xf32> to vector<1x4x64xf32>
    tpu.vector_store %arg9[%c0_126, %c0_127, %c0_128], %115 {strides = array<i32>} : memref<2x4x64xf32, #tpu.memory_space<vmem>>, vector<1x4x64xf32>,
    %116 = vector.extract_strided_slice %111 {offsets = [0, 64], sizes = [4, 64], strides = [1, 1]} : vector<4x128xf32> to vector<4x64xf32>
    %c1_129 = arith.constant 1 : index
    %c0_130 = arith.constant 0 : index
    %c0_131 = arith.constant 0 : index
    %117 = vector.load %arg9[%c1_129, %c0_130, %c0_131] : memref<2x4x64xf32, #tpu.memory_space<vmem>>, vector<1x4x64xf32>
    %118 = vector.shape_cast %117 : vector<1x4x64xf32> to vector<4x64xf32>
    %119 = vector.shape_cast %116 : vector<4x64xf32> to vector<1x4x64xf32>
    tpu.vector_store %arg9[%c1_129, %c0_130, %c0_131], %119 {strides = array<i32>} : memref<2x4x64xf32, #tpu.memory_space<vmem>>, vector<1x4x64xf32>,
    return
  }
}

</mosaic_0001>

<llo_original>
// kernel: _first_octave_cbr_impl.1
$region0: #{_first_octave_cbr_impl.1}
  #allocation0 [shape = 'u32[]', space=smem, size = 0x4, offset = 0x4, fixed_abs, tag = 'smem constant byte address 0x4 - core index']
  #allocation1 [shape = 'u32[144,128]{1,0:T(1,128)}', space=vmem, size = 0x12000, scoped, tag = 'internal scratch']
  #allocation2 [shape = 'f32[2,18,18,4]{3,2,1,0:T(8,128)}', space=vmem, size = 0x6c000, scoped, tag = 'scratch operand']
  #allocation3 [shape = 'f32[2,10,10,4]{3,2,1,0:T(8,128)}', space=vmem, size = 0x28000, scoped, tag = 'scratch operand']
  %s0 = inlined_call_operand.vmem [shape: f32[2,16,16,4], index: 0, kind: input, shape index: {}]
  %s1 = inlined_call_operand.vmem [shape: f32[2,8,8,4], index: 1, kind: input, shape index: {}]
  %s2 = inlined_call_operand.vmem [shape: f32[36,4], index: 2, kind: input, shape index: {}]
  %s3 = inlined_call_operand.vmem [shape: f32[36,4], index: 3, kind: input, shape index: {}]
  %s4 = inlined_call_operand.vmem [shape: f32[4,1], index: 4, kind: input, shape index: {}]
  %s5 = inlined_call_operand.vmem [shape: f32[4,1], index: 5, kind: input, shape index: {}]
  %s6 = inlined_call_operand.vmem [shape: f32[4,1], index: 6, kind: input, shape index: {}]
  %s7 = inlined_call_operand.vmem [shape: f32[4,1], index: 7, kind: input, shape index: {}]
  %s8 = inlined_call_operand.vmem [shape: f32[2,4,256], index: 8, kind: output, shape index: {0}]
  %s9 = inlined_call_operand.vmem [shape: f32[2,4,64], index: 9, kind: output, shape index: {1}]
  %10 = xla_tuple %s8, %s9
  %s11 = sld [smem:[#allocation0]]
  $region50: #{_first_octave_cbr_impl.1} parent=0
    _
  %s13 = ssub.s32 1, %s11
  %s14 = scalar_select 0, %s13, %s11
  // Predicated region
  $region2: #{_first_octave_cbr_impl.1} parent=0 // pred_check
    _
  $region3: #{_first_octave_cbr_impl.1} parent=0 // pred_check_branch
    %16 = sbr.rel (0) target = $region5
  $region4: #{_first_octave_cbr_impl.1} parent=0 // pred_region
    _
  $region5: #{_first_octave_cbr_impl.1} parent=0 // pred_fallthru
    _
  // Predicated region
  $region6: #{_first_octave_cbr_impl.1} parent=0 // pred_check
    _
  $region7: #{_first_octave_cbr_impl.1} parent=0 // pred_check_branch
    %18 = sbr.rel (0) target = $region9
  $region8: #{_first_octave_cbr_impl.1} parent=0 // pred_region
    _
  $region9: #{_first_octave_cbr_impl.1} parent=0 // pred_fallthru
    _
  // Predicated region
  $region10: #{_first_octave_cbr_impl.1} parent=0 // pred_check
    _
  $region11: #{_first_octave_cbr_impl.1} parent=0 // pred_check_branch
    %20 = sbr.rel (0) target = $region13
  $region12: #{_first_octave_cbr_impl.1} parent=0 // pred_region
    _
  $region13: #{_first_octave_cbr_impl.1} parent=0 // pred_fallthru
    _
  // Predicated region
  $region14: #{_first_octave_cbr_impl.1} parent=0 // pred_check
    _
  $region15: #{_first_octave_cbr_impl.1} parent=0 // pred_check_branch
    %22 = sbr.rel (0) target = $region17
  $region16: #{_first_octave_cbr_impl.1} parent=0 // pred_region
    _
  $region17: #{_first_octave_cbr_impl.1} parent=0 // pred_fallthru
    _
  // Predicated region
  $region18: #{_first_octave_cbr_impl.1} parent=0 // pred_check
    _
  $region19: #{_first_octave_cbr_impl.1} parent=0 // pred_check_branch
    %24 = sbr.rel (0) target = $region21
  $region20: #{_first_octave_cbr_impl.1} parent=0 // pred_region
    _
  $region21: #{_first_octave_cbr_impl.1} parent=0 // pred_fallthru
    _
  // Predicated region
  $region22: #{_first_octave_cbr_impl.1} parent=0 // pred_check
    _
  $region23: #{_first_octave_cbr_impl.1} parent=0 // pred_check_branch
    %26 = sbr.rel (0) target = $region25
  $region24: #{_first_octave_cbr_impl.1} parent=0 // pred_region
    _
  $region25: #{_first_octave_cbr_impl.1} parent=0 // pred_fallthru
    _
  // Predicated region
  $region26: #{_first_octave_cbr_impl.1} parent=0 // pred_check
    _
  $region27: #{_first_octave_cbr_impl.1} parent=0 // pred_check_branch
    %28 = sbr.rel (0) target = $region29
  $region28: #{_first_octave_cbr_impl.1} parent=0 // pred_region
    _
  $region29: #{_first_octave_cbr_impl.1} parent=0 // pred_fallthru
    _
  // Predicated region
  $region30: #{_first_octave_cbr_impl.1} parent=0 // pred_check
    _
  $region31: #{_first_octave_cbr_impl.1} parent=0 // pred_check_branch
    %30 = sbr.rel (0) target = $region33
  $region32: #{_first_octave_cbr_impl.1} parent=0 // pred_region
    _
  $region33: #{_first_octave_cbr_impl.1} parent=0 // pred_fallthru
    _
  %vm31 = vcmask 31744
  %32 = vst.msk [vmem:[#allocation2] sm:$0xff] %vm31, 0.0
  %33 = vst.msk [vmem:[#allocation2 + $0x8] sm:$0xff] %vm31, 0.0
  %vm34 = vcmask 25600
  %35 = vst.msk [vmem:[#allocation2 + $0x10] sm:$0x3] %vm34, 0.0
  %36 = vst.msk [vmem:[#allocation2 + $0x18] sm:$0xff] %vm31, 0.0
  %37 = vst.msk [vmem:[#allocation2 + $0x20] sm:$0xff] %vm31, 0.0
  %38 = vst.msk [vmem:[#allocation2 + $0x28] sm:$0x3] %vm34, 0.0
  %39 = vst.msk [vmem:[#allocation2 + $0x30] sm:$0xff] %vm31, 0.0
  %40 = vst.msk [vmem:[#allocation2 + $0x38] sm:$0xff] %vm31, 0.0
  %41 = vst.msk [vmem:[#allocation2 + $0x40] sm:$0x3] %vm34, 0.0
  %42 = vst.msk [vmem:[#allocation2 + $0x48] sm:$0xff] %vm31, 0.0
  %43 = vst.msk [vmem:[#allocation2 + $0x50] sm:$0xff] %vm31, 0.0
  %44 = vst.msk [vmem:[#allocation2 + $0x58] sm:$0x3] %vm34, 0.0
  %45 = vst.msk [vmem:[#allocation2 + $0x60] sm:$0xff] %vm31, 0.0
  %46 = vst.msk [vmem:[#allocation2 + $0x68] sm:$0xff] %vm31, 0.0
  %47 = vst.msk [vmem:[#allocation2 + $0x70] sm:$0x3] %vm34, 0.0
  %48 = vst.msk [vmem:[#allocation2 + $0x78] sm:$0xff] %vm31, 0.0
  %49 = vst.msk [vmem:[#allocation2 + $0x80] sm:$0xff] %vm31, 0.0
  %50 = vst.msk [vmem:[#allocation2 + $0x88] sm:$0x3] %vm34, 0.0
  %51 = vst.msk [vmem:[#allocation2 + $0x90] sm:$0xff] %vm31, 0.0
  %52 = vst.msk [vmem:[#allocation2 + $0x98] sm:$0xff] %vm31, 0.0
  %53 = vst.msk [vmem:[#allocation2 + $0xa0] sm:$0x3] %vm34, 0.0
  %54 = vst.msk [vmem:[#allocation2 + $0xa8] sm:$0xff] %vm31, 0.0
  %55 = vst.msk [vmem:[#allocation2 + $0xb0] sm:$0xff] %vm31, 0.0
  %56 = vst.msk [vmem:[#allocation2 + $0xb8] sm:$0x3] %vm34, 0.0
  %57 = vst.msk [vmem:[#allocation2 + $0xc0] sm:$0xff] %vm31, 0.0
  %58 = vst.msk [vmem:[#allocation2 + $0xc8] sm:$0xff] %vm31, 0.0
  %59 = vst.msk [vmem:[#allocation2 + $0xd0] sm:$0x3] %vm34, 0.0
  %60 = vst.msk [vmem:[#allocation2 + $0xd8] sm:$0xff] %vm31, 0.0
  %61 = vst.msk [vmem:[#allocation2 + $0xe0] sm:$0xff] %vm31, 0.0
  %62 = vst.msk [vmem:[#allocation2 + $0xe8] sm:$0x3] %vm34, 0.0
  %63 = vst.msk [vmem:[#allocation2 + $0xf0] sm:$0xff] %vm31, 0.0
  %64 = vst.msk [vmem:[#allocation2 + $0xf8] sm:$0xff] %vm31, 0.0
  %65 = vst.msk [vmem:[#allocation2 + $0x100] sm:$0x3] %vm34, 0.0
  %66 = vst.msk [vmem:[#allocation2 + $0x108] sm:$0xff] %vm31, 0.0
  %67 = vst.msk [vmem:[#allocation2 + $0x110] sm:$0xff] %vm31, 0.0
  %68 = vst.msk [vmem:[#allocation2 + $0x118] sm:$0x3] %vm34, 0.0
  %69 = vst.msk [vmem:[#allocation2 + $0x120] sm:$0xff] %vm31, 0.0
  %70 = vst.msk [vmem:[#allocation2 + $0x128] sm:$0xff] %vm31, 0.0
  %71 = vst.msk [vmem:[#allocation2 + $0x130] sm:$0x3] %vm34, 0.0
  %72 = vst.msk [vmem:[#allocation2 + $0x138] sm:$0xff] %vm31, 0.0
  %73 = vst.msk [vmem:[#allocation2 + $0x140] sm:$0xff] %vm31, 0.0
  %74 = vst.msk [vmem:[#allocation2 + $0x148] sm:$0x3] %vm34, 0.0
  %75 = vst.msk [vmem:[#allocation2 + $0x150] sm:$0xff] %vm31, 0.0
  %76 = vst.msk [vmem:[#allocation2 + $0x158] sm:$0xff] %vm31, 0.0
  %77 = vst.msk [vmem:[#allocation2 + $0x160] sm:$0x3] %vm34, 0.0
  %78 = vst.msk [vmem:[#allocation2 + $0x168] sm:$0xff] %vm31, 0.0
  %79 = vst.msk [vmem:[#allocation2 + $0x170] sm:$0xff] %vm31, 0.0
  %80 = vst.msk [vmem:[#allocation2 + $0x178] sm:$0x3] %vm34, 0.0
  %81 = vst.msk [vmem:[#allocation2 + $0x180] sm:$0xff] %vm31, 0.0
  %82 = vst.msk [vmem:[#allocation2 + $0x188] sm:$0xff] %vm31, 0.0
  %83 = vst.msk [vmem:[#allocation2 + $0x190] sm:$0x3] %vm34, 0.0
  %84 = vst.msk [vmem:[#allocation2 + $0x198] sm:$0xff] %vm31, 0.0
  %85 = vst.msk [vmem:[#allocation2 + $0x1a0] sm:$0xff] %vm31, 0.0
  %86 = vst.msk [vmem:[#allocation2 + $0x1a8] sm:$0x3] %vm34, 0.0
  %87 = vst.msk [vmem:[#allocation2 + $0x1b0] sm:$0xff] %vm31, 0.0
  %88 = vst.msk [vmem:[#allocation2 + $0x1b8] sm:$0xff] %vm31, 0.0
  %89 = vst.msk [vmem:[#allocation2 + $0x1c0] sm:$0x3] %vm34, 0.0
  %90 = vst.msk [vmem:[#allocation2 + $0x1c8] sm:$0xff] %vm31, 0.0
  %91 = vst.msk [vmem:[#allocation2 + $0x1d0] sm:$0xff] %vm31, 0.0
  %92 = vst.msk [vmem:[#allocation2 + $0x1d8] sm:$0x3] %vm34, 0.0
  %93 = vst.msk [vmem:[#allocation2 + $0x1e0] sm:$0xff] %vm31, 0.0
  %94 = vst.msk [vmem:[#allocation2 + $0x1e8] sm:$0xff] %vm31, 0.0
  %95 = vst.msk [vmem:[#allocation2 + $0x1f0] sm:$0x3] %vm34, 0.0
  %96 = vst.msk [vmem:[#allocation2 + $0x1f8] sm:$0xff] %vm31, 0.0
  %97 = vst.msk [vmem:[#allocation2 + $0x200] sm:$0xff] %vm31, 0.0
  %98 = vst.msk [vmem:[#allocation2 + $0x208] sm:$0x3] %vm34, 0.0
  %99 = vst.msk [vmem:[#allocation2 + $0x210] sm:$0xff] %vm31, 0.0
  %100 = vst.msk [vmem:[#allocation2 + $0x218] sm:$0xff] %vm31, 0.0
  %101 = vst.msk [vmem:[#allocation2 + $0x220] sm:$0x3] %vm34, 0.0
  %102 = vst.msk [vmem:[#allocation2 + $0x228] sm:$0xff] %vm31, 0.0
  %103 = vst.msk [vmem:[#allocation2 + $0x230] sm:$0xff] %vm31, 0.0
  %104 = vst.msk [vmem:[#allocation2 + $0x238] sm:$0x3] %vm34, 0.0
  %105 = vst.msk [vmem:[#allocation2 + $0x240] sm:$0xff] %vm31, 0.0
  %106 = vst.msk [vmem:[#allocation2 + $0x248] sm:$0xff] %vm31, 0.0
  %107 = vst.msk [vmem:[#allocation2 + $0x250] sm:$0x3] %vm34, 0.0
  %108 = vst.msk [vmem:[#allocation2 + $0x258] sm:$0xff] %vm31, 0.0
  %109 = vst.msk [vmem:[#allocation2 + $0x260] sm:$0xff] %vm31, 0.0
  %110 = vst.msk [vmem:[#allocation2 + $0x268] sm:$0x3] %vm34, 0.0
  %111 = vst.msk [vmem:[#allocation2 + $0x270] sm:$0xff] %vm31, 0.0
  %112 = vst.msk [vmem:[#allocation2 + $0x278] sm:$0xff] %vm31, 0.0
  %113 = vst.msk [vmem:[#allocation2 + $0x280] sm:$0x3] %vm34, 0.0
  %114 = vst.msk [vmem:[#allocation2 + $0x288] sm:$0xff] %vm31, 0.0
  %115 = vst.msk [vmem:[#allocation2 + $0x290] sm:$0xff] %vm31, 0.0
  %116 = vst.msk [vmem:[#allocation2 + $0x298] sm:$0x3] %vm34, 0.0
  %117 = vst.msk [vmem:[#allocation2 + $0x2a0] sm:$0xff] %vm31, 0.0
  %118 = vst.msk [vmem:[#allocation2 + $0x2a8] sm:$0xff] %vm31, 0.0
  %119 = vst.msk [vmem:[#allocation2 + $0x2b0] sm:$0x3] %vm34, 0.0
  %120 = vst.msk [vmem:[#allocation2 + $0x2b8] sm:$0xff] %vm31, 0.0
  %121 = vst.msk [vmem:[#allocation2 + $0x2c0] sm:$0xff] %vm31, 0.0
  %122 = vst.msk [vmem:[#allocation2 + $0x2c8] sm:$0x3] %vm34, 0.0
  %123 = vst.msk [vmem:[#allocation2 + $0x2d0] sm:$0xff] %vm31, 0.0
  %124 = vst.msk [vmem:[#allocation2 + $0x2d8] sm:$0xff] %vm31, 0.0
  %125 = vst.msk [vmem:[#allocation2 + $0x2e0] sm:$0x3] %vm34, 0.0
  %126 = vst.msk [vmem:[#allocation2 + $0x2e8] sm:$0xff] %vm31, 0.0
  %127 = vst.msk [vmem:[#allocation2 + $0x2f0] sm:$0xff] %vm31, 0.0
  %128 = vst.msk [vmem:[#allocation2 + $0x2f8] sm:$0x3] %vm34, 0.0
  %129 = vst.msk [vmem:[#allocation2 + $0x300] sm:$0xff] %vm31, 0.0
  %130 = vst.msk [vmem:[#allocation2 + $0x308] sm:$0xff] %vm31, 0.0
  %131 = vst.msk [vmem:[#allocation2 + $0x310] sm:$0x3] %vm34, 0.0
  %132 = vst.msk [vmem:[#allocation2 + $0x318] sm:$0xff] %vm31, 0.0
  %133 = vst.msk [vmem:[#allocation2 + $0x320] sm:$0xff] %vm31, 0.0
  %134 = vst.msk [vmem:[#allocation2 + $0x328] sm:$0x3] %vm34, 0.0
  %135 = vst.msk [vmem:[#allocation2 + $0x330] sm:$0xff] %vm31, 0.0
  %136 = vst.msk [vmem:[#allocation2 + $0x338] sm:$0xff] %vm31, 0.0
  %137 = vst.msk [vmem:[#allocation2 + $0x340] sm:$0x3] %vm34, 0.0
  %138 = vst.msk [vmem:[#allocation2 + $0x348] sm:$0xff] %vm31, 0.0
  %139 = vst.msk [vmem:[#allocation2 + $0x350] sm:$0xff] %vm31, 0.0
  %140 = vst.msk [vmem:[#allocation2 + $0x358] sm:$0x3] %vm34, 0.0
  %v141 = vld [vmem:[%s0] sm:$0xff]
  %v142 = vld [vmem:[%s0 + $0x8] sm:$0xff]
  %v143 = vld [vmem:[%s0 + $0x10] sm:$0xff]
  %v144 = vld [vmem:[%s0 + $0x18] sm:$0xff]
  %v145 = vld [vmem:[%s0 + $0x20] sm:$0xff]
  %v146 = vld [vmem:[%s0 + $0x28] sm:$0xff]
  %v147 = vld [vmem:[%s0 + $0x30] sm:$0xff]
  %v148 = vld [vmem:[%s0 + $0x38] sm:$0xff]
  %v149 = vld [vmem:[%s0 + $0x40] sm:$0xff]
  %v150 = vld [vmem:[%s0 + $0x48] sm:$0xff]
  %v151 = vld [vmem:[%s0 + $0x50] sm:$0xff]
  %v152 = vld [vmem:[%s0 + $0x58] sm:$0xff]
  %v153 = vld [vmem:[%s0 + $0x60] sm:$0xff]
  %v154 = vld [vmem:[%s0 + $0x68] sm:$0xff]
  %v155 = vld [vmem:[%s0 + $0x70] sm:$0xff]
  %v156 = vld [vmem:[%s0 + $0x78] sm:$0xff]
  %v157 = vld [vmem:[%s0 + $0x80] sm:$0xff]
  %v158 = vld [vmem:[%s0 + $0x88] sm:$0xff]
  %v159 = vld [vmem:[%s0 + $0x90] sm:$0xff]
  %v160 = vld [vmem:[%s0 + $0x98] sm:$0xff]
  %v161 = vld [vmem:[%s0 + $0xa0] sm:$0xff]
  %v162 = vld [vmem:[%s0 + $0xa8] sm:$0xff]
  %v163 = vld [vmem:[%s0 + $0xb0] sm:$0xff]
  %v164 = vld [vmem:[%s0 + $0xb8] sm:$0xff]
  %v165 = vld [vmem:[%s0 + $0xc0] sm:$0xff]
  %v166 = vld [vmem:[%s0 + $0xc8] sm:$0xff]
  %v167 = vld [vmem:[%s0 + $0xd0] sm:$0xff]
  %v168 = vld [vmem:[%s0 + $0xd8] sm:$0xff]
  %v169 = vld [vmem:[%s0 + $0xe0] sm:$0xff]
  %v170 = vld [vmem:[%s0 + $0xe8] sm:$0xff]
  %v171 = vld [vmem:[%s0 + $0xf0] sm:$0xff]
  %v172 = vld [vmem:[%s0 + $0xf8] sm:$0xff]
  %v173 = vld [vmem:[%s0 + $0x100] sm:$0xff]
  %v174 = vld [vmem:[%s0 + $0x108] sm:$0xff]
  %v175 = vld [vmem:[%s0 + $0x110] sm:$0xff]
  %v176 = vld [vmem:[%s0 + $0x118] sm:$0xff]
  %v177 = vld [vmem:[%s0 + $0x120] sm:$0xff]
  %v178 = vld [vmem:[%s0 + $0x128] sm:$0xff]
  %v179 = vld [vmem:[%s0 + $0x130] sm:$0xff]
  %v180 = vld [vmem:[%s0 + $0x138] sm:$0xff]
  %v181 = vld [vmem:[%s0 + $0x140] sm:$0xff]
  %v182 = vld [vmem:[%s0 + $0x148] sm:$0xff]
  %v183 = vld [vmem:[%s0 + $0x150] sm:$0xff]
  %v184 = vld [vmem:[%s0 + $0x158] sm:$0xff]
  %v185 = vld [vmem:[%s0 + $0x160] sm:$0xff]
  %v186 = vld [vmem:[%s0 + $0x168] sm:$0xff]
  %v187 = vld [vmem:[%s0 + $0x170] sm:$0xff]
  %v188 = vld [vmem:[%s0 + $0x178] sm:$0xff]
  %v189 = vld [vmem:[%s0 + $0x180] sm:$0xff]
  %v190 = vld [vmem:[%s0 + $0x188] sm:$0xff]
  %v191 = vld [vmem:[%s0 + $0x190] sm:$0xff]
  %v192 = vld [vmem:[%s0 + $0x198] sm:$0xff]
  %v193 = vld [vmem:[%s0 + $0x1a0] sm:$0xff]
  %v194 = vld [vmem:[%s0 + $0x1a8] sm:$0xff]
  %v195 = vld [vmem:[%s0 + $0x1b0] sm:$0xff]
  %v196 = vld [vmem:[%s0 + $0x1b8] sm:$0xff]
  %v197 = vld [vmem:[%s0 + $0x1c0] sm:$0xff]
  %v198 = vld [vmem:[%s0 + $0x1c8] sm:$0xff]
  %v199 = vld [vmem:[%s0 + $0x1d0] sm:$0xff]
  %v200 = vld [vmem:[%s0 + $0x1d8] sm:$0xff]
  %v201 = vld [vmem:[%s0 + $0x1e0] sm:$0xff]
  %v202 = vld [vmem:[%s0 + $0x1e8] sm:$0xff]
  %v203 = vld [vmem:[%s0 + $0x1f0] sm:$0xff]
  %v204 = vld [vmem:[%s0 + $0x1f8] sm:$0xff]
  %s205 = scalar_lea.vmem [#allocation2], 24
  %206 = vst.msk [vmem:[%s205 + $0x1] sm:$0xff] %vm31, %v141
  %207 = vst.msk [vmem:[%s205 + $0x9] sm:$0xff] %vm31, %v142
  %208 = vst.msk [vmem:[%s205 + $0x19] sm:$0xff] %vm31, %v143
  %209 = vst.msk [vmem:[%s205 + $0x21] sm:$0xff] %vm31, %v144
  %210 = vst.msk [vmem:[%s205 + $0x31] sm:$0xff] %vm31, %v145
  %211 = vst.msk [vmem:[%s205 + $0x39] sm:$0xff] %vm31, %v146
  %212 = vst.msk [vmem:[%s205 + $0x49] sm:$0xff] %vm31, %v147
  %213 = vst.msk [vmem:[%s205 + $0x51] sm:$0xff] %vm31, %v148
  %214 = vst.msk [vmem:[%s205 + $0x61] sm:$0xff] %vm31, %v149
  %215 = vst.msk [vmem:[%s205 + $0x69] sm:$0xff] %vm31, %v150
  %216 = vst.msk [vmem:[%s205 + $0x79] sm:$0xff] %vm31, %v151
  %217 = vst.msk [vmem:[%s205 + $0x81] sm:$0xff] %vm31, %v152
  %218 = vst.msk [vmem:[%s205 + $0x91] sm:$0xff] %vm31, %v153
  %219 = vst.msk [vmem:[%s205 + $0x99] sm:$0xff] %vm31, %v154
  %220 = vst.msk [vmem:[%s205 + $0xa9] sm:$0xff] %vm31, %v155
  %221 = vst.msk [vmem:[%s205 + $0xb1] sm:$0xff] %vm31, %v156
  %222 = vst.msk [vmem:[%s205 + $0xc1] sm:$0xff] %vm31, %v157
  %223 = vst.msk [vmem:[%s205 + $0xc9] sm:$0xff] %vm31, %v158
  %224 = vst.msk [vmem:[%s205 + $0xd9] sm:$0xff] %vm31, %v159
  %225 = vst.msk [vmem:[%s205 + $0xe1] sm:$0xff] %vm31, %v160
  %226 = vst.msk [vmem:[%s205 + $0xf1] sm:$0xff] %vm31, %v161
  %227 = vst.msk [vmem:[%s205 + $0xf9] sm:$0xff] %vm31, %v162
  %228 = vst.msk [vmem:[%s205 + $0x109] sm:$0xff] %vm31, %v163
  %229 = vst.msk [vmem:[%s205 + $0x111] sm:$0xff] %vm31, %v164
  %230 = vst.msk [vmem:[%s205 + $0x121] sm:$0xff] %vm31, %v165
  %231 = vst.msk [vmem:[%s205 + $0x129] sm:$0xff] %vm31, %v166
  %232 = vst.msk [vmem:[%s205 + $0x139] sm:$0xff] %vm31, %v167
  %233 = vst.msk [vmem:[%s205 + $0x141] sm:$0xff] %vm31, %v168
  %234 = vst.msk [vmem:[%s205 + $0x151] sm:$0xff] %vm31, %v169
  %235 = vst.msk [vmem:[%s205 + $0x159] sm:$0xff] %vm31, %v170
  %236 = vst.msk [vmem:[%s205 + $0x169] sm:$0xff] %vm31, %v171
  %237 = vst.msk [vmem:[%s205 + $0x171] sm:$0xff] %vm31, %v172
  %238 = vst.msk [vmem:[%s205 + $0x1b1] sm:$0xff] %vm31, %v173
  %239 = vst.msk [vmem:[%s205 + $0x1b9] sm:$0xff] %vm31, %v174
  %240 = vst.msk [vmem:[%s205 + $0x1c9] sm:$0xff] %vm31, %v175
  %241 = vst.msk [vmem:[%s205 + $0x1d1] sm:$0xff] %vm31, %v176
  %242 = vst.msk [vmem:[%s205 + $0x1e1] sm:$0xff] %vm31, %v177
  %243 = vst.msk [vmem:[%s205 + $0x1e9] sm:$0xff] %vm31, %v178
  %244 = vst.msk [vmem:[%s205 + $0x1f9] sm:$0xff] %vm31, %v179
  %245 = vst.msk [vmem:[%s205 + $0x201] sm:$0xff] %vm31, %v180
  %246 = vst.msk [vmem:[%s205 + $0x211] sm:$0xff] %vm31, %v181
  %247 = vst.msk [vmem:[%s205 + $0x219] sm:$0xff] %vm31, %v182
  %248 = vst.msk [vmem:[%s205 + $0x229] sm:$0xff] %vm31, %v183
  %249 = vst.msk [vmem:[%s205 + $0x231] sm:$0xff] %vm31, %v184
  %250 = vst.msk [vmem:[%s205 + $0x241] sm:$0xff] %vm31, %v185
  %251 = vst.msk [vmem:[%s205 + $0x249] sm:$0xff] %vm31, %v186
  %252 = vst.msk [vmem:[%s205 + $0x259] sm:$0xff] %vm31, %v187
  %253 = vst.msk [vmem:[%s205 + $0x261] sm:$0xff] %vm31, %v188
  %254 = vst.msk [vmem:[%s205 + $0x271] sm:$0xff] %vm31, %v189
  %255 = vst.msk [vmem:[%s205 + $0x279] sm:$0xff] %vm31, %v190
  %256 = vst.msk [vmem:[%s205 + $0x289] sm:$0xff] %vm31, %v191
  %257 = vst.msk [vmem:[%s205 + $0x291] sm:$0xff] %vm31, %v192
  %258 = vst.msk [vmem:[%s205 + $0x2a1] sm:$0xff] %vm31, %v193
  %259 = vst.msk [vmem:[%s205 + $0x2a9] sm:$0xff] %vm31, %v194
  %260 = vst.msk [vmem:[%s205 + $0x2b9] sm:$0xff] %vm31, %v195
  %261 = vst.msk [vmem:[%s205 + $0x2c1] sm:$0xff] %vm31, %v196
  %262 = vst.msk [vmem:[%s205 + $0x2d1] sm:$0xff] %vm31, %v197
  %263 = vst.msk [vmem:[%s205 + $0x2d9] sm:$0xff] %vm31, %v198
  %264 = vst.msk [vmem:[%s205 + $0x2e9] sm:$0xff] %vm31, %v199
  %265 = vst.msk [vmem:[%s205 + $0x2f1] sm:$0xff] %vm31, %v200
  %266 = vst.msk [vmem:[%s205 + $0x301] sm:$0xff] %vm31, %v201
  %267 = vst.msk [vmem:[%s205 + $0x309] sm:$0xff] %vm31, %v202
  %268 = vst.msk [vmem:[%s205 + $0x319] sm:$0xff] %vm31, %v203
  %269 = vst.msk [vmem:[%s205 + $0x321] sm:$0xff] %vm31, %v204
  %v270 = vld [vmem:[#allocation2] sm:$0xff]
  %v271 = vld [vmem:[#allocation2 + $0x8] sm:$0xff]
  %v272 = vld [vmem:[#allocation2 + $0x18] sm:$0xff]
  %v273 = vld [vmem:[#allocation2 + $0x20] sm:$0xff]
  %v274 = vld [vmem:[#allocation2 + $0x30] sm:$0xff]
  %v275 = vld [vmem:[#allocation2 + $0x38] sm:$0xff]
  %v276 = vld [vmem:[#allocation2 + $0x48] sm:$0xff]
  %v277 = vld [vmem:[#allocation2 + $0x50] sm:$0xff]
  %v278 = vld [vmem:[#allocation2 + $0x60] sm:$0xff]
  %v279 = vld [vmem:[#allocation2 + $0x68] sm:$0xff]
  %v280 = vld [vmem:[#allocation2 + $0x78] sm:$0xff]
  %v281 = vld [vmem:[#allocation2 + $0x80] sm:$0xff]
  %v282 = vld [vmem:[#allocation2 + $0x90] sm:$0xff]
  %v283 = vld [vmem:[#allocation2 + $0x98] sm:$0xff]
  %v284 = vld [vmem:[#allocation2 + $0xa8] sm:$0xff]
  %v285 = vld [vmem:[#allocation2 + $0xb0] sm:$0xff]
  %v286 = vld [vmem:[#allocation2 + $0xc0] sm:$0xff]
  %v287 = vld [vmem:[#allocation2 + $0xc8] sm:$0xff]
  %v288 = vld [vmem:[#allocation2 + $0xd8] sm:$0xff]
  %v289 = vld [vmem:[#allocation2 + $0xe0] sm:$0xff]
  %v290 = vld [vmem:[#allocation2 + $0xf0] sm:$0xff]
  %v291 = vld [vmem:[#allocation2 + $0xf8] sm:$0xff]
  %v292 = vld [vmem:[#allocation2 + $0x108] sm:$0xff]
  %v293 = vld [vmem:[#allocation2 + $0x110] sm:$0xff]
  %v294 = vld [vmem:[#allocation2 + $0x120] sm:$0xff]
  %v295 = vld [vmem:[#allocation2 + $0x128] sm:$0xff]
  %v296 = vld [vmem:[#allocation2 + $0x138] sm:$0xff]
  %v297 = vld [vmem:[#allocation2 + $0x140] sm:$0xff]
  %v298 = vld [vmem:[#allocation2 + $0x150] sm:$0xff]
  %v299 = vld [vmem:[#allocation2 + $0x158] sm:$0xff]
  %v300 = vld [vmem:[#allocation2 + $0x168] sm:$0xff]
  %v301 = vld [vmem:[#allocation2 + $0x170] sm:$0xff]
  %v302 = vld [vmem:[#allocation2 + $0x1b0] sm:$0xff]
  %v303 = vld [vmem:[#allocation2 + $0x1b8] sm:$0xff]
  %v304 = vld [vmem:[#allocation2 + $0x1c8] sm:$0xff]
  %v305 = vld [vmem:[#allocation2 + $0x1d0] sm:$0xff]
  %v306 = vld [vmem:[#allocation2 + $0x1e0] sm:$0xff]
  %v307 = vld [vmem:[#allocation2 + $0x1e8] sm:$0xff]
  %v308 = vld [vmem:[#allocation2 + $0x1f8] sm:$0xff]
  %v309 = vld [vmem:[#allocation2 + $0x200] sm:$0xff]
  %v310 = vld [vmem:[#allocation2 + $0x210] sm:$0xff]
  %v311 = vld [vmem:[#allocation2 + $0x218] sm:$0xff]
  %v312 = vld [vmem:[#allocation2 + $0x228] sm:$0xff]
  %v313 = vld [vmem:[#allocation2 + $0x230] sm:$0xff]
  %v314 = vld [vmem:[#allocation2 + $0x240] sm:$0xff]
  %v315 = vld [vmem:[#allocation2 + $0x248] sm:$0xff]
  %v316 = vld [vmem:[#allocation2 + $0x258] sm:$0xff]
  %v317 = vld [vmem:[#allocation2 + $0x260] sm:$0xff]
  %v318 = vld [vmem:[#allocation2 + $0x270] sm:$0xff]
  %v319 = vld [vmem:[#allocation2 + $0x278] sm:$0xff]
  %v320 = vld [vmem:[#allocation2 + $0x288] sm:$0xff]
  %v321 = vld [vmem:[#allocation2 + $0x290] sm:$0xff]
  %v322 = vld [vmem:[#allocation2 + $0x2a0] sm:$0xff]
  %v323 = vld [vmem:[#allocation2 + $0x2a8] sm:$0xff]
  %v324 = vld [vmem:[#allocation2 + $0x2b8] sm:$0xff]
  %v325 = vld [vmem:[#allocation2 + $0x2c0] sm:$0xff]
  %v326 = vld [vmem:[#allocation2 + $0x2d0] sm:$0xff]
  %v327 = vld [vmem:[#allocation2 + $0x2d8] sm:$0xff]
  %v328 = vld [vmem:[#allocation2 + $0x2e8] sm:$0xff]
  %v329 = vld [vmem:[#allocation2 + $0x2f0] sm:$0xff]
  %v330 = vld [vmem:[#allocation2 + $0x300] sm:$0xff]
  %v331 = vld [vmem:[#allocation2 + $0x308] sm:$0xff]
  %v332 = vld [vmem:[#allocation2 + $0x318] sm:$0xff]
  %v333 = vld [vmem:[#allocation2 + $0x320] sm:$0xff]
  %v334 = vld [vmem:[#allocation2 + $0x1] sm:$0xff]
  %v335 = vld [vmem:[#allocation2 + $0x9] sm:$0xff]
  %v336 = vld [vmem:[#allocation2 + $0x19] sm:$0xff]
  %v337 = vld [vmem:[#allocation2 + $0x21] sm:$0xff]
  %v338 = vld [vmem:[#allocation2 + $0x31] sm:$0xff]
  %v339 = vld [vmem:[#allocation2 + $0x39] sm:$0xff]
  %v340 = vld [vmem:[#allocation2 + $0x49] sm:$0xff]
  %v341 = vld [vmem:[#allocation2 + $0x51] sm:$0xff]
  %v342 = vld [vmem:[#allocation2 + $0x61] sm:$0xff]
  %v343 = vld [vmem:[#allocation2 + $0x69] sm:$0xff]
  %v344 = vld [vmem:[#allocation2 + $0x79] sm:$0xff]
  %v345 = vld [vmem:[#allocation2 + $0x81] sm:$0xff]
  %v346 = vld [vmem:[#allocation2 + $0x91] sm:$0xff]
  %v347 = vld [vmem:[#allocation2 + $0x99] sm:$0xff]
  %v348 = vld [vmem:[#allocation2 + $0xa9] sm:$0xff]
  %v349 = vld [vmem:[#allocation2 + $0xb1] sm:$0xff]
  %v350 = vld [vmem:[#allocation2 + $0xc1] sm:$0xff]
  %v351 = vld [vmem:[#allocation2 + $0xc9] sm:$0xff]
  %v352 = vld [vmem:[#allocation2 + $0xd9] sm:$0xff]
  %v353 = vld [vmem:[#allocation2 + $0xe1] sm:$0xff]
  %v354 = vld [vmem:[#allocation2 + $0xf1] sm:$0xff]
  %v355 = vld [vmem:[#allocation2 + $0xf9] sm:$0xff]
  %v356 = vld [vmem:[#allocation2 + $0x109] sm:$0xff]
  %v357 = vld [vmem:[#allocation2 + $0x111] sm:$0xff]
  %v358 = vld [vmem:[#allocation2 + $0x121] sm:$0xff]
  %v359 = vld [vmem:[#allocation2 + $0x129] sm:$0xff]
  %v360 = vld [vmem:[#allocation2 + $0x139] sm:$0xff]
  %v361 = vld [vmem:[#allocation2 + $0x141] sm:$0xff]
  %v362 = vld [vmem:[#allocation2 + $0x151] sm:$0xff]
  %v363 = vld [vmem:[#allocation2 + $0x159] sm:$0xff]
  %v364 = vld [vmem:[#allocation2 + $0x169] sm:$0xff]
  %v365 = vld [vmem:[#allocation2 + $0x171] sm:$0xff]
  %v366 = vld [vmem:[#allocation2 + $0x1b1] sm:$0xff]
  %v367 = vld [vmem:[#allocation2 + $0x1b9] sm:$0xff]
  %v368 = vld [vmem:[#allocation2 + $0x1c9] sm:$0xff]
  %v369 = vld [vmem:[#allocation2 + $0x1d1] sm:$0xff]
  %v370 = vld [vmem:[#allocation2 + $0x1e1] sm:$0xff]
  %v371 = vld [vmem:[#allocation2 + $0x1e9] sm:$0xff]
  %v372 = vld [vmem:[#allocation2 + $0x1f9] sm:$0xff]
  %v373 = vld [vmem:[#allocation2 + $0x201] sm:$0xff]
  %v374 = vld [vmem:[#allocation2 + $0x211] sm:$0xff]
  %v375 = vld [vmem:[#allocation2 + $0x219] sm:$0xff]
  %v376 = vld [vmem:[#allocation2 + $0x229] sm:$0xff]
  %v377 = vld [vmem:[#allocation2 + $0x231] sm:$0xff]
  %v378 = vld [vmem:[#allocation2 + $0x241] sm:$0xff]
  %v379 = vld [vmem:[#allocation2 + $0x249] sm:$0xff]
  %v380 = vld [vmem:[#allocation2 + $0x259] sm:$0xff]
  %v381 = vld [vmem:[#allocation2 + $0x261] sm:$0xff]
  %v382 = vld [vmem:[#allocation2 + $0x271] sm:$0xff]
  %v383 = vld [vmem:[#allocation2 + $0x279] sm:$0xff]
  %v384 = vld [vmem:[#allocation2 + $0x289] sm:$0xff]
  %v385 = vld [vmem:[#allocation2 + $0x291] sm:$0xff]
  %v386 = vld [vmem:[#allocation2 + $0x2a1] sm:$0xff]
  %v387 = vld [vmem:[#allocation2 + $0x2a9] sm:$0xff]
  %v388 = vld [vmem:[#allocation2 + $0x2b9] sm:$0xff]
  %v389 = vld [vmem:[#allocation2 + $0x2c1] sm:$0xff]
  %v390 = vld [vmem:[#allocation2 + $0x2d1] sm:$0xff]
  %v391 = vld [vmem:[#allocation2 + $0x2d9] sm:$0xff]
  %v392 = vld [vmem:[#allocation2 + $0x2e9] sm:$0xff]
  %v393 = vld [vmem:[#allocation2 + $0x2f1] sm:$0xff]
  %v394 = vld [vmem:[#allocation2 + $0x301] sm:$0xff]
  %v395 = vld [vmem:[#allocation2 + $0x309] sm:$0xff]
  %v396 = vld [vmem:[#allocation2 + $0x319] sm:$0xff]
  %v397 = vld [vmem:[#allocation2 + $0x321] sm:$0xff]
  %v398 = vld [vmem:[#allocation2 + $0x2] sm:$0xff]
  %v399 = vld [vmem:[#allocation2 + $0xa] sm:$0xff]
  %v400 = vld [vmem:[#allocation2 + $0x1a] sm:$0xff]
  %v401 = vld [vmem:[#allocation2 + $0x22] sm:$0xff]
  %v402 = vld [vmem:[#allocation2 + $0x32] sm:$0xff]
  %v403 = vld [vmem:[#allocation2 + $0x3a] sm:$0xff]
  %v404 = vld [vmem:[#allocation2 + $0x4a] sm:$0xff]
  %v405 = vld [vmem:[#allocation2 + $0x52] sm:$0xff]
  %v406 = vld [vmem:[#allocation2 + $0x62] sm:$0xff]
  %v407 = vld [vmem:[#allocation2 + $0x6a] sm:$0xff]
  %v408 = vld [vmem:[#allocation2 + $0x7a] sm:$0xff]
  %v409 = vld [vmem:[#allocation2 + $0x82] sm:$0xff]
  %v410 = vld [vmem:[#allocation2 + $0x92] sm:$0xff]
  %v411 = vld [vmem:[#allocation2 + $0x9a] sm:$0xff]
  %v412 = vld [vmem:[#allocation2 + $0xaa] sm:$0xff]
  %v413 = vld [vmem:[#allocation2 + $0xb2] sm:$0xff]
  %v414 = vld [vmem:[#allocation2 + $0xc2] sm:$0xff]
  %v415 = vld [vmem:[#allocation2 + $0xca] sm:$0xff]
  %v416 = vld [vmem:[#allocation2 + $0xda] sm:$0xff]
  %v417 = vld [vmem:[#allocation2 + $0xe2] sm:$0xff]
  %v418 = vld [vmem:[#allocation2 + $0xf2] sm:$0xff]
  %v419 = vld [vmem:[#allocation2 + $0xfa] sm:$0xff]
  %v420 = vld [vmem:[#allocation2 + $0x10a] sm:$0xff]
  %v421 = vld [vmem:[#allocation2 + $0x112] sm:$0xff]
  %v422 = vld [vmem:[#allocation2 + $0x122] sm:$0xff]
  %v423 = vld [vmem:[#allocation2 + $0x12a] sm:$0xff]
  %v424 = vld [vmem:[#allocation2 + $0x13a] sm:$0xff]
  %v425 = vld [vmem:[#allocation2 + $0x142] sm:$0xff]
  %v426 = vld [vmem:[#allocation2 + $0x152] sm:$0xff]
  %v427 = vld [vmem:[#allocation2 + $0x15a] sm:$0xff]
  %v428 = vld [vmem:[#allocation2 + $0x16a] sm:$0xff]
  %v429 = vld [vmem:[#allocation2 + $0x172] sm:$0xff]
  %v430 = vld [vmem:[#allocation2 + $0x1b2] sm:$0xff]
  %v431 = vld [vmem:[#allocation2 + $0x1ba] sm:$0xff]
  %v432 = vld [vmem:[#allocation2 + $0x1ca] sm:$0xff]
  %v433 = vld [vmem:[#allocation2 + $0x1d2] sm:$0xff]
  %v434 = vld [vmem:[#allocation2 + $0x1e2] sm:$0xff]
  %v435 = vld [vmem:[#allocation2 + $0x1ea] sm:$0xff]
  %v436 = vld [vmem:[#allocation2 + $0x1fa] sm:$0xff]
  %v437 = vld [vmem:[#allocation2 + $0x202] sm:$0xff]
  %v438 = vld [vmem:[#allocation2 + $0x212] sm:$0xff]
  %v439 = vld [vmem:[#allocation2 + $0x21a] sm:$0xff]
  %v440 = vld [vmem:[#allocation2 + $0x22a] sm:$0xff]
  %v441 = vld [vmem:[#allocation2 + $0x232] sm:$0xff]
  %v442 = vld [vmem:[#allocation2 + $0x242] sm:$0xff]
  %v443 = vld [vmem:[#allocation2 + $0x24a] sm:$0xff]
  %v444 = vld [vmem:[#allocation2 + $0x25a] sm:$0xff]
  %v445 = vld [vmem:[#allocation2 + $0x262] sm:$0xff]
  %v446 = vld [vmem:[#allocation2 + $0x272] sm:$0xff]
  %v447 = vld [vmem:[#allocation2 + $0x27a] sm:$0xff]
  %v448 = vld [vmem:[#allocation2 + $0x28a] sm:$0xff]
  %v449 = vld [vmem:[#allocation2 + $0x292] sm:$0xff]
  %v450 = vld [vmem:[#allocation2 + $0x2a2] sm:$0xff]
  %v451 = vld [vmem:[#allocation2 + $0x2aa] sm:$0xff]
  %v452 = vld [vmem:[#allocation2 + $0x2ba] sm:$0xff]
  %v453 = vld [vmem:[#allocation2 + $0x2c2] sm:$0xff]
  %v454 = vld [vmem:[#allocation2 + $0x2d2] sm:$0xff]
  %v455 = vld [vmem:[#allocation2 + $0x2da] sm:$0xff]
  %v456 = vld [vmem:[#allocation2 + $0x2ea] sm:$0xff]
  %v457 = vld [vmem:[#allocation2 + $0x2f2] sm:$0xff]
  %v458 = vld [vmem:[#allocation2 + $0x302] sm:$0xff]
  %v459 = vld [vmem:[#allocation2 + $0x30a] sm:$0xff]
  %v460 = vld [vmem:[#allocation2 + $0x31a] sm:$0xff]
  %v461 = vld [vmem:[#allocation2 + $0x322] sm:$0xff]
  %v462 = vld [vmem:[%s205] sm:$0xff]
  %v463 = vld [vmem:[%s205 + $0x8] sm:$0xff]
  %v464 = vld [vmem:[%s205 + $0x18] sm:$0xff]
  %v465 = vld [vmem:[%s205 + $0x20] sm:$0xff]
  %v466 = vld [vmem:[%s205 + $0x30] sm:$0xff]
  %v467 = vld [vmem:[%s205 + $0x38] sm:$0xff]
  %v468 = vld [vmem:[%s205 + $0x48] sm:$0xff]
  %v469 = vld [vmem:[%s205 + $0x50] sm:$0xff]
  %v470 = vld [vmem:[%s205 + $0x60] sm:$0xff]
  %v471 = vld [vmem:[%s205 + $0x68] sm:$0xff]
  %v472 = vld [vmem:[%s205 + $0x78] sm:$0xff]
  %v473 = vld [vmem:[%s205 + $0x80] sm:$0xff]
  %v474 = vld [vmem:[%s205 + $0x90] sm:$0xff]
  %v475 = vld [vmem:[%s205 + $0x98] sm:$0xff]
  %v476 = vld [vmem:[%s205 + $0xa8] sm:$0xff]
  %v477 = vld [vmem:[%s205 + $0xb0] sm:$0xff]
  %v478 = vld [vmem:[%s205 + $0xc0] sm:$0xff]
  %v479 = vld [vmem:[%s205 + $0xc8] sm:$0xff]
  %v480 = vld [vmem:[%s205 + $0xd8] sm:$0xff]
  %v481 = vld [vmem:[%s205 + $0xe0] sm:$0xff]
  %v482 = vld [vmem:[%s205 + $0xf0] sm:$0xff]
  %v483 = vld [vmem:[%s205 + $0xf8] sm:$0xff]
  %v484 = vld [vmem:[%s205 + $0x108] sm:$0xff]
  %v485 = vld [vmem:[%s205 + $0x110] sm:$0xff]
  %v486 = vld [vmem:[%s205 + $0x120] sm:$0xff]
  %v487 = vld [vmem:[%s205 + $0x128] sm:$0xff]
  %v488 = vld [vmem:[%s205 + $0x138] sm:$0xff]
  %v489 = vld [vmem:[%s205 + $0x140] sm:$0xff]
  %v490 = vld [vmem:[%s205 + $0x150] sm:$0xff]
  %v491 = vld [vmem:[%s205 + $0x158] sm:$0xff]
  %v492 = vld [vmem:[%s205 + $0x168] sm:$0xff]
  %v493 = vld [vmem:[%s205 + $0x170] sm:$0xff]
  %v494 = vld [vmem:[%s205 + $0x1b0] sm:$0xff]
  %v495 = vld [vmem:[%s205 + $0x1b8] sm:$0xff]
  %v496 = vld [vmem:[%s205 + $0x1c8] sm:$0xff]
  %v497 = vld [vmem:[%s205 + $0x1d0] sm:$0xff]
  %v498 = vld [vmem:[%s205 + $0x1e0] sm:$0xff]
  %v499 = vld [vmem:[%s205 + $0x1e8] sm:$0xff]
  %v500 = vld [vmem:[%s205 + $0x1f8] sm:$0xff]
  %v501 = vld [vmem:[%s205 + $0x200] sm:$0xff]
  %v502 = vld [vmem:[%s205 + $0x210] sm:$0xff]
  %v503 = vld [vmem:[%s205 + $0x218] sm:$0xff]
  %v504 = vld [vmem:[%s205 + $0x228] sm:$0xff]
  %v505 = vld [vmem:[%s205 + $0x230] sm:$0xff]
  %v506 = vld [vmem:[%s205 + $0x240] sm:$0xff]
  %v507 = vld [vmem:[%s205 + $0x248] sm:$0xff]
  %v508 = vld [vmem:[%s205 + $0x258] sm:$0xff]
  %v509 = vld [vmem:[%s205 + $0x260] sm:$0xff]
  %v510 = vld [vmem:[%s205 + $0x270] sm:$0xff]
  %v511 = vld [vmem:[%s205 + $0x278] sm:$0xff]
  %v512 = vld [vmem:[%s205 + $0x288] sm:$0xff]
  %v513 = vld [vmem:[%s205 + $0x290] sm:$0xff]
  %v514 = vld [vmem:[%s205 + $0x2a0] sm:$0xff]
  %v515 = vld [vmem:[%s205 + $0x2a8] sm:$0xff]
  %v516 = vld [vmem:[%s205 + $0x2b8] sm:$0xff]
  %v517 = vld [vmem:[%s205 + $0x2c0] sm:$0xff]
  %v518 = vld [vmem:[%s205 + $0x2d0] sm:$0xff]
  %v519 = vld [vmem:[%s205 + $0x2d8] sm:$0xff]
  %v520 = vld [vmem:[%s205 + $0x2e8] sm:$0xff]
  %v521 = vld [vmem:[%s205 + $0x2f0] sm:$0xff]
  %v522 = vld [vmem:[%s205 + $0x300] sm:$0xff]
  %v523 = vld [vmem:[%s205 + $0x308] sm:$0xff]
  %v524 = vld [vmem:[%s205 + $0x318] sm:$0xff]
  %v525 = vld [vmem:[%s205 + $0x320] sm:$0xff]
  %v526 = vld [vmem:[%s205 + $0x1] sm:$0xff]
  %v527 = vld [vmem:[%s205 + $0x9] sm:$0xff]
  %v528 = vld [vmem:[%s205 + $0x19] sm:$0xff]
  %v529 = vld [vmem:[%s205 + $0x21] sm:$0xff]
  %v530 = vld [vmem:[%s205 + $0x31] sm:$0xff]
  %v531 = vld [vmem:[%s205 + $0x39] sm:$0xff]
  %v532 = vld [vmem:[%s205 + $0x49] sm:$0xff]
  %v533 = vld [vmem:[%s205 + $0x51] sm:$0xff]
  %v534 = vld [vmem:[%s205 + $0x61] sm:$0xff]
  %v535 = vld [vmem:[%s205 + $0x69] sm:$0xff]
  %v536 = vld [vmem:[%s205 + $0x79] sm:$0xff]
  %v537 = vld [vmem:[%s205 + $0x81] sm:$0xff]
  %v538 = vld [vmem:[%s205 + $0x91] sm:$0xff]
  %v539 = vld [vmem:[%s205 + $0x99] sm:$0xff]
  %v540 = vld [vmem:[%s205 + $0xa9] sm:$0xff]
  %v541 = vld [vmem:[%s205 + $0xb1] sm:$0xff]
  %v542 = vld [vmem:[%s205 + $0xc1] sm:$0xff]
  %v543 = vld [vmem:[%s205 + $0xc9] sm:$0xff]
  %v544 = vld [vmem:[%s205 + $0xd9] sm:$0xff]
  %v545 = vld [vmem:[%s205 + $0xe1] sm:$0xff]
  %v546 = vld [vmem:[%s205 + $0xf1] sm:$0xff]
  %v547 = vld [vmem:[%s205 + $0xf9] sm:$0xff]
  %v548 = vld [vmem:[%s205 + $0x109] sm:$0xff]
  %v549 = vld [vmem:[%s205 + $0x111] sm:$0xff]
  %v550 = vld [vmem:[%s205 + $0x121] sm:$0xff]
  %v551 = vld [vmem:[%s205 + $0x129] sm:$0xff]
  %v552 = vld [vmem:[%s205 + $0x139] sm:$0xff]
  %v553 = vld [vmem:[%s205 + $0x141] sm:$0xff]
  %v554 = vld [vmem:[%s205 + $0x151] sm:$0xff]
  %v555 = vld [vmem:[%s205 + $0x159] sm:$0xff]
  %v556 = vld [vmem:[%s205 + $0x169] sm:$0xff]
  %v557 = vld [vmem:[%s205 + $0x171] sm:$0xff]
  %v558 = vld [vmem:[%s205 + $0x1b1] sm:$0xff]
  %v559 = vld [vmem:[%s205 + $0x1b9] sm:$0xff]
  %v560 = vld [vmem:[%s205 + $0x1c9] sm:$0xff]
  %v561 = vld [vmem:[%s205 + $0x1d1] sm:$0xff]
  %v562 = vld [vmem:[%s205 + $0x1e1] sm:$0xff]
  %v563 = vld [vmem:[%s205 + $0x1e9] sm:$0xff]
  %v564 = vld [vmem:[%s205 + $0x1f9] sm:$0xff]
  %v565 = vld [vmem:[%s205 + $0x201] sm:$0xff]
  %v566 = vld [vmem:[%s205 + $0x211] sm:$0xff]
  %v567 = vld [vmem:[%s205 + $0x219] sm:$0xff]
  %v568 = vld [vmem:[%s205 + $0x229] sm:$0xff]
  %v569 = vld [vmem:[%s205 + $0x231] sm:$0xff]
  %v570 = vld [vmem:[%s205 + $0x241] sm:$0xff]
  %v571 = vld [vmem:[%s205 + $0x249] sm:$0xff]
  %v572 = vld [vmem:[%s205 + $0x259] sm:$0xff]
  %v573 = vld [vmem:[%s205 + $0x261] sm:$0xff]
  %v574 = vld [vmem:[%s205 + $0x271] sm:$0xff]
  %v575 = vld [vmem:[%s205 + $0x279] sm:$0xff]
  %v576 = vld [vmem:[%s205 + $0x289] sm:$0xff]
  %v577 = vld [vmem:[%s205 + $0x291] sm:$0xff]
  %v578 = vld [vmem:[%s205 + $0x2a1] sm:$0xff]
  %v579 = vld [vmem:[%s205 + $0x2a9] sm:$0xff]
  %v580 = vld [vmem:[%s205 + $0x2b9] sm:$0xff]
  %v581 = vld [vmem:[%s205 + $0x2c1] sm:$0xff]
  %v582 = vld [vmem:[%s205 + $0x2d1] sm:$0xff]
  %v583 = vld [vmem:[%s205 + $0x2d9] sm:$0xff]
  %v584 = vld [vmem:[%s205 + $0x2e9] sm:$0xff]
  %v585 = vld [vmem:[%s205 + $0x2f1] sm:$0xff]
  %v586 = vld [vmem:[%s205 + $0x301] sm:$0xff]
  %v587 = vld [vmem:[%s205 + $0x309] sm:$0xff]
  %v588 = vld [vmem:[%s205 + $0x319] sm:$0xff]
  %v589 = vld [vmem:[%s205 + $0x321] sm:$0xff]
  %v590 = vld [vmem:[%s205 + $0x2] sm:$0xff]
  %v591 = vld [vmem:[%s205 + $0xa] sm:$0xff]
  %v592 = vld [vmem:[%s205 + $0x1a] sm:$0xff]
  %v593 = vld [vmem:[%s205 + $0x22] sm:$0xff]
  %v594 = vld [vmem:[%s205 + $0x32] sm:$0xff]
  %v595 = vld [vmem:[%s205 + $0x3a] sm:$0xff]
  %v596 = vld [vmem:[%s205 + $0x4a] sm:$0xff]
  %v597 = vld [vmem:[%s205 + $0x52] sm:$0xff]
  %v598 = vld [vmem:[%s205 + $0x62] sm:$0xff]
  %v599 = vld [vmem:[%s205 + $0x6a] sm:$0xff]
  %v600 = vld [vmem:[%s205 + $0x7a] sm:$0xff]
  %v601 = vld [vmem:[%s205 + $0x82] sm:$0xff]
  %v602 = vld [vmem:[%s205 + $0x92] sm:$0xff]
  %v603 = vld [vmem:[%s205 + $0x9a] sm:$0xff]
  %v604 = vld [vmem:[%s205 + $0xaa] sm:$0xff]
  %v605 = vld [vmem:[%s205 + $0xb2] sm:$0xff]
  %v606 = vld [vmem:[%s205 + $0xc2] sm:$0xff]
  %v607 = vld [vmem:[%s205 + $0xca] sm:$0xff]
  %v608 = vld [vmem:[%s205 + $0xda] sm:$0xff]
  %v609 = vld [vmem:[%s205 + $0xe2] sm:$0xff]
  %v610 = vld [vmem:[%s205 + $0xf2] sm:$0xff]
  %v611 = vld [vmem:[%s205 + $0xfa] sm:$0xff]
  %v612 = vld [vmem:[%s205 + $0x10a] sm:$0xff]
  %v613 = vld [vmem:[%s205 + $0x112] sm:$0xff]
  %v614 = vld [vmem:[%s205 + $0x122] sm:$0xff]
  %v615 = vld [vmem:[%s205 + $0x12a] sm:$0xff]
  %v616 = vld [vmem:[%s205 + $0x13a] sm:$0xff]
  %v617 = vld [vmem:[%s205 + $0x142] sm:$0xff]
  %v618 = vld [vmem:[%s205 + $0x152] sm:$0xff]
  %v619 = vld [vmem:[%s205 + $0x15a] sm:$0xff]
  %v620 = vld [vmem:[%s205 + $0x16a] sm:$0xff]
  %v621 = vld [vmem:[%s205 + $0x172] sm:$0xff]
  %v622 = vld [vmem:[%s205 + $0x1b2] sm:$0xff]
  %v623 = vld [vmem:[%s205 + $0x1ba] sm:$0xff]
  %v624 = vld [vmem:[%s205 + $0x1ca] sm:$0xff]
  %v625 = vld [vmem:[%s205 + $0x1d2] sm:$0xff]
  %v626 = vld [vmem:[%s205 + $0x1e2] sm:$0xff]
  %v627 = vld [vmem:[%s205 + $0x1ea] sm:$0xff]
  %v628 = vld [vmem:[%s205 + $0x1fa] sm:$0xff]
  %v629 = vld [vmem:[%s205 + $0x202] sm:$0xff]
  %v630 = vld [vmem:[%s205 + $0x212] sm:$0xff]
  %v631 = vld [vmem:[%s205 + $0x21a] sm:$0xff]
  %v632 = vld [vmem:[%s205 + $0x22a] sm:$0xff]
  %v633 = vld [vmem:[%s205 + $0x232] sm:$0xff]
  %v634 = vld [vmem:[%s205 + $0x242] sm:$0xff]
  %v635 = vld [vmem:[%s205 + $0x24a] sm:$0xff]
  %v636 = vld [vmem:[%s205 + $0x25a] sm:$0xff]
  %v637 = vld [vmem:[%s205 + $0x262] sm:$0xff]
  %v638 = vld [vmem:[%s205 + $0x272] sm:$0xff]
  %v639 = vld [vmem:[%s205 + $0x27a] sm:$0xff]
  %v640 = vld [vmem:[%s205 + $0x28a] sm:$0xff]
  %v641 = vld [vmem:[%s205 + $0x292] sm:$0xff]
  %v642 = vld [vmem:[%s205 + $0x2a2] sm:$0xff]
  %v643 = vld [vmem:[%s205 + $0x2aa] sm:$0xff]
  %v644 = vld [vmem:[%s205 + $0x2ba] sm:$0xff]
  %v645 = vld [vmem:[%s205 + $0x2c2] sm:$0xff]
  %v646 = vld [vmem:[%s205 + $0x2d2] sm:$0xff]
  %v647 = vld [vmem:[%s205 + $0x2da] sm:$0xff]
  %v648 = vld [vmem:[%s205 + $0x2ea] sm:$0xff]
  %v649 = vld [vmem:[%s205 + $0x2f2] sm:$0xff]
  %v650 = vld [vmem:[%s205 + $0x302] sm:$0xff]
  %v651 = vld [vmem:[%s205 + $0x30a] sm:$0xff]
  %v652 = vld [vmem:[%s205 + $0x31a] sm:$0xff]
  %v653 = vld [vmem:[%s205 + $0x322] sm:$0xff]
  %s654 = scalar_lea.vmem [#allocation2], 48
  %v655 = vld [vmem:[%s654] sm:$0xff]
  %v656 = vld [vmem:[%s654 + $0x8] sm:$0xff]
  %v657 = vld [vmem:[%s654 + $0x18] sm:$0xff]
  %v658 = vld [vmem:[%s654 + $0x20] sm:$0xff]
  %v659 = vld [vmem:[%s654 + $0x30] sm:$0xff]
  %v660 = vld [vmem:[%s654 + $0x38] sm:$0xff]
  %v661 = vld [vmem:[%s654 + $0x48] sm:$0xff]
  %v662 = vld [vmem:[%s654 + $0x50] sm:$0xff]
  %v663 = vld [vmem:[%s654 + $0x60] sm:$0xff]
  %v664 = vld [vmem:[%s654 + $0x68] sm:$0xff]
  %v665 = vld [vmem:[%s654 + $0x78] sm:$0xff]
  %v666 = vld [vmem:[%s654 + $0x80] sm:$0xff]
  %v667 = vld [vmem:[%s654 + $0x90] sm:$0xff]
  %v668 = vld [vmem:[%s654 + $0x98] sm:$0xff]
  %v669 = vld [vmem:[%s654 + $0xa8] sm:$0xff]
  %v670 = vld [vmem:[%s654 + $0xb0] sm:$0xff]
  %v671 = vld [vmem:[%s654 + $0xc0] sm:$0xff]
  %v672 = vld [vmem:[%s654 + $0xc8] sm:$0xff]
  %v673 = vld [vmem:[%s654 + $0xd8] sm:$0xff]
  %v674 = vld [vmem:[%s654 + $0xe0] sm:$0xff]
  %v675 = vld [vmem:[%s654 + $0xf0] sm:$0xff]
  %v676 = vld [vmem:[%s654 + $0xf8] sm:$0xff]
  %v677 = vld [vmem:[%s654 + $0x108] sm:$0xff]
  %v678 = vld [vmem:[%s654 + $0x110] sm:$0xff]
  %v679 = vld [vmem:[%s654 + $0x120] sm:$0xff]
  %v680 = vld [vmem:[%s654 + $0x128] sm:$0xff]
  %v681 = vld [vmem:[%s654 + $0x138] sm:$0xff]
  %v682 = vld [vmem:[%s654 + $0x140] sm:$0xff]
  %v683 = vld [vmem:[%s654 + $0x150] sm:$0xff]
  %v684 = vld [vmem:[%s654 + $0x158] sm:$0xff]
  %v685 = vld [vmem:[%s654 + $0x168] sm:$0xff]
  %v686 = vld [vmem:[%s654 + $0x170] sm:$0xff]
  %v687 = vld [vmem:[%s654 + $0x1b0] sm:$0xff]
  %v688 = vld [vmem:[%s654 + $0x1b8] sm:$0xff]
  %v689 = vld [vmem:[%s654 + $0x1c8] sm:$0xff]
  %v690 = vld [vmem:[%s654 + $0x1d0] sm:$0xff]
  %v691 = vld [vmem:[%s654 + $0x1e0] sm:$0xff]
  %v692 = vld [vmem:[%s654 + $0x1e8] sm:$0xff]
  %v693 = vld [vmem:[%s654 + $0x1f8] sm:$0xff]
  %v694 = vld [vmem:[%s654 + $0x200] sm:$0xff]
  %v695 = vld [vmem:[%s654 + $0x210] sm:$0xff]
  %v696 = vld [vmem:[%s654 + $0x218] sm:$0xff]
  %v697 = vld [vmem:[%s654 + $0x228] sm:$0xff]
  %v698 = vld [vmem:[%s654 + $0x230] sm:$0xff]
  %v699 = vld [vmem:[%s654 + $0x240] sm:$0xff]
  %v700 = vld [vmem:[%s654 + $0x248] sm:$0xff]
  %v701 = vld [vmem:[%s654 + $0x258] sm:$0xff]
  %v702 = vld [vmem:[%s654 + $0x260] sm:$0xff]
  %v703 = vld [vmem:[%s654 + $0x270] sm:$0xff]
  %v704 = vld [vmem:[%s654 + $0x278] sm:$0xff]
  %v705 = vld [vmem:[%s654 + $0x288] sm:$0xff]
  %v706 = vld [vmem:[%s654 + $0x290] sm:$0xff]
  %v707 = vld [vmem:[%s654 + $0x2a0] sm:$0xff]
  %v708 = vld [vmem:[%s654 + $0x2a8] sm:$0xff]
  %v709 = vld [vmem:[%s654 + $0x2b8] sm:$0xff]
  %v710 = vld [vmem:[%s654 + $0x2c0] sm:$0xff]
  %v711 = vld [vmem:[%s654 + $0x2d0] sm:$0xff]
  %v712 = vld [vmem:[%s654 + $0x2d8] sm:$0xff]
  %v713 = vld [vmem:[%s654 + $0x2e8] sm:$0xff]
  %v714 = vld [vmem:[%s654 + $0x2f0] sm:$0xff]
  %v715 = vld [vmem:[%s654 + $0x300] sm:$0xff]
  %v716 = vld [vmem:[%s654 + $0x308] sm:$0xff]
  %v717 = vld [vmem:[%s654 + $0x318] sm:$0xff]
  %v718 = vld [vmem:[%s654 + $0x320] sm:$0xff]
  %v719 = vld [vmem:[%s654 + $0x1] sm:$0xff]
  %v720 = vld [vmem:[%s654 + $0x9] sm:$0xff]
  %v721 = vld [vmem:[%s654 + $0x19] sm:$0xff]
  %v722 = vld [vmem:[%s654 + $0x21] sm:$0xff]
  %v723 = vld [vmem:[%s654 + $0x31] sm:$0xff]
  %v724 = vld [vmem:[%s654 + $0x39] sm:$0xff]
  %v725 = vld [vmem:[%s654 + $0x49] sm:$0xff]
  %v726 = vld [vmem:[%s654 + $0x51] sm:$0xff]
  %v727 = vld [vmem:[%s654 + $0x61] sm:$0xff]
  %v728 = vld [vmem:[%s654 + $0x69] sm:$0xff]
  %v729 = vld [vmem:[%s654 + $0x79] sm:$0xff]
  %v730 = vld [vmem:[%s654 + $0x81] sm:$0xff]
  %v731 = vld [vmem:[%s654 + $0x91] sm:$0xff]
  %v732 = vld [vmem:[%s654 + $0x99] sm:$0xff]
  %v733 = vld [vmem:[%s654 + $0xa9] sm:$0xff]
  %v734 = vld [vmem:[%s654 + $0xb1] sm:$0xff]
  %v735 = vld [vmem:[%s654 + $0xc1] sm:$0xff]
  %v736 = vld [vmem:[%s654 + $0xc9] sm:$0xff]
  %v737 = vld [vmem:[%s654 + $0xd9] sm:$0xff]
  %v738 = vld [vmem:[%s654 + $0xe1] sm:$0xff]
  %v739 = vld [vmem:[%s654 + $0xf1] sm:$0xff]
  %v740 = vld [vmem:[%s654 + $0xf9] sm:$0xff]
  %v741 = vld [vmem:[%s654 + $0x109] sm:$0xff]
  %v742 = vld [vmem:[%s654 + $0x111] sm:$0xff]
  %v743 = vld [vmem:[%s654 + $0x121] sm:$0xff]
  %v744 = vld [vmem:[%s654 + $0x129] sm:$0xff]
  %v745 = vld [vmem:[%s654 + $0x139] sm:$0xff]
  %v746 = vld [vmem:[%s654 + $0x141] sm:$0xff]
  %v747 = vld [vmem:[%s654 + $0x151] sm:$0xff]
  %v748 = vld [vmem:[%s654 + $0x159] sm:$0xff]
  %v749 = vld [vmem:[%s654 + $0x169] sm:$0xff]
  %v750 = vld [vmem:[%s654 + $0x171] sm:$0xff]
  %v751 = vld [vmem:[%s654 + $0x1b1] sm:$0xff]
  %v752 = vld [vmem:[%s654 + $0x1b9] sm:$0xff]
  %v753 = vld [vmem:[%s654 + $0x1c9] sm:$0xff]
  %v754 = vld [vmem:[%s654 + $0x1d1] sm:$0xff]
  %v755 = vld [vmem:[%s654 + $0x1e1] sm:$0xff]
  %v756 = vld [vmem:[%s654 + $0x1e9] sm:$0xff]
  %v757 = vld [vmem:[%s654 + $0x1f9] sm:$0xff]
  %v758 = vld [vmem:[%s654 + $0x201] sm:$0xff]
  %v759 = vld [vmem:[%s654 + $0x211] sm:$0xff]
  %v760 = vld [vmem:[%s654 + $0x219] sm:$0xff]
  %v761 = vld [vmem:[%s654 + $0x229] sm:$0xff]
  %v762 = vld [vmem:[%s654 + $0x231] sm:$0xff]
  %v763 = vld [vmem:[%s654 + $0x241] sm:$0xff]
  %v764 = vld [vmem:[%s654 + $0x249] sm:$0xff]
  %v765 = vld [vmem:[%s654 + $0x259] sm:$0xff]
  %v766 = vld [vmem:[%s654 + $0x261] sm:$0xff]
  %v767 = vld [vmem:[%s654 + $0x271] sm:$0xff]
  %v768 = vld [vmem:[%s654 + $0x279] sm:$0xff]
  %v769 = vld [vmem:[%s654 + $0x289] sm:$0xff]
  %v770 = vld [vmem:[%s654 + $0x291] sm:$0xff]
  %v771 = vld [vmem:[%s654 + $0x2a1] sm:$0xff]
  %v772 = vld [vmem:[%s654 + $0x2a9] sm:$0xff]
  %v773 = vld [vmem:[%s654 + $0x2b9] sm:$0xff]
  %v774 = vld [vmem:[%s654 + $0x2c1] sm:$0xff]
  %v775 = vld [vmem:[%s654 + $0x2d1] sm:$0xff]
  %v776 = vld [vmem:[%s654 + $0x2d9] sm:$0xff]
  %v777 = vld [vmem:[%s654 + $0x2e9] sm:$0xff]
  %v778 = vld [vmem:[%s654 + $0x2f1] sm:$0xff]
  %v779 = vld [vmem:[%s654 + $0x301] sm:$0xff]
  %v780 = vld [vmem:[%s654 + $0x309] sm:$0xff]
  %v781 = vld [vmem:[%s654 + $0x319] sm:$0xff]
  %v782 = vld [vmem:[%s654 + $0x321] sm:$0xff]
  %v783 = vld [vmem:[%s654 + $0x2] sm:$0xff]
  %v784 = vld [vmem:[%s654 + $0xa] sm:$0xff]
  %v785 = vld [vmem:[%s654 + $0x1a] sm:$0xff]
  %v786 = vld [vmem:[%s654 + $0x22] sm:$0xff]
  %v787 = vld [vmem:[%s654 + $0x32] sm:$0xff]
  %v788 = vld [vmem:[%s654 + $0x3a] sm:$0xff]
  %v789 = vld [vmem:[%s654 + $0x4a] sm:$0xff]
  %v790 = vld [vmem:[%s654 + $0x52] sm:$0xff]
  %v791 = vld [vmem:[%s654 + $0x62] sm:$0xff]
  %v792 = vld [vmem:[%s654 + $0x6a] sm:$0xff]
  %v793 = vld [vmem:[%s654 + $0x7a] sm:$0xff]
  %v794 = vld [vmem:[%s654 + $0x82] sm:$0xff]
  %v795 = vld [vmem:[%s654 + $0x92] sm:$0xff]
  %v796 = vld [vmem:[%s654 + $0x9a] sm:$0xff]
  %v797 = vld [vmem:[%s654 + $0xaa] sm:$0xff]
  %v798 = vld [vmem:[%s654 + $0xb2] sm:$0xff]
  %v799 = vld [vmem:[%s654 + $0xc2] sm:$0xff]
  %v800 = vld [vmem:[%s654 + $0xca] sm:$0xff]
  %v801 = vld [vmem:[%s654 + $0xda] sm:$0xff]
  %v802 = vld [vmem:[%s654 + $0xe2] sm:$0xff]
  %v803 = vld [vmem:[%s654 + $0xf2] sm:$0xff]
  %v804 = vld [vmem:[%s654 + $0xfa] sm:$0xff]
  %v805 = vld [vmem:[%s654 + $0x10a] sm:$0xff]
  %v806 = vld [vmem:[%s654 + $0x112] sm:$0xff]
  %v807 = vld [vmem:[%s654 + $0x122] sm:$0xff]
  %v808 = vld [vmem:[%s654 + $0x12a] sm:$0xff]
  %v809 = vld [vmem:[%s654 + $0x13a] sm:$0xff]
  %v810 = vld [vmem:[%s654 + $0x142] sm:$0xff]
  %v811 = vld [vmem:[%s654 + $0x152] sm:$0xff]
  %v812 = vld [vmem:[%s654 + $0x15a] sm:$0xff]
  %v813 = vld [vmem:[%s654 + $0x16a] sm:$0xff]
  %v814 = vld [vmem:[%s654 + $0x172] sm:$0xff]
  %v815 = vld [vmem:[%s654 + $0x1b2] sm:$0xff]
  %v816 = vld [vmem:[%s654 + $0x1ba] sm:$0xff]
  %v817 = vld [vmem:[%s654 + $0x1ca] sm:$0xff]
  %v818 = vld [vmem:[%s654 + $0x1d2] sm:$0xff]
  %v819 = vld [vmem:[%s654 + $0x1e2] sm:$0xff]
  %v820 = vld [vmem:[%s654 + $0x1ea] sm:$0xff]
  %v821 = vld [vmem:[%s654 + $0x1fa] sm:$0xff]
  %v822 = vld [vmem:[%s654 + $0x202] sm:$0xff]
  %v823 = vld [vmem:[%s654 + $0x212] sm:$0xff]
  %v824 = vld [vmem:[%s654 + $0x21a] sm:$0xff]
  %v825 = vld [vmem:[%s654 + $0x22a] sm:$0xff]
  %v826 = vld [vmem:[%s654 + $0x232] sm:$0xff]
  %v827 = vld [vmem:[%s654 + $0x242] sm:$0xff]
  %v828 = vld [vmem:[%s654 + $0x24a] sm:$0xff]
  %v829 = vld [vmem:[%s654 + $0x25a] sm:$0xff]
  %v830 = vld [vmem:[%s654 + $0x262] sm:$0xff]
  %v831 = vld [vmem:[%s654 + $0x272] sm:$0xff]
  %v832 = vld [vmem:[%s654 + $0x27a] sm:$0xff]
  %v833 = vld [vmem:[%s654 + $0x28a] sm:$0xff]
  %v834 = vld [vmem:[%s654 + $0x292] sm:$0xff]
  %v835 = vld [vmem:[%s654 + $0x2a2] sm:$0xff]
  %v836 = vld [vmem:[%s654 + $0x2aa] sm:$0xff]
  %v837 = vld [vmem:[%s654 + $0x2ba] sm:$0xff]
  %v838 = vld [vmem:[%s654 + $0x2c2] sm:$0xff]
  %v839 = vld [vmem:[%s654 + $0x2d2] sm:$0xff]
  %v840 = vld [vmem:[%s654 + $0x2da] sm:$0xff]
  %v841 = vld [vmem:[%s654 + $0x2ea] sm:$0xff]
  %v842 = vld [vmem:[%s654 + $0x2f2] sm:$0xff]
  %v843 = vld [vmem:[%s654 + $0x302] sm:$0xff]
  %v844 = vld [vmem:[%s654 + $0x30a] sm:$0xff]
  %v845 = vld [vmem:[%s654 + $0x31a] sm:$0xff]
  %v846 = vld [vmem:[%s654 + $0x322] sm:$0xff]
  %911 = vrot.lane.b32.xlu0 %v334, 4
  %v912 = vpop.permute.xlu0 %911
  %913 = vrot.lane.b32.xlu0 %v335, 4
  %v914 = vpop.permute.xlu0 %913
  %915 = vrot.lane.b32.xlu0 %v336, 4
  %v916 = vpop.permute.xlu0 %915
  %917 = vrot.lane.b32.xlu0 %v337, 4
  %v918 = vpop.permute.xlu0 %917
  %919 = vrot.lane.b32.xlu0 %v338, 4
  %v920 = vpop.permute.xlu0 %919
  %921 = vrot.lane.b32.xlu0 %v339, 4
  %v922 = vpop.permute.xlu0 %921
  %923 = vrot.lane.b32.xlu0 %v340, 4
  %v924 = vpop.permute.xlu0 %923
  %925 = vrot.lane.b32.xlu0 %v341, 4
  %v926 = vpop.permute.xlu0 %925
  %927 = vrot.lane.b32.xlu0 %v342, 4
  %v928 = vpop.permute.xlu0 %927
  %929 = vrot.lane.b32.xlu0 %v343, 4
  %v930 = vpop.permute.xlu0 %929
  %931 = vrot.lane.b32.xlu0 %v344, 4
  %v932 = vpop.permute.xlu0 %931
  %933 = vrot.lane.b32.xlu0 %v345, 4
  %v934 = vpop.permute.xlu0 %933
  %935 = vrot.lane.b32.xlu0 %v346, 4
  %v936 = vpop.permute.xlu0 %935
  %937 = vrot.lane.b32.xlu0 %v347, 4
  %v938 = vpop.permute.xlu0 %937
  %939 = vrot.lane.b32.xlu0 %v348, 4
  %v940 = vpop.permute.xlu0 %939
  %941 = vrot.lane.b32.xlu0 %v349, 4
  %v942 = vpop.permute.xlu0 %941
  %943 = vrot.lane.b32.xlu0 %v350, 4
  %v944 = vpop.permute.xlu0 %943
  %945 = vrot.lane.b32.xlu0 %v351, 4
  %v946 = vpop.permute.xlu0 %945
  %947 = vrot.lane.b32.xlu0 %v352, 4
  %v948 = vpop.permute.xlu0 %947
  %949 = vrot.lane.b32.xlu0 %v353, 4
  %v950 = vpop.permute.xlu0 %949
  %951 = vrot.lane.b32.xlu0 %v354, 4
  %v952 = vpop.permute.xlu0 %951
  %953 = vrot.lane.b32.xlu0 %v355, 4
  %v954 = vpop.permute.xlu0 %953
  %955 = vrot.lane.b32.xlu0 %v356, 4
  %v956 = vpop.permute.xlu0 %955
  %957 = vrot.lane.b32.xlu0 %v357, 4
  %v958 = vpop.permute.xlu0 %957
  %959 = vrot.lane.b32.xlu0 %v358, 4
  %v960 = vpop.permute.xlu0 %959
  %961 = vrot.lane.b32.xlu0 %v359, 4
  %v962 = vpop.permute.xlu0 %961
  %963 = vrot.lane.b32.xlu0 %v360, 4
  %v964 = vpop.permute.xlu0 %963
  %965 = vrot.lane.b32.xlu0 %v361, 4
  %v966 = vpop.permute.xlu0 %965
  %967 = vrot.lane.b32.xlu0 %v362, 4
  %v968 = vpop.permute.xlu0 %967
  %969 = vrot.lane.b32.xlu0 %v363, 4
  %v970 = vpop.permute.xlu0 %969
  %971 = vrot.lane.b32.xlu0 %v364, 4
  %v972 = vpop.permute.xlu0 %971
  %973 = vrot.lane.b32.xlu0 %v365, 4
  %v974 = vpop.permute.xlu0 %973
  %975 = vrot.lane.b32.xlu0 %v366, 4
  %v976 = vpop.permute.xlu0 %975
  %977 = vrot.lane.b32.xlu0 %v367, 4
  %v978 = vpop.permute.xlu0 %977
  %979 = vrot.lane.b32.xlu0 %v368, 4
  %v980 = vpop.permute.xlu0 %979
  %981 = vrot.lane.b32.xlu0 %v369, 4
  %v982 = vpop.permute.xlu0 %981
  %983 = vrot.lane.b32.xlu0 %v370, 4
  %v984 = vpop.permute.xlu0 %983
  %985 = vrot.lane.b32.xlu0 %v371, 4
  %v986 = vpop.permute.xlu0 %985
  %987 = vrot.lane.b32.xlu0 %v372, 4
  %v988 = vpop.permute.xlu0 %987
  %989 = vrot.lane.b32.xlu0 %v373, 4
  %v990 = vpop.permute.xlu0 %989
  %991 = vrot.lane.b32.xlu0 %v374, 4
  %v992 = vpop.permute.xlu0 %991
  %993 = vrot.lane.b32.xlu0 %v375, 4
  %v994 = vpop.permute.xlu0 %993
  %995 = vrot.lane.b32.xlu0 %v376, 4
  %v996 = vpop.permute.xlu0 %995
  %997 = vrot.lane.b32.xlu0 %v377, 4
  %v998 = vpop.permute.xlu0 %997
  %999 = vrot.lane.b32.xlu0 %v378, 4
  %v1000 = vpop.permute.xlu0 %999
  %1001 = vrot.lane.b32.xlu0 %v379, 4
  %v1002 = vpop.permute.xlu0 %1001
  %1003 = vrot.lane.b32.xlu0 %v380, 4
  %v1004 = vpop.permute.xlu0 %1003
  %1005 = vrot.lane.b32.xlu0 %v381, 4
  %v1006 = vpop.permute.xlu0 %1005
  %1007 = vrot.lane.b32.xlu0 %v382, 4
  %v1008 = vpop.permute.xlu0 %1007
  %1009 = vrot.lane.b32.xlu0 %v383, 4
  %v1010 = vpop.permute.xlu0 %1009
  %1011 = vrot.lane.b32.xlu0 %v384, 4
  %v1012 = vpop.permute.xlu0 %1011
  %1013 = vrot.lane.b32.xlu0 %v385, 4
  %v1014 = vpop.permute.xlu0 %1013
  %1015 = vrot.lane.b32.xlu0 %v386, 4
  %v1016 = vpop.permute.xlu0 %1015
  %1017 = vrot.lane.b32.xlu0 %v387, 4
  %v1018 = vpop.permute.xlu0 %1017
  %1019 = vrot.lane.b32.xlu0 %v388, 4
  %v1020 = vpop.permute.xlu0 %1019
  %1021 = vrot.lane.b32.xlu0 %v389, 4
  %v1022 = vpop.permute.xlu0 %1021
  %1023 = vrot.lane.b32.xlu0 %v390, 4
  %v1024 = vpop.permute.xlu0 %1023
  %1025 = vrot.lane.b32.xlu0 %v391, 4
  %v1026 = vpop.permute.xlu0 %1025
  %1027 = vrot.lane.b32.xlu0 %v392, 4
  %v1028 = vpop.permute.xlu0 %1027
  %1029 = vrot.lane.b32.xlu0 %v393, 4
  %v1030 = vpop.permute.xlu0 %1029
  %1031 = vrot.lane.b32.xlu0 %v394, 4
  %v1032 = vpop.permute.xlu0 %1031
  %1033 = vrot.lane.b32.xlu0 %v395, 4
  %v1034 = vpop.permute.xlu0 %1033
  %1035 = vrot.lane.b32.xlu0 %v396, 4
  %v1036 = vpop.permute.xlu0 %1035
  %1037 = vrot.lane.b32.xlu0 %v397, 4
  %v1038 = vpop.permute.xlu0 %1037
  %1167 = vrot.lane.b32.xlu0 %v398, 8
  %v1168 = vpop.permute.xlu0 %1167
  %1169 = vrot.lane.b32.xlu0 %v399, 8
  %v1170 = vpop.permute.xlu0 %1169
  %1171 = vrot.lane.b32.xlu0 %v400, 8
  %v1172 = vpop.permute.xlu0 %1171
  %1173 = vrot.lane.b32.xlu0 %v401, 8
  %v1174 = vpop.permute.xlu0 %1173
  %1175 = vrot.lane.b32.xlu0 %v402, 8
  %v1176 = vpop.permute.xlu0 %1175
  %1177 = vrot.lane.b32.xlu0 %v403, 8
  %v1178 = vpop.permute.xlu0 %1177
  %1179 = vrot.lane.b32.xlu0 %v404, 8
  %v1180 = vpop.permute.xlu0 %1179
  %1181 = vrot.lane.b32.xlu0 %v405, 8
  %v1182 = vpop.permute.xlu0 %1181
  %1183 = vrot.lane.b32.xlu0 %v406, 8
  %v1184 = vpop.permute.xlu0 %1183
  %1185 = vrot.lane.b32.xlu0 %v407, 8
  %v1186 = vpop.permute.xlu0 %1185
  %1187 = vrot.lane.b32.xlu0 %v408, 8
  %v1188 = vpop.permute.xlu0 %1187
  %1189 = vrot.lane.b32.xlu0 %v409, 8
  %v1190 = vpop.permute.xlu0 %1189
  %1191 = vrot.lane.b32.xlu0 %v410, 8
  %v1192 = vpop.permute.xlu0 %1191
  %1193 = vrot.lane.b32.xlu0 %v411, 8
  %v1194 = vpop.permute.xlu0 %1193
  %1195 = vrot.lane.b32.xlu0 %v412, 8
  %v1196 = vpop.permute.xlu0 %1195
  %1197 = vrot.lane.b32.xlu0 %v413, 8
  %v1198 = vpop.permute.xlu0 %1197
  %1199 = vrot.lane.b32.xlu0 %v414, 8
  %v1200 = vpop.permute.xlu0 %1199
  %1201 = vrot.lane.b32.xlu0 %v415, 8
  %v1202 = vpop.permute.xlu0 %1201
  %1203 = vrot.lane.b32.xlu0 %v416, 8
  %v1204 = vpop.permute.xlu0 %1203
  %1205 = vrot.lane.b32.xlu0 %v417, 8
  %v1206 = vpop.permute.xlu0 %1205
  %1207 = vrot.lane.b32.xlu0 %v418, 8
  %v1208 = vpop.permute.xlu0 %1207
  %1209 = vrot.lane.b32.xlu0 %v419, 8
  %v1210 = vpop.permute.xlu0 %1209
  %1211 = vrot.lane.b32.xlu0 %v420, 8
  %v1212 = vpop.permute.xlu0 %1211
  %1213 = vrot.lane.b32.xlu0 %v421, 8
  %v1214 = vpop.permute.xlu0 %1213
  %1215 = vrot.lane.b32.xlu0 %v422, 8
  %v1216 = vpop.permute.xlu0 %1215
  %1217 = vrot.lane.b32.xlu0 %v423, 8
  %v1218 = vpop.permute.xlu0 %1217
  %1219 = vrot.lane.b32.xlu0 %v424, 8
  %v1220 = vpop.permute.xlu0 %1219
  %1221 = vrot.lane.b32.xlu0 %v425, 8
  %v1222 = vpop.permute.xlu0 %1221
  %1223 = vrot.lane.b32.xlu0 %v426, 8
  %v1224 = vpop.permute.xlu0 %1223
  %1225 = vrot.lane.b32.xlu0 %v427, 8
  %v1226 = vpop.permute.xlu0 %1225
  %1227 = vrot.lane.b32.xlu0 %v428, 8
  %v1228 = vpop.permute.xlu0 %1227
  %1229 = vrot.lane.b32.xlu0 %v429, 8
  %v1230 = vpop.permute.xlu0 %1229
  %1231 = vrot.lane.b32.xlu0 %v430, 8
  %v1232 = vpop.permute.xlu0 %1231
  %1233 = vrot.lane.b32.xlu0 %v431, 8
  %v1234 = vpop.permute.xlu0 %1233
  %1235 = vrot.lane.b32.xlu0 %v432, 8
  %v1236 = vpop.permute.xlu0 %1235
  %1237 = vrot.lane.b32.xlu0 %v433, 8
  %v1238 = vpop.permute.xlu0 %1237
  %1239 = vrot.lane.b32.xlu0 %v434, 8
  %v1240 = vpop.permute.xlu0 %1239
  %1241 = vrot.lane.b32.xlu0 %v435, 8
  %v1242 = vpop.permute.xlu0 %1241
  %1243 = vrot.lane.b32.xlu0 %v436, 8
  %v1244 = vpop.permute.xlu0 %1243
  %1245 = vrot.lane.b32.xlu0 %v437, 8
  %v1246 = vpop.permute.xlu0 %1245
  %1247 = vrot.lane.b32.xlu0 %v438, 8
  %v1248 = vpop.permute.xlu0 %1247
  %1249 = vrot.lane.b32.xlu0 %v439, 8
  %v1250 = vpop.permute.xlu0 %1249
  %1251 = vrot.lane.b32.xlu0 %v440, 8
  %v1252 = vpop.permute.xlu0 %1251
  %1253 = vrot.lane.b32.xlu0 %v441, 8
  %v1254 = vpop.permute.xlu0 %1253
  %1255 = vrot.lane.b32.xlu0 %v442, 8
  %v1256 = vpop.permute.xlu0 %1255
  %1257 = vrot.lane.b32.xlu0 %v443, 8
  %v1258 = vpop.permute.xlu0 %1257
  %1259 = vrot.lane.b32.xlu0 %v444, 8
  %v1260 = vpop.permute.xlu0 %1259
  %1261 = vrot.lane.b32.xlu0 %v445, 8
  %v1262 = vpop.permute.xlu0 %1261
  %1263 = vrot.lane.b32.xlu0 %v446, 8
  %v1264 = vpop.permute.xlu0 %1263
  %1265 = vrot.lane.b32.xlu0 %v447, 8
  %v1266 = vpop.permute.xlu0 %1265
  %1267 = vrot.lane.b32.xlu0 %v448, 8
  %v1268 = vpop.permute.xlu0 %1267
  %1269 = vrot.lane.b32.xlu0 %v449, 8
  %v1270 = vpop.permute.xlu0 %1269
  %1271 = vrot.lane.b32.xlu0 %v450, 8
  %v1272 = vpop.permute.xlu0 %1271
  %1273 = vrot.lane.b32.xlu0 %v451, 8
  %v1274 = vpop.permute.xlu0 %1273
  %1275 = vrot.lane.b32.xlu0 %v452, 8
  %v1276 = vpop.permute.xlu0 %1275
  %1277 = vrot.lane.b32.xlu0 %v453, 8
  %v1278 = vpop.permute.xlu0 %1277
  %1279 = vrot.lane.b32.xlu0 %v454, 8
  %v1280 = vpop.permute.xlu0 %1279
  %1281 = vrot.lane.b32.xlu0 %v455, 8
  %v1282 = vpop.permute.xlu0 %1281
  %1283 = vrot.lane.b32.xlu0 %v456, 8
  %v1284 = vpop.permute.xlu0 %1283
  %1285 = vrot.lane.b32.xlu0 %v457, 8
  %v1286 = vpop.permute.xlu0 %1285
  %1287 = vrot.lane.b32.xlu0 %v458, 8
  %v1288 = vpop.permute.xlu0 %1287
  %1289 = vrot.lane.b32.xlu0 %v459, 8
  %v1290 = vpop.permute.xlu0 %1289
  %1291 = vrot.lane.b32.xlu0 %v460, 8
  %v1292 = vpop.permute.xlu0 %1291
  %1293 = vrot.lane.b32.xlu0 %v461, 8
  %v1294 = vpop.permute.xlu0 %1293
  %1423 = vrot.lane.b32.xlu0 %v462, 12
  %v1424 = vpop.permute.xlu0 %1423
  %1425 = vrot.lane.b32.xlu0 %v463, 12
  %v1426 = vpop.permute.xlu0 %1425
  %1427 = vrot.lane.b32.xlu0 %v464, 12
  %v1428 = vpop.permute.xlu0 %1427
  %1429 = vrot.lane.b32.xlu0 %v465, 12
  %v1430 = vpop.permute.xlu0 %1429
  %1431 = vrot.lane.b32.xlu0 %v466, 12
  %v1432 = vpop.permute.xlu0 %1431
  %1433 = vrot.lane.b32.xlu0 %v467, 12
  %v1434 = vpop.permute.xlu0 %1433
  %1435 = vrot.lane.b32.xlu0 %v468, 12
  %v1436 = vpop.permute.xlu0 %1435
  %1437 = vrot.lane.b32.xlu0 %v469, 12
  %v1438 = vpop.permute.xlu0 %1437
  %1439 = vrot.lane.b32.xlu0 %v470, 12
  %v1440 = vpop.permute.xlu0 %1439
  %1441 = vrot.lane.b32.xlu0 %v471, 12
  %v1442 = vpop.permute.xlu0 %1441
  %1443 = vrot.lane.b32.xlu0 %v472, 12
  %v1444 = vpop.permute.xlu0 %1443
  %1445 = vrot.lane.b32.xlu0 %v473, 12
  %v1446 = vpop.permute.xlu0 %1445
  %1447 = vrot.lane.b32.xlu0 %v474, 12
  %v1448 = vpop.permute.xlu0 %1447
  %1449 = vrot.lane.b32.xlu0 %v475, 12
  %v1450 = vpop.permute.xlu0 %1449
  %1451 = vrot.lane.b32.xlu0 %v476, 12
  %v1452 = vpop.permute.xlu0 %1451
  %1453 = vrot.lane.b32.xlu0 %v477, 12
  %v1454 = vpop.permute.xlu0 %1453
  %1455 = vrot.lane.b32.xlu0 %v478, 12
  %v1456 = vpop.permute.xlu0 %1455
  %1457 = vrot.lane.b32.xlu0 %v479, 12
  %v1458 = vpop.permute.xlu0 %1457
  %1459 = vrot.lane.b32.xlu0 %v480, 12
  %v1460 = vpop.permute.xlu0 %1459
  %1461 = vrot.lane.b32.xlu0 %v481, 12
  %v1462 = vpop.permute.xlu0 %1461
  %1463 = vrot.lane.b32.xlu0 %v482, 12
  %v1464 = vpop.permute.xlu0 %1463
  %1465 = vrot.lane.b32.xlu0 %v483, 12
  %v1466 = vpop.permute.xlu0 %1465
  %1467 = vrot.lane.b32.xlu0 %v484, 12
  %v1468 = vpop.permute.xlu0 %1467
  %1469 = vrot.lane.b32.xlu0 %v485, 12
  %v1470 = vpop.permute.xlu0 %1469
  %1471 = vrot.lane.b32.xlu0 %v486, 12
  %v1472 = vpop.permute.xlu0 %1471
  %1473 = vrot.lane.b32.xlu0 %v487, 12
  %v1474 = vpop.permute.xlu0 %1473
  %1475 = vrot.lane.b32.xlu0 %v488, 12
  %v1476 = vpop.permute.xlu0 %1475
  %1477 = vrot.lane.b32.xlu0 %v489, 12
  %v1478 = vpop.permute.xlu0 %1477
  %1479 = vrot.lane.b32.xlu0 %v490, 12
  %v1480 = vpop.permute.xlu0 %1479
  %1481 = vrot.lane.b32.xlu0 %v491, 12
  %v1482 = vpop.permute.xlu0 %1481
  %1483 = vrot.lane.b32.xlu0 %v492, 12
  %v1484 = vpop.permute.xlu0 %1483
  %1485 = vrot.lane.b32.xlu0 %v493, 12
  %v1486 = vpop.permute.xlu0 %1485
  %1487 = vrot.lane.b32.xlu0 %v494, 12
  %v1488 = vpop.permute.xlu0 %1487
  %1489 = vrot.lane.b32.xlu0 %v495, 12
  %v1490 = vpop.permute.xlu0 %1489
  %1491 = vrot.lane.b32.xlu0 %v496, 12
  %v1492 = vpop.permute.xlu0 %1491
  %1493 = vrot.lane.b32.xlu0 %v497, 12
  %v1494 = vpop.permute.xlu0 %1493
  %1495 = vrot.lane.b32.xlu0 %v498, 12
  %v1496 = vpop.permute.xlu0 %1495
  %1497 = vrot.lane.b32.xlu0 %v499, 12
  %v1498 = vpop.permute.xlu0 %1497
  %1499 = vrot.lane.b32.xlu0 %v500, 12
  %v1500 = vpop.permute.xlu0 %1499
  %1501 = vrot.lane.b32.xlu0 %v501, 12
  %v1502 = vpop.permute.xlu0 %1501
  %1503 = vrot.lane.b32.xlu0 %v502, 12
  %v1504 = vpop.permute.xlu0 %1503
  %1505 = vrot.lane.b32.xlu0 %v503, 12
  %v1506 = vpop.permute.xlu0 %1505
  %1507 = vrot.lane.b32.xlu0 %v504, 12
  %v1508 = vpop.permute.xlu0 %1507
  %1509 = vrot.lane.b32.xlu0 %v505, 12
  %v1510 = vpop.permute.xlu0 %1509
  %1511 = vrot.lane.b32.xlu0 %v506, 12
  %v1512 = vpop.permute.xlu0 %1511
  %1513 = vrot.lane.b32.xlu0 %v507, 12
  %v1514 = vpop.permute.xlu0 %1513
  %1515 = vrot.lane.b32.xlu0 %v508, 12
  %v1516 = vpop.permute.xlu0 %1515
  %1517 = vrot.lane.b32.xlu0 %v509, 12
  %v1518 = vpop.permute.xlu0 %1517
  %1519 = vrot.lane.b32.xlu0 %v510, 12
  %v1520 = vpop.permute.xlu0 %1519
  %1521 = vrot.lane.b32.xlu0 %v511, 12
  %v1522 = vpop.permute.xlu0 %1521
  %1523 = vrot.lane.b32.xlu0 %v512, 12
  %v1524 = vpop.permute.xlu0 %1523
  %1525 = vrot.lane.b32.xlu0 %v513, 12
  %v1526 = vpop.permute.xlu0 %1525
  %1527 = vrot.lane.b32.xlu0 %v514, 12
  %v1528 = vpop.permute.xlu0 %1527
  %1529 = vrot.lane.b32.xlu0 %v515, 12
  %v1530 = vpop.permute.xlu0 %1529
  %1531 = vrot.lane.b32.xlu0 %v516, 12
  %v1532 = vpop.permute.xlu0 %1531
  %1533 = vrot.lane.b32.xlu0 %v517, 12
  %v1534 = vpop.permute.xlu0 %1533
  %1535 = vrot.lane.b32.xlu0 %v518, 12
  %v1536 = vpop.permute.xlu0 %1535
  %1537 = vrot.lane.b32.xlu0 %v519, 12
  %v1538 = vpop.permute.xlu0 %1537
  %1539 = vrot.lane.b32.xlu0 %v520, 12
  %v1540 = vpop.permute.xlu0 %1539
  %1541 = vrot.lane.b32.xlu0 %v521, 12
  %v1542 = vpop.permute.xlu0 %1541
  %1543 = vrot.lane.b32.xlu0 %v522, 12
  %v1544 = vpop.permute.xlu0 %1543
  %1545 = vrot.lane.b32.xlu0 %v523, 12
  %v1546 = vpop.permute.xlu0 %1545
  %1547 = vrot.lane.b32.xlu0 %v524, 12
  %v1548 = vpop.permute.xlu0 %1547
  %1549 = vrot.lane.b32.xlu0 %v525, 12
  %v1550 = vpop.permute.xlu0 %1549
  %1679 = vrot.lane.b32.xlu0 %v526, 16
  %v1680 = vpop.permute.xlu0 %1679
  %1681 = vrot.lane.b32.xlu0 %v527, 16
  %v1682 = vpop.permute.xlu0 %1681
  %1683 = vrot.lane.b32.xlu0 %v528, 16
  %v1684 = vpop.permute.xlu0 %1683
  %1685 = vrot.lane.b32.xlu0 %v529, 16
  %v1686 = vpop.permute.xlu0 %1685
  %1687 = vrot.lane.b32.xlu0 %v530, 16
  %v1688 = vpop.permute.xlu0 %1687
  %1689 = vrot.lane.b32.xlu0 %v531, 16
  %v1690 = vpop.permute.xlu0 %1689
  %1691 = vrot.lane.b32.xlu0 %v532, 16
  %v1692 = vpop.permute.xlu0 %1691
  %1693 = vrot.lane.b32.xlu0 %v533, 16
  %v1694 = vpop.permute.xlu0 %1693
  %1695 = vrot.lane.b32.xlu0 %v534, 16
  %v1696 = vpop.permute.xlu0 %1695
  %1697 = vrot.lane.b32.xlu0 %v535, 16
  %v1698 = vpop.permute.xlu0 %1697
  %1699 = vrot.lane.b32.xlu0 %v536, 16
  %v1700 = vpop.permute.xlu0 %1699
  %1701 = vrot.lane.b32.xlu0 %v537, 16
  %v1702 = vpop.permute.xlu0 %1701
  %1703 = vrot.lane.b32.xlu0 %v538, 16
  %v1704 = vpop.permute.xlu0 %1703
  %1705 = vrot.lane.b32.xlu0 %v539, 16
  %v1706 = vpop.permute.xlu0 %1705
  %1707 = vrot.lane.b32.xlu0 %v540, 16
  %v1708 = vpop.permute.xlu0 %1707
  %1709 = vrot.lane.b32.xlu0 %v541, 16
  %v1710 = vpop.permute.xlu0 %1709
  %1711 = vrot.lane.b32.xlu0 %v542, 16
  %v1712 = vpop.permute.xlu0 %1711
  %1713 = vrot.lane.b32.xlu0 %v543, 16
  %v1714 = vpop.permute.xlu0 %1713
  %1715 = vrot.lane.b32.xlu0 %v544, 16
  %v1716 = vpop.permute.xlu0 %1715
  %1717 = vrot.lane.b32.xlu0 %v545, 16
  %v1718 = vpop.permute.xlu0 %1717
  %1719 = vrot.lane.b32.xlu0 %v546, 16
  %v1720 = vpop.permute.xlu0 %1719
  %1721 = vrot.lane.b32.xlu0 %v547, 16
  %v1722 = vpop.permute.xlu0 %1721
  %1723 = vrot.lane.b32.xlu0 %v548, 16
  %v1724 = vpop.permute.xlu0 %1723
  %1725 = vrot.lane.b32.xlu0 %v549, 16
  %v1726 = vpop.permute.xlu0 %1725
  %1727 = vrot.lane.b32.xlu0 %v550, 16
  %v1728 = vpop.permute.xlu0 %1727
  %1729 = vrot.lane.b32.xlu0 %v551, 16
  %v1730 = vpop.permute.xlu0 %1729
  %1731 = vrot.lane.b32.xlu0 %v552, 16
  %v1732 = vpop.permute.xlu0 %1731
  %1733 = vrot.lane.b32.xlu0 %v553, 16
  %v1734 = vpop.permute.xlu0 %1733
  %1735 = vrot.lane.b32.xlu0 %v554, 16
  %v1736 = vpop.permute.xlu0 %1735
  %1737 = vrot.lane.b32.xlu0 %v555, 16
  %v1738 = vpop.permute.xlu0 %1737
  %1739 = vrot.lane.b32.xlu0 %v556, 16
  %v1740 = vpop.permute.xlu0 %1739
  %1741 = vrot.lane.b32.xlu0 %v557, 16
  %v1742 = vpop.permute.xlu0 %1741
  %1743 = vrot.lane.b32.xlu0 %v558, 16
  %v1744 = vpop.permute.xlu0 %1743
  %1745 = vrot.lane.b32.xlu0 %v559, 16
  %v1746 = vpop.permute.xlu0 %1745
  %1747 = vrot.lane.b32.xlu0 %v560, 16
  %v1748 = vpop.permute.xlu0 %1747
  %1749 = vrot.lane.b32.xlu0 %v561, 16
  %v1750 = vpop.permute.xlu0 %1749
  %1751 = vrot.lane.b32.xlu0 %v562, 16
  %v1752 = vpop.permute.xlu0 %1751
  %1753 = vrot.lane.b32.xlu0 %v563, 16
  %v1754 = vpop.permute.xlu0 %1753
  %1755 = vrot.lane.b32.xlu0 %v564, 16
  %v1756 = vpop.permute.xlu0 %1755
  %1757 = vrot.lane.b32.xlu0 %v565, 16
  %v1758 = vpop.permute.xlu0 %1757
  %1759 = vrot.lane.b32.xlu0 %v566, 16
  %v1760 = vpop.permute.xlu0 %1759
  %1761 = vrot.lane.b32.xlu0 %v567, 16
  %v1762 = vpop.permute.xlu0 %1761
  %1763 = vrot.lane.b32.xlu0 %v568, 16
  %v1764 = vpop.permute.xlu0 %1763
  %1765 = vrot.lane.b32.xlu0 %v569, 16
  %v1766 = vpop.permute.xlu0 %1765
  %1767 = vrot.lane.b32.xlu0 %v570, 16
  %v1768 = vpop.permute.xlu0 %1767
  %1769 = vrot.lane.b32.xlu0 %v571, 16
  %v1770 = vpop.permute.xlu0 %1769
  %1771 = vrot.lane.b32.xlu0 %v572, 16
  %v1772 = vpop.permute.xlu0 %1771
  %1773 = vrot.lane.b32.xlu0 %v573, 16
  %v1774 = vpop.permute.xlu0 %1773
  %1775 = vrot.lane.b32.xlu0 %v574, 16
  %v1776 = vpop.permute.xlu0 %1775
  %1777 = vrot.lane.b32.xlu0 %v575, 16
  %v1778 = vpop.permute.xlu0 %1777
  %1779 = vrot.lane.b32.xlu0 %v576, 16
  %v1780 = vpop.permute.xlu0 %1779
  %1781 = vrot.lane.b32.xlu0 %v577, 16
  %v1782 = vpop.permute.xlu0 %1781
  %1783 = vrot.lane.b32.xlu0 %v578, 16
  %v1784 = vpop.permute.xlu0 %1783
  %1785 = vrot.lane.b32.xlu0 %v579, 16
  %v1786 = vpop.permute.xlu0 %1785
  %1787 = vrot.lane.b32.xlu0 %v580, 16
  %v1788 = vpop.permute.xlu0 %1787
  %1789 = vrot.lane.b32.xlu0 %v581, 16
  %v1790 = vpop.permute.xlu0 %1789
  %1791 = vrot.lane.b32.xlu0 %v582, 16
  %v1792 = vpop.permute.xlu0 %1791
  %1793 = vrot.lane.b32.xlu0 %v583, 16
  %v1794 = vpop.permute.xlu0 %1793
  %1795 = vrot.lane.b32.xlu0 %v584, 16
  %v1796 = vpop.permute.xlu0 %1795
  %1797 = vrot.lane.b32.xlu0 %v585, 16
  %v1798 = vpop.permute.xlu0 %1797
  %1799 = vrot.lane.b32.xlu0 %v586, 16
  %v1800 = vpop.permute.xlu0 %1799
  %1801 = vrot.lane.b32.xlu0 %v587, 16
  %v1802 = vpop.permute.xlu0 %1801
  %1803 = vrot.lane.b32.xlu0 %v588, 16
  %v1804 = vpop.permute.xlu0 %1803
  %1805 = vrot.lane.b32.xlu0 %v589, 16
  %v1806 = vpop.permute.xlu0 %1805
  %1935 = vrot.lane.b32.xlu0 %v590, 20
  %v1936 = vpop.permute.xlu0 %1935
  %1937 = vrot.lane.b32.xlu0 %v591, 20
  %v1938 = vpop.permute.xlu0 %1937
  %1939 = vrot.lane.b32.xlu0 %v592, 20
  %v1940 = vpop.permute.xlu0 %1939
  %1941 = vrot.lane.b32.xlu0 %v593, 20
  %v1942 = vpop.permute.xlu0 %1941
  %1943 = vrot.lane.b32.xlu0 %v594, 20
  %v1944 = vpop.permute.xlu0 %1943
  %1945 = vrot.lane.b32.xlu0 %v595, 20
  %v1946 = vpop.permute.xlu0 %1945
  %1947 = vrot.lane.b32.xlu0 %v596, 20
  %v1948 = vpop.permute.xlu0 %1947
  %1949 = vrot.lane.b32.xlu0 %v597, 20
  %v1950 = vpop.permute.xlu0 %1949
  %1951 = vrot.lane.b32.xlu0 %v598, 20
  %v1952 = vpop.permute.xlu0 %1951
  %1953 = vrot.lane.b32.xlu0 %v599, 20
  %v1954 = vpop.permute.xlu0 %1953
  %1955 = vrot.lane.b32.xlu0 %v600, 20
  %v1956 = vpop.permute.xlu0 %1955
  %1957 = vrot.lane.b32.xlu0 %v601, 20
  %v1958 = vpop.permute.xlu0 %1957
  %1959 = vrot.lane.b32.xlu0 %v602, 20
  %v1960 = vpop.permute.xlu0 %1959
  %1961 = vrot.lane.b32.xlu0 %v603, 20
  %v1962 = vpop.permute.xlu0 %1961
  %1963 = vrot.lane.b32.xlu0 %v604, 20
  %v1964 = vpop.permute.xlu0 %1963
  %1965 = vrot.lane.b32.xlu0 %v605, 20
  %v1966 = vpop.permute.xlu0 %1965
  %1967 = vrot.lane.b32.xlu0 %v606, 20
  %v1968 = vpop.permute.xlu0 %1967
  %1969 = vrot.lane.b32.xlu0 %v607, 20
  %v1970 = vpop.permute.xlu0 %1969
  %1971 = vrot.lane.b32.xlu0 %v608, 20
  %v1972 = vpop.permute.xlu0 %1971
  %1973 = vrot.lane.b32.xlu0 %v609, 20
  %v1974 = vpop.permute.xlu0 %1973
  %1975 = vrot.lane.b32.xlu0 %v610, 20
  %v1976 = vpop.permute.xlu0 %1975
  %1977 = vrot.lane.b32.xlu0 %v611, 20
  %v1978 = vpop.permute.xlu0 %1977
  %1979 = vrot.lane.b32.xlu0 %v612, 20
  %v1980 = vpop.permute.xlu0 %1979
  %1981 = vrot.lane.b32.xlu0 %v613, 20
  %v1982 = vpop.permute.xlu0 %1981
  %1983 = vrot.lane.b32.xlu0 %v614, 20
  %v1984 = vpop.permute.xlu0 %1983
  %1985 = vrot.lane.b32.xlu0 %v615, 20
  %v1986 = vpop.permute.xlu0 %1985
  %1987 = vrot.lane.b32.xlu0 %v616, 20
  %v1988 = vpop.permute.xlu0 %1987
  %1989 = vrot.lane.b32.xlu0 %v617, 20
  %v1990 = vpop.permute.xlu0 %1989
  %1991 = vrot.lane.b32.xlu0 %v618, 20
  %v1992 = vpop.permute.xlu0 %1991
  %1993 = vrot.lane.b32.xlu0 %v619, 20
  %v1994 = vpop.permute.xlu0 %1993
  %1995 = vrot.lane.b32.xlu0 %v620, 20
  %v1996 = vpop.permute.xlu0 %1995
  %1997 = vrot.lane.b32.xlu0 %v621, 20
  %v1998 = vpop.permute.xlu0 %1997
  %1999 = vrot.lane.b32.xlu0 %v622, 20
  %v2000 = vpop.permute.xlu0 %1999
  %2001 = vrot.lane.b32.xlu0 %v623, 20
  %v2002 = vpop.permute.xlu0 %2001
  %2003 = vrot.lane.b32.xlu0 %v624, 20
  %v2004 = vpop.permute.xlu0 %2003
  %2005 = vrot.lane.b32.xlu0 %v625, 20
  %v2006 = vpop.permute.xlu0 %2005
  %2007 = vrot.lane.b32.xlu0 %v626, 20
  %v2008 = vpop.permute.xlu0 %2007
  %2009 = vrot.lane.b32.xlu0 %v627, 20
  %v2010 = vpop.permute.xlu0 %2009
  %2011 = vrot.lane.b32.xlu0 %v628, 20
  %v2012 = vpop.permute.xlu0 %2011
  %2013 = vrot.lane.b32.xlu0 %v629, 20
  %v2014 = vpop.permute.xlu0 %2013
  %2015 = vrot.lane.b32.xlu0 %v630, 20
  %v2016 = vpop.permute.xlu0 %2015
  %2017 = vrot.lane.b32.xlu0 %v631, 20
  %v2018 = vpop.permute.xlu0 %2017
  %2019 = vrot.lane.b32.xlu0 %v632, 20
  %v2020 = vpop.permute.xlu0 %2019
  %2021 = vrot.lane.b32.xlu0 %v633, 20
  %v2022 = vpop.permute.xlu0 %2021
  %2023 = vrot.lane.b32.xlu0 %v634, 20
  %v2024 = vpop.permute.xlu0 %2023
  %2025 = vrot.lane.b32.xlu0 %v635, 20
  %v2026 = vpop.permute.xlu0 %2025
  %2027 = vrot.lane.b32.xlu0 %v636, 20
  %v2028 = vpop.permute.xlu0 %2027
  %2029 = vrot.lane.b32.xlu0 %v637, 20
  %v2030 = vpop.permute.xlu0 %2029
  %2031 = vrot.lane.b32.xlu0 %v638, 20
  %v2032 = vpop.permute.xlu0 %2031
  %2033 = vrot.lane.b32.xlu0 %v639, 20
  %v2034 = vpop.permute.xlu0 %2033
  %2035 = vrot.lane.b32.xlu0 %v640, 20
  %v2036 = vpop.permute.xlu0 %2035
  %2037 = vrot.lane.b32.xlu0 %v641, 20
  %v2038 = vpop.permute.xlu0 %2037
  %2039 = vrot.lane.b32.xlu0 %v642, 20
  %v2040 = vpop.permute.xlu0 %2039
  %2041 = vrot.lane.b32.xlu0 %v643, 20
  %v2042 = vpop.permute.xlu0 %2041
  %2043 = vrot.lane.b32.xlu0 %v644, 20
  %v2044 = vpop.permute.xlu0 %2043
  %2045 = vrot.lane.b32.xlu0 %v645, 20
  %v2046 = vpop.permute.xlu0 %2045
  %2047 = vrot.lane.b32.xlu0 %v646, 20
  %v2048 = vpop.permute.xlu0 %2047
  %2049 = vrot.lane.b32.xlu0 %v647, 20
  %v2050 = vpop.permute.xlu0 %2049
  %2051 = vrot.lane.b32.xlu0 %v648, 20
  %v2052 = vpop.permute.xlu0 %2051
  %2053 = vrot.lane.b32.xlu0 %v649, 20
  %v2054 = vpop.permute.xlu0 %2053
  %2055 = vrot.lane.b32.xlu0 %v650, 20
  %v2056 = vpop.permute.xlu0 %2055
  %2057 = vrot.lane.b32.xlu0 %v651, 20
  %v2058 = vpop.permute.xlu0 %2057
  %2059 = vrot.lane.b32.xlu0 %v652, 20
  %v2060 = vpop.permute.xlu0 %2059
  %2061 = vrot.lane.b32.xlu0 %v653, 20
  %v2062 = vpop.permute.xlu0 %2061
  %2191 = vrot.lane.b32.xlu0 %v655, 24
  %v2192 = vpop.permute.xlu0 %2191
  %2193 = vrot.lane.b32.xlu0 %v656, 24
  %v2194 = vpop.permute.xlu0 %2193
  %2195 = vrot.lane.b32.xlu0 %v657, 24
  %v2196 = vpop.permute.xlu0 %2195
  %2197 = vrot.lane.b32.xlu0 %v658, 24
  %v2198 = vpop.permute.xlu0 %2197
  %2199 = vrot.lane.b32.xlu0 %v659, 24
  %v2200 = vpop.permute.xlu0 %2199
  %2201 = vrot.lane.b32.xlu0 %v660, 24
  %v2202 = vpop.permute.xlu0 %2201
  %2203 = vrot.lane.b32.xlu0 %v661, 24
  %v2204 = vpop.permute.xlu0 %2203
  %2205 = vrot.lane.b32.xlu0 %v662, 24
  %v2206 = vpop.permute.xlu0 %2205
  %2207 = vrot.lane.b32.xlu0 %v663, 24
  %v2208 = vpop.permute.xlu0 %2207
  %2209 = vrot.lane.b32.xlu0 %v664, 24
  %v2210 = vpop.permute.xlu0 %2209
  %2211 = vrot.lane.b32.xlu0 %v665, 24
  %v2212 = vpop.permute.xlu0 %2211
  %2213 = vrot.lane.b32.xlu0 %v666, 24
  %v2214 = vpop.permute.xlu0 %2213
  %2215 = vrot.lane.b32.xlu0 %v667, 24
  %v2216 = vpop.permute.xlu0 %2215
  %2217 = vrot.lane.b32.xlu0 %v668, 24
  %v2218 = vpop.permute.xlu0 %2217
  %2219 = vrot.lane.b32.xlu0 %v669, 24
  %v2220 = vpop.permute.xlu0 %2219
  %2221 = vrot.lane.b32.xlu0 %v670, 24
  %v2222 = vpop.permute.xlu0 %2221
  %2223 = vrot.lane.b32.xlu0 %v671, 24
  %v2224 = vpop.permute.xlu0 %2223
  %2225 = vrot.lane.b32.xlu0 %v672, 24
  %v2226 = vpop.permute.xlu0 %2225
  %2227 = vrot.lane.b32.xlu0 %v673, 24
  %v2228 = vpop.permute.xlu0 %2227
  %2229 = vrot.lane.b32.xlu0 %v674, 24
  %v2230 = vpop.permute.xlu0 %2229
  %2231 = vrot.lane.b32.xlu0 %v675, 24
  %v2232 = vpop.permute.xlu0 %2231
  %2233 = vrot.lane.b32.xlu0 %v676, 24
  %v2234 = vpop.permute.xlu0 %2233
  %2235 = vrot.lane.b32.xlu0 %v677, 24
  %v2236 = vpop.permute.xlu0 %2235
  %2237 = vrot.lane.b32.xlu0 %v678, 24
  %v2238 = vpop.permute.xlu0 %2237
  %2239 = vrot.lane.b32.xlu0 %v679, 24
  %v2240 = vpop.permute.xlu0 %2239
  %2241 = vrot.lane.b32.xlu0 %v680, 24
  %v2242 = vpop.permute.xlu0 %2241
  %2243 = vrot.lane.b32.xlu0 %v681, 24
  %v2244 = vpop.permute.xlu0 %2243
  %2245 = vrot.lane.b32.xlu0 %v682, 24
  %v2246 = vpop.permute.xlu0 %2245
  %2247 = vrot.lane.b32.xlu0 %v683, 24
  %v2248 = vpop.permute.xlu0 %2247
  %2249 = vrot.lane.b32.xlu0 %v684, 24
  %v2250 = vpop.permute.xlu0 %2249
  %2251 = vrot.lane.b32.xlu0 %v685, 24
  %v2252 = vpop.permute.xlu0 %2251
  %2253 = vrot.lane.b32.xlu0 %v686, 24
  %v2254 = vpop.permute.xlu0 %2253
  %2255 = vrot.lane.b32.xlu0 %v687, 24
  %v2256 = vpop.permute.xlu0 %2255
  %2257 = vrot.lane.b32.xlu0 %v688, 24
  %v2258 = vpop.permute.xlu0 %2257
  %2259 = vrot.lane.b32.xlu0 %v689, 24
  %v2260 = vpop.permute.xlu0 %2259
  %2261 = vrot.lane.b32.xlu0 %v690, 24
  %v2262 = vpop.permute.xlu0 %2261
  %2263 = vrot.lane.b32.xlu0 %v691, 24
  %v2264 = vpop.permute.xlu0 %2263
  %2265 = vrot.lane.b32.xlu0 %v692, 24
  %v2266 = vpop.permute.xlu0 %2265
  %2267 = vrot.lane.b32.xlu0 %v693, 24
  %v2268 = vpop.permute.xlu0 %2267
  %2269 = vrot.lane.b32.xlu0 %v694, 24
  %v2270 = vpop.permute.xlu0 %2269
  %2271 = vrot.lane.b32.xlu0 %v695, 24
  %v2272 = vpop.permute.xlu0 %2271
  %2273 = vrot.lane.b32.xlu0 %v696, 24
  %v2274 = vpop.permute.xlu0 %2273
  %2275 = vrot.lane.b32.xlu0 %v697, 24
  %v2276 = vpop.permute.xlu0 %2275
  %2277 = vrot.lane.b32.xlu0 %v698, 24
  %v2278 = vpop.permute.xlu0 %2277
  %2279 = vrot.lane.b32.xlu0 %v699, 24
  %v2280 = vpop.permute.xlu0 %2279
  %2281 = vrot.lane.b32.xlu0 %v700, 24
  %v2282 = vpop.permute.xlu0 %2281
  %2283 = vrot.lane.b32.xlu0 %v701, 24
  %v2284 = vpop.permute.xlu0 %2283
  %2285 = vrot.lane.b32.xlu0 %v702, 24
  %v2286 = vpop.permute.xlu0 %2285
  %2287 = vrot.lane.b32.xlu0 %v703, 24
  %v2288 = vpop.permute.xlu0 %2287
  %2289 = vrot.lane.b32.xlu0 %v704, 24
  %v2290 = vpop.permute.xlu0 %2289
  %2291 = vrot.lane.b32.xlu0 %v705, 24
  %v2292 = vpop.permute.xlu0 %2291
  %2293 = vrot.lane.b32.xlu0 %v706, 24
  %v2294 = vpop.permute.xlu0 %2293
  %2295 = vrot.lane.b32.xlu0 %v707, 24
  %v2296 = vpop.permute.xlu0 %2295
  %2297 = vrot.lane.b32.xlu0 %v708, 24
  %v2298 = vpop.permute.xlu0 %2297
  %2299 = vrot.lane.b32.xlu0 %v709, 24
  %v2300 = vpop.permute.xlu0 %2299
  %2301 = vrot.lane.b32.xlu0 %v710, 24
  %v2302 = vpop.permute.xlu0 %2301
  %2303 = vrot.lane.b32.xlu0 %v711, 24
  %v2304 = vpop.permute.xlu0 %2303
  %2305 = vrot.lane.b32.xlu0 %v712, 24
  %v2306 = vpop.permute.xlu0 %2305
  %2307 = vrot.lane.b32.xlu0 %v713, 24
  %v2308 = vpop.permute.xlu0 %2307
  %2309 = vrot.lane.b32.xlu0 %v714, 24
  %v2310 = vpop.permute.xlu0 %2309
  %2311 = vrot.lane.b32.xlu0 %v715, 24
  %v2312 = vpop.permute.xlu0 %2311
  %2313 = vrot.lane.b32.xlu0 %v716, 24
  %v2314 = vpop.permute.xlu0 %2313
  %2315 = vrot.lane.b32.xlu0 %v717, 24
  %v2316 = vpop.permute.xlu0 %2315
  %2317 = vrot.lane.b32.xlu0 %v718, 24
  %v2318 = vpop.permute.xlu0 %2317
  %2447 = vrot.lane.b32.xlu0 %v719, 28
  %v2448 = vpop.permute.xlu0 %2447
  %2449 = vrot.lane.b32.xlu0 %v720, 28
  %v2450 = vpop.permute.xlu0 %2449
  %2451 = vrot.lane.b32.xlu0 %v721, 28
  %v2452 = vpop.permute.xlu0 %2451
  %2453 = vrot.lane.b32.xlu0 %v722, 28
  %v2454 = vpop.permute.xlu0 %2453
  %2455 = vrot.lane.b32.xlu0 %v723, 28
  %v2456 = vpop.permute.xlu0 %2455
  %2457 = vrot.lane.b32.xlu0 %v724, 28
  %v2458 = vpop.permute.xlu0 %2457
  %2459 = vrot.lane.b32.xlu0 %v725, 28
  %v2460 = vpop.permute.xlu0 %2459
  %2461 = vrot.lane.b32.xlu0 %v726, 28
  %v2462 = vpop.permute.xlu0 %2461
  %2463 = vrot.lane.b32.xlu0 %v727, 28
  %v2464 = vpop.permute.xlu0 %2463
  %2465 = vrot.lane.b32.xlu0 %v728, 28
  %v2466 = vpop.permute.xlu0 %2465
  %2467 = vrot.lane.b32.xlu0 %v729, 28
  %v2468 = vpop.permute.xlu0 %2467
  %2469 = vrot.lane.b32.xlu0 %v730, 28
  %v2470 = vpop.permute.xlu0 %2469
  %2471 = vrot.lane.b32.xlu0 %v731, 28
  %v2472 = vpop.permute.xlu0 %2471
  %2473 = vrot.lane.b32.xlu0 %v732, 28
  %v2474 = vpop.permute.xlu0 %2473
  %2475 = vrot.lane.b32.xlu0 %v733, 28
  %v2476 = vpop.permute.xlu0 %2475
  %2477 = vrot.lane.b32.xlu0 %v734, 28
  %v2478 = vpop.permute.xlu0 %2477
  %2479 = vrot.lane.b32.xlu0 %v735, 28
  %v2480 = vpop.permute.xlu0 %2479
  %2481 = vrot.lane.b32.xlu0 %v736, 28
  %v2482 = vpop.permute.xlu0 %2481
  %2483 = vrot.lane.b32.xlu0 %v737, 28
  %v2484 = vpop.permute.xlu0 %2483
  %2485 = vrot.lane.b32.xlu0 %v738, 28
  %v2486 = vpop.permute.xlu0 %2485
  %2487 = vrot.lane.b32.xlu0 %v739, 28
  %v2488 = vpop.permute.xlu0 %2487
  %2489 = vrot.lane.b32.xlu0 %v740, 28
  %v2490 = vpop.permute.xlu0 %2489
  %2491 = vrot.lane.b32.xlu0 %v741, 28
  %v2492 = vpop.permute.xlu0 %2491
  %2493 = vrot.lane.b32.xlu0 %v742, 28
  %v2494 = vpop.permute.xlu0 %2493
  %2495 = vrot.lane.b32.xlu0 %v743, 28
  %v2496 = vpop.permute.xlu0 %2495
  %2497 = vrot.lane.b32.xlu0 %v744, 28
  %v2498 = vpop.permute.xlu0 %2497
  %2499 = vrot.lane.b32.xlu0 %v745, 28
  %v2500 = vpop.permute.xlu0 %2499
  %2501 = vrot.lane.b32.xlu0 %v746, 28
  %v2502 = vpop.permute.xlu0 %2501
  %2503 = vrot.lane.b32.xlu0 %v747, 28
  %v2504 = vpop.permute.xlu0 %2503
  %2505 = vrot.lane.b32.xlu0 %v748, 28
  %v2506 = vpop.permute.xlu0 %2505
  %2507 = vrot.lane.b32.xlu0 %v749, 28
  %v2508 = vpop.permute.xlu0 %2507
  %2509 = vrot.lane.b32.xlu0 %v750, 28
  %v2510 = vpop.permute.xlu0 %2509
  %2511 = vrot.lane.b32.xlu0 %v751, 28
  %v2512 = vpop.permute.xlu0 %2511
  %2513 = vrot.lane.b32.xlu0 %v752, 28
  %v2514 = vpop.permute.xlu0 %2513
  %2515 = vrot.lane.b32.xlu0 %v753, 28
  %v2516 = vpop.permute.xlu0 %2515
  %2517 = vrot.lane.b32.xlu0 %v754, 28
  %v2518 = vpop.permute.xlu0 %2517
  %2519 = vrot.lane.b32.xlu0 %v755, 28
  %v2520 = vpop.permute.xlu0 %2519
  %2521 = vrot.lane.b32.xlu0 %v756, 28
  %v2522 = vpop.permute.xlu0 %2521
  %2523 = vrot.lane.b32.xlu0 %v757, 28
  %v2524 = vpop.permute.xlu0 %2523
  %2525 = vrot.lane.b32.xlu0 %v758, 28
  %v2526 = vpop.permute.xlu0 %2525
  %2527 = vrot.lane.b32.xlu0 %v759, 28
  %v2528 = vpop.permute.xlu0 %2527
  %2529 = vrot.lane.b32.xlu0 %v760, 28
  %v2530 = vpop.permute.xlu0 %2529
  %2531 = vrot.lane.b32.xlu0 %v761, 28
  %v2532 = vpop.permute.xlu0 %2531
  %2533 = vrot.lane.b32.xlu0 %v762, 28
  %v2534 = vpop.permute.xlu0 %2533
  %2535 = vrot.lane.b32.xlu0 %v763, 28
  %v2536 = vpop.permute.xlu0 %2535
  %2537 = vrot.lane.b32.xlu0 %v764, 28
  %v2538 = vpop.permute.xlu0 %2537
  %2539 = vrot.lane.b32.xlu0 %v765, 28
  %v2540 = vpop.permute.xlu0 %2539
  %2541 = vrot.lane.b32.xlu0 %v766, 28
  %v2542 = vpop.permute.xlu0 %2541
  %2543 = vrot.lane.b32.xlu0 %v767, 28
  %v2544 = vpop.permute.xlu0 %2543
  %2545 = vrot.lane.b32.xlu0 %v768, 28
  %v2546 = vpop.permute.xlu0 %2545
  %2547 = vrot.lane.b32.xlu0 %v769, 28
  %v2548 = vpop.permute.xlu0 %2547
  %2549 = vrot.lane.b32.xlu0 %v770, 28
  %v2550 = vpop.permute.xlu0 %2549
  %2551 = vrot.lane.b32.xlu0 %v771, 28
  %v2552 = vpop.permute.xlu0 %2551
  %2553 = vrot.lane.b32.xlu0 %v772, 28
  %v2554 = vpop.permute.xlu0 %2553
  %2555 = vrot.lane.b32.xlu0 %v773, 28
  %v2556 = vpop.permute.xlu0 %2555
  %2557 = vrot.lane.b32.xlu0 %v774, 28
  %v2558 = vpop.permute.xlu0 %2557
  %2559 = vrot.lane.b32.xlu0 %v775, 28
  %v2560 = vpop.permute.xlu0 %2559
  %2561 = vrot.lane.b32.xlu0 %v776, 28
  %v2562 = vpop.permute.xlu0 %2561
  %2563 = vrot.lane.b32.xlu0 %v777, 28
  %v2564 = vpop.permute.xlu0 %2563
  %2565 = vrot.lane.b32.xlu0 %v778, 28
  %v2566 = vpop.permute.xlu0 %2565
  %2567 = vrot.lane.b32.xlu0 %v779, 28
  %v2568 = vpop.permute.xlu0 %2567
  %2569 = vrot.lane.b32.xlu0 %v780, 28
  %v2570 = vpop.permute.xlu0 %2569
  %2571 = vrot.lane.b32.xlu0 %v781, 28
  %v2572 = vpop.permute.xlu0 %2571
  %2573 = vrot.lane.b32.xlu0 %v782, 28
  %v2574 = vpop.permute.xlu0 %2573
  %2703 = vrot.lane.b32.xlu0 %v783, 32
  %v2704 = vpop.permute.xlu0 %2703
  %2705 = vrot.lane.b32.xlu0 %v784, 32
  %v2706 = vpop.permute.xlu0 %2705
  %2707 = vrot.lane.b32.xlu0 %v785, 32
  %v2708 = vpop.permute.xlu0 %2707
  %2709 = vrot.lane.b32.xlu0 %v786, 32
  %v2710 = vpop.permute.xlu0 %2709
  %2711 = vrot.lane.b32.xlu0 %v787, 32
  %v2712 = vpop.permute.xlu0 %2711
  %2713 = vrot.lane.b32.xlu0 %v788, 32
  %v2714 = vpop.permute.xlu0 %2713
  %2715 = vrot.lane.b32.xlu0 %v789, 32
  %v2716 = vpop.permute.xlu0 %2715
  %2717 = vrot.lane.b32.xlu0 %v790, 32
  %v2718 = vpop.permute.xlu0 %2717
  %2719 = vrot.lane.b32.xlu0 %v791, 32
  %v2720 = vpop.permute.xlu0 %2719
  %2721 = vrot.lane.b32.xlu0 %v792, 32
  %v2722 = vpop.permute.xlu0 %2721
  %2723 = vrot.lane.b32.xlu0 %v793, 32
  %v2724 = vpop.permute.xlu0 %2723
  %2725 = vrot.lane.b32.xlu0 %v794, 32
  %v2726 = vpop.permute.xlu0 %2725
  %2727 = vrot.lane.b32.xlu0 %v795, 32
  %v2728 = vpop.permute.xlu0 %2727
  %2729 = vrot.lane.b32.xlu0 %v796, 32
  %v2730 = vpop.permute.xlu0 %2729
  %2731 = vrot.lane.b32.xlu0 %v797, 32
  %v2732 = vpop.permute.xlu0 %2731
  %2733 = vrot.lane.b32.xlu0 %v798, 32
  %v2734 = vpop.permute.xlu0 %2733
  %2735 = vrot.lane.b32.xlu0 %v799, 32
  %v2736 = vpop.permute.xlu0 %2735
  %2737 = vrot.lane.b32.xlu0 %v800, 32
  %v2738 = vpop.permute.xlu0 %2737
  %2739 = vrot.lane.b32.xlu0 %v801, 32
  %v2740 = vpop.permute.xlu0 %2739
  %2741 = vrot.lane.b32.xlu0 %v802, 32
  %v2742 = vpop.permute.xlu0 %2741
  %2743 = vrot.lane.b32.xlu0 %v803, 32
  %v2744 = vpop.permute.xlu0 %2743
  %2745 = vrot.lane.b32.xlu0 %v804, 32
  %v2746 = vpop.permute.xlu0 %2745
  %2747 = vrot.lane.b32.xlu0 %v805, 32
  %v2748 = vpop.permute.xlu0 %2747
  %2749 = vrot.lane.b32.xlu0 %v806, 32
  %v2750 = vpop.permute.xlu0 %2749
  %2751 = vrot.lane.b32.xlu0 %v807, 32
  %v2752 = vpop.permute.xlu0 %2751
  %2753 = vrot.lane.b32.xlu0 %v808, 32
  %v2754 = vpop.permute.xlu0 %2753
  %2755 = vrot.lane.b32.xlu0 %v809, 32
  %v2756 = vpop.permute.xlu0 %2755
  %2757 = vrot.lane.b32.xlu0 %v810, 32
  %v2758 = vpop.permute.xlu0 %2757
  %2759 = vrot.lane.b32.xlu0 %v811, 32
  %v2760 = vpop.permute.xlu0 %2759
  %2761 = vrot.lane.b32.xlu0 %v812, 32
  %v2762 = vpop.permute.xlu0 %2761
  %2763 = vrot.lane.b32.xlu0 %v813, 32
  %v2764 = vpop.permute.xlu0 %2763
  %2765 = vrot.lane.b32.xlu0 %v814, 32
  %v2766 = vpop.permute.xlu0 %2765
  %2767 = vrot.lane.b32.xlu0 %v815, 32
  %v2768 = vpop.permute.xlu0 %2767
  %2769 = vrot.lane.b32.xlu0 %v816, 32
  %v2770 = vpop.permute.xlu0 %2769
  %2771 = vrot.lane.b32.xlu0 %v817, 32
  %v2772 = vpop.permute.xlu0 %2771
  %2773 = vrot.lane.b32.xlu0 %v818, 32
  %v2774 = vpop.permute.xlu0 %2773
  %2775 = vrot.lane.b32.xlu0 %v819, 32
  %v2776 = vpop.permute.xlu0 %2775
  %2777 = vrot.lane.b32.xlu0 %v820, 32
  %v2778 = vpop.permute.xlu0 %2777
  %2779 = vrot.lane.b32.xlu0 %v821, 32
  %v2780 = vpop.permute.xlu0 %2779
  %2781 = vrot.lane.b32.xlu0 %v822, 32
  %v2782 = vpop.permute.xlu0 %2781
  %2783 = vrot.lane.b32.xlu0 %v823, 32
  %v2784 = vpop.permute.xlu0 %2783
  %2785 = vrot.lane.b32.xlu0 %v824, 32
  %v2786 = vpop.permute.xlu0 %2785
  %2787 = vrot.lane.b32.xlu0 %v825, 32
  %v2788 = vpop.permute.xlu0 %2787
  %2789 = vrot.lane.b32.xlu0 %v826, 32
  %v2790 = vpop.permute.xlu0 %2789
  %2791 = vrot.lane.b32.xlu0 %v827, 32
  %v2792 = vpop.permute.xlu0 %2791
  %2793 = vrot.lane.b32.xlu0 %v828, 32
  %v2794 = vpop.permute.xlu0 %2793
  %2795 = vrot.lane.b32.xlu0 %v829, 32
  %v2796 = vpop.permute.xlu0 %2795
  %2797 = vrot.lane.b32.xlu0 %v830, 32
  %v2798 = vpop.permute.xlu0 %2797
  %2799 = vrot.lane.b32.xlu0 %v831, 32
  %v2800 = vpop.permute.xlu0 %2799
  %2801 = vrot.lane.b32.xlu0 %v832, 32
  %v2802 = vpop.permute.xlu0 %2801
  %2803 = vrot.lane.b32.xlu0 %v833, 32
  %v2804 = vpop.permute.xlu0 %2803
  %2805 = vrot.lane.b32.xlu0 %v834, 32
  %v2806 = vpop.permute.xlu0 %2805
  %2807 = vrot.lane.b32.xlu0 %v835, 32
  %v2808 = vpop.permute.xlu0 %2807
  %2809 = vrot.lane.b32.xlu0 %v836, 32
  %v2810 = vpop.permute.xlu0 %2809
  %2811 = vrot.lane.b32.xlu0 %v837, 32
  %v2812 = vpop.permute.xlu0 %2811
  %2813 = vrot.lane.b32.xlu0 %v838, 32
  %v2814 = vpop.permute.xlu0 %2813
  %2815 = vrot.lane.b32.xlu0 %v839, 32
  %v2816 = vpop.permute.xlu0 %2815
  %2817 = vrot.lane.b32.xlu0 %v840, 32
  %v2818 = vpop.permute.xlu0 %2817
  %2819 = vrot.lane.b32.xlu0 %v841, 32
  %v2820 = vpop.permute.xlu0 %2819
  %2821 = vrot.lane.b32.xlu0 %v842, 32
  %v2822 = vpop.permute.xlu0 %2821
  %2823 = vrot.lane.b32.xlu0 %v843, 32
  %v2824 = vpop.permute.xlu0 %2823
  %2825 = vrot.lane.b32.xlu0 %v844, 32
  %v2826 = vpop.permute.xlu0 %2825
  %2827 = vrot.lane.b32.xlu0 %v845, 32
  %v2828 = vpop.permute.xlu0 %2827
  %2829 = vrot.lane.b32.xlu0 %v846, 32
  %v2830 = vpop.permute.xlu0 %2829
  %v2895 = vsel %vm31, %v270, %v912
  %v2896 = vsel %vm31, %v271, %v914
  %v2897 = vsel %vm31, %v272, %v916
  %v2898 = vsel %vm31, %v273, %v918
  %v2899 = vsel %vm31, %v274, %v920
  %v2900 = vsel %vm31, %v275, %v922
  %v2901 = vsel %vm31, %v276, %v924
  %v2902 = vsel %vm31, %v277, %v926
  %v2903 = vsel %vm31, %v278, %v928
  %v2904 = vsel %vm31, %v279, %v930
  %v2905 = vsel %vm31, %v280, %v932
  %v2906 = vsel %vm31, %v281, %v934
  %v2907 = vsel %vm31, %v282, %v936
  %v2908 = vsel %vm31, %v283, %v938
  %v2909 = vsel %vm31, %v284, %v940
  %v2910 = vsel %vm31, %v285, %v942
  %v2911 = vsel %vm31, %v286, %v944
  %v2912 = vsel %vm31, %v287, %v946
  %v2913 = vsel %vm31, %v288, %v948
  %v2914 = vsel %vm31, %v289, %v950
  %v2915 = vsel %vm31, %v290, %v952
  %v2916 = vsel %vm31, %v291, %v954
  %v2917 = vsel %vm31, %v292, %v956
  %v2918 = vsel %vm31, %v293, %v958
  %v2919 = vsel %vm31, %v294, %v960
  %v2920 = vsel %vm31, %v295, %v962
  %v2921 = vsel %vm31, %v296, %v964
  %v2922 = vsel %vm31, %v297, %v966
  %v2923 = vsel %vm31, %v298, %v968
  %v2924 = vsel %vm31, %v299, %v970
  %v2925 = vsel %vm31, %v300, %v972
  %v2926 = vsel %vm31, %v301, %v974
  %v2927 = vsel %vm31, %v302, %v976
  %v2928 = vsel %vm31, %v303, %v978
  %v2929 = vsel %vm31, %v304, %v980
  %v2930 = vsel %vm31, %v305, %v982
  %v2931 = vsel %vm31, %v306, %v984
  %v2932 = vsel %vm31, %v307, %v986
  %v2933 = vsel %vm31, %v308, %v988
  %v2934 = vsel %vm31, %v309, %v990
  %v2935 = vsel %vm31, %v310, %v992
  %v2936 = vsel %vm31, %v311, %v994
  %v2937 = vsel %vm31, %v312, %v996
  %v2938 = vsel %vm31, %v313, %v998
  %v2939 = vsel %vm31, %v314, %v1000
  %v2940 = vsel %vm31, %v315, %v1002
  %v2941 = vsel %vm31, %v316, %v1004
  %v2942 = vsel %vm31, %v317, %v1006
  %v2943 = vsel %vm31, %v318, %v1008
  %v2944 = vsel %vm31, %v319, %v1010
  %v2945 = vsel %vm31, %v320, %v1012
  %v2946 = vsel %vm31, %v321, %v1014
  %v2947 = vsel %vm31, %v322, %v1016
  %v2948 = vsel %vm31, %v323, %v1018
  %v2949 = vsel %vm31, %v324, %v1020
  %v2950 = vsel %vm31, %v325, %v1022
  %v2951 = vsel %vm31, %v326, %v1024
  %v2952 = vsel %vm31, %v327, %v1026
  %v2953 = vsel %vm31, %v328, %v1028
  %v2954 = vsel %vm31, %v329, %v1030
  %v2955 = vsel %vm31, %v330, %v1032
  %v2956 = vsel %vm31, %v331, %v1034
  %v2957 = vsel %vm31, %v332, %v1036
  %v2958 = vsel %vm31, %v333, %v1038
  %vm2959 = vcmask 64512
  %v2960 = vsel %vm2959, %v2895, %v1168
  %v2961 = vsel %vm2959, %v2896, %v1170
  %v2962 = vsel %vm2959, %v2897, %v1172
  %v2963 = vsel %vm2959, %v2898, %v1174
  %v2964 = vsel %vm2959, %v2899, %v1176
  %v2965 = vsel %vm2959, %v2900, %v1178
  %v2966 = vsel %vm2959, %v2901, %v1180
  %v2967 = vsel %vm2959, %v2902, %v1182
  %v2968 = vsel %vm2959, %v2903, %v1184
  %v2969 = vsel %vm2959, %v2904, %v1186
  %v2970 = vsel %vm2959, %v2905, %v1188
  %v2971 = vsel %vm2959, %v2906, %v1190
  %v2972 = vsel %vm2959, %v2907, %v1192
  %v2973 = vsel %vm2959, %v2908, %v1194
  %v2974 = vsel %vm2959, %v2909, %v1196
  %v2975 = vsel %vm2959, %v2910, %v1198
  %v2976 = vsel %vm2959, %v2911, %v1200
  %v2977 = vsel %vm2959, %v2912, %v1202
  %v2978 = vsel %vm2959, %v2913, %v1204
  %v2979 = vsel %vm2959, %v2914, %v1206
  %v2980 = vsel %vm2959, %v2915, %v1208
  %v2981 = vsel %vm2959, %v2916, %v1210
  %v2982 = vsel %vm2959, %v2917, %v1212
  %v2983 = vsel %vm2959, %v2918, %v1214
  %v2984 = vsel %vm2959, %v2919, %v1216
  %v2985 = vsel %vm2959, %v2920, %v1218
  %v2986 = vsel %vm2959, %v2921, %v1220
  %v2987 = vsel %vm2959, %v2922, %v1222
  %v2988 = vsel %vm2959, %v2923, %v1224
  %v2989 = vsel %vm2959, %v2924, %v1226
  %v2990 = vsel %vm2959, %v2925, %v1228
  %v2991 = vsel %vm2959, %v2926, %v1230
  %v2992 = vsel %vm2959, %v2927, %v1232
  %v2993 = vsel %vm2959, %v2928, %v1234
  %v2994 = vsel %vm2959, %v2929, %v1236
  %v2995 = vsel %vm2959, %v2930, %v1238
  %v2996 = vsel %vm2959, %v2931, %v1240
  %v2997 = vsel %vm2959, %v2932, %v1242
  %v2998 = vsel %vm2959, %v2933, %v1244
  %v2999 = vsel %vm2959, %v2934, %v1246
  %v3000 = vsel %vm2959, %v2935, %v1248
  %v3001 = vsel %vm2959, %v2936, %v1250
  %v3002 = vsel %vm2959, %v2937, %v1252
  %v3003 = vsel %vm2959, %v2938, %v1254
  %v3004 = vsel %vm2959, %v2939, %v1256
  %v3005 = vsel %vm2959, %v2940, %v1258
  %v3006 = vsel %vm2959, %v2941, %v1260
  %v3007 = vsel %vm2959, %v2942, %v1262
  %v3008 = vsel %vm2959, %v2943, %v1264
  %v3009 = vsel %vm2959, %v2944, %v1266
  %v3010 = vsel %vm2959, %v2945, %v1268
  %v3011 = vsel %vm2959, %v2946, %v1270
  %v3012 = vsel %vm2959, %v2947, %v1272
  %v3013 = vsel %vm2959, %v2948, %v1274
  %v3014 = vsel %vm2959, %v2949, %v1276
  %v3015 = vsel %vm2959, %v2950, %v1278
  %v3016 = vsel %vm2959, %v2951, %v1280
  %v3017 = vsel %vm2959, %v2952, %v1282
  %v3018 = vsel %vm2959, %v2953, %v1284
  %v3019 = vsel %vm2959, %v2954, %v1286
  %v3020 = vsel %vm2959, %v2955, %v1288
  %v3021 = vsel %vm2959, %v2956, %v1290
  %v3022 = vsel %vm2959, %v2957, %v1292
  %v3023 = vsel %vm2959, %v2958, %v1294
  %vm3024 = vcmask 97280
  %v3025 = vsel %vm3024, %v2960, %v1424
  %v3026 = vsel %vm3024, %v2961, %v1426
  %v3027 = vsel %vm3024, %v2962, %v1428
  %v3028 = vsel %vm3024, %v2963, %v1430
  %v3029 = vsel %vm3024, %v2964, %v1432
  %v3030 = vsel %vm3024, %v2965, %v1434
  %v3031 = vsel %vm3024, %v2966, %v1436
  %v3032 = vsel %vm3024, %v2967, %v1438
  %v3033 = vsel %vm3024, %v2968, %v1440
  %v3034 = vsel %vm3024, %v2969, %v1442
  %v3035 = vsel %vm3024, %v2970, %v1444
  %v3036 = vsel %vm3024, %v2971, %v1446
  %v3037 = vsel %vm3024, %v2972, %v1448
  %v3038 = vsel %vm3024, %v2973, %v1450
  %v3039 = vsel %vm3024, %v2974, %v1452
  %v3040 = vsel %vm3024, %v2975, %v1454
  %v3041 = vsel %vm3024, %v2976, %v1456
  %v3042 = vsel %vm3024, %v2977, %v1458
  %v3043 = vsel %vm3024, %v2978, %v1460
  %v3044 = vsel %vm3024, %v2979, %v1462
  %v3045 = vsel %vm3024, %v2980, %v1464
  %v3046 = vsel %vm3024, %v2981, %v1466
  %v3047 = vsel %vm3024, %v2982, %v1468
  %v3048 = vsel %vm3024, %v2983, %v1470
  %v3049 = vsel %vm3024, %v2984, %v1472
  %v3050 = vsel %vm3024, %v2985, %v1474
  %v3051 = vsel %vm3024, %v2986, %v1476
  %v3052 = vsel %vm3024, %v2987, %v1478
  %v3053 = vsel %vm3024, %v2988, %v1480
  %v3054 = vsel %vm3024, %v2989, %v1482
  %v3055 = vsel %vm3024, %v2990, %v1484
  %v3056 = vsel %vm3024, %v2991, %v1486
  %v3057 = vsel %vm3024, %v2992, %v1488
  %v3058 = vsel %vm3024, %v2993, %v1490
  %v3059 = vsel %vm3024, %v2994, %v1492
  %v3060 = vsel %vm3024, %v2995, %v1494
  %v3061 = vsel %vm3024, %v2996, %v1496
  %v3062 = vsel %vm3024, %v2997, %v1498
  %v3063 = vsel %vm3024, %v2998, %v1500
  %v3064 = vsel %vm3024, %v2999, %v1502
  %v3065 = vsel %vm3024, %v3000, %v1504
  %v3066 = vsel %vm3024, %v3001, %v1506
  %v3067 = vsel %vm3024, %v3002, %v1508
  %v3068 = vsel %vm3024, %v3003, %v1510
  %v3069 = vsel %vm3024, %v3004, %v1512
  %v3070 = vsel %vm3024, %v3005, %v1514
  %v3071 = vsel %vm3024, %v3006, %v1516
  %v3072 = vsel %vm3024, %v3007, %v1518
  %v3073 = vsel %vm3024, %v3008, %v1520
  %v3074 = vsel %vm3024, %v3009, %v1522
  %v3075 = vsel %vm3024, %v3010, %v1524
  %v3076 = vsel %vm3024, %v3011, %v1526
  %v3077 = vsel %vm3024, %v3012, %v1528
  %v3078 = vsel %vm3024, %v3013, %v1530
  %v3079 = vsel %vm3024, %v3014, %v1532
  %v3080 = vsel %vm3024, %v3015, %v1534
  %v3081 = vsel %vm3024, %v3016, %v1536
  %v3082 = vsel %vm3024, %v3017, %v1538
  %v3083 = vsel %vm3024, %v3018, %v1540
  %v3084 = vsel %vm3024, %v3019, %v1542
  %v3085 = vsel %vm3024, %v3020, %v1544
  %v3086 = vsel %vm3024, %v3021, %v1546
  %v3087 = vsel %vm3024, %v3022, %v1548
  %v3088 = vsel %vm3024, %v3023, %v1550
  %vm3089 = vcmask 130048
  %v3090 = vsel %vm3089, %v3025, %v1680
  %v3091 = vsel %vm3089, %v3026, %v1682
  %v3092 = vsel %vm3089, %v3027, %v1684
  %v3093 = vsel %vm3089, %v3028, %v1686
  %v3094 = vsel %vm3089, %v3029, %v1688
  %v3095 = vsel %vm3089, %v3030, %v1690
  %v3096 = vsel %vm3089, %v3031, %v1692
  %v3097 = vsel %vm3089, %v3032, %v1694
  %v3098 = vsel %vm3089, %v3033, %v1696
  %v3099 = vsel %vm3089, %v3034, %v1698
  %v3100 = vsel %vm3089, %v3035, %v1700
  %v3101 = vsel %vm3089, %v3036, %v1702
  %v3102 = vsel %vm3089, %v3037, %v1704
  %v3103 = vsel %vm3089, %v3038, %v1706
  %v3104 = vsel %vm3089, %v3039, %v1708
  %v3105 = vsel %vm3089, %v3040, %v1710
  %v3106 = vsel %vm3089, %v3041, %v1712
  %v3107 = vsel %vm3089, %v3042, %v1714
  %v3108 = vsel %vm3089, %v3043, %v1716
  %v3109 = vsel %vm3089, %v3044, %v1718
  %v3110 = vsel %vm3089, %v3045, %v1720
  %v3111 = vsel %vm3089, %v3046, %v1722
  %v3112 = vsel %vm3089, %v3047, %v1724
  %v3113 = vsel %vm3089, %v3048, %v1726
  %v3114 = vsel %vm3089, %v3049, %v1728
  %v3115 = vsel %vm3089, %v3050, %v1730
  %v3116 = vsel %vm3089, %v3051, %v1732
  %v3117 = vsel %vm3089, %v3052, %v1734
  %v3118 = vsel %vm3089, %v3053, %v1736
  %v3119 = vsel %vm3089, %v3054, %v1738
  %v3120 = vsel %vm3089, %v3055, %v1740
  %v3121 = vsel %vm3089, %v3056, %v1742
  %v3122 = vsel %vm3089, %v3057, %v1744
  %v3123 = vsel %vm3089, %v3058, %v1746
  %v3124 = vsel %vm3089, %v3059, %v1748
  %v3125 = vsel %vm3089, %v3060, %v1750
  %v3126 = vsel %vm3089, %v3061, %v1752
  %v3127 = vsel %vm3089, %v3062, %v1754
  %v3128 = vsel %vm3089, %v3063, %v1756
  %v3129 = vsel %vm3089, %v3064, %v1758
  %v3130 = vsel %vm3089, %v3065, %v1760
  %v3131 = vsel %vm3089, %v3066, %v1762
  %v3132 = vsel %vm3089, %v3067, %v1764
  %v3133 = vsel %vm3089, %v3068, %v1766
  %v3134 = vsel %vm3089, %v3069, %v1768
  %v3135 = vsel %vm3089, %v3070, %v1770
  %v3136 = vsel %vm3089, %v3071, %v1772
  %v3137 = vsel %vm3089, %v3072, %v1774
  %v3138 = vsel %vm3089, %v3073, %v1776
  %v3139 = vsel %vm3089, %v3074, %v1778
  %v3140 = vsel %vm3089, %v3075, %v1780
  %v3141 = vsel %vm3089, %v3076, %v1782
  %v3142 = vsel %vm3089, %v3077, %v1784
  %v3143 = vsel %vm3089, %v3078, %v1786
  %v3144 = vsel %vm3089, %v3079, %v1788
  %v3145 = vsel %vm3089, %v3080, %v1790
  %v3146 = vsel %vm3089, %v3081, %v1792
  %v3147 = vsel %vm3089, %v3082, %v1794
  %v3148 = vsel %vm3089, %v3083, %v1796
  %v3149 = vsel %vm3089, %v3084, %v1798
  %v3150 = vsel %vm3089, %v3085, %v1800
  %v3151 = vsel %vm3089, %v3086, %v1802
  %v3152 = vsel %vm3089, %v3087, %v1804
  %v3153 = vsel %vm3089, %v3088, %v1806
  %vm3154 = vcmask 162816
  %v3155 = vsel %vm3154, %v3090, %v1936
  %v3156 = vsel %vm3154, %v3091, %v1938
  %v3157 = vsel %vm3154, %v3092, %v1940
  %v3158 = vsel %vm3154, %v3093, %v1942
  %v3159 = vsel %vm3154, %v3094, %v1944
  %v3160 = vsel %vm3154, %v3095, %v1946
  %v3161 = vsel %vm3154, %v3096, %v1948
  %v3162 = vsel %vm3154, %v3097, %v1950
  %v3163 = vsel %vm3154, %v3098, %v1952
  %v3164 = vsel %vm3154, %v3099, %v1954
  %v3165 = vsel %vm3154, %v3100, %v1956
  %v3166 = vsel %vm3154, %v3101, %v1958
  %v3167 = vsel %vm3154, %v3102, %v1960
  %v3168 = vsel %vm3154, %v3103, %v1962
  %v3169 = vsel %vm3154, %v3104, %v1964
  %v3170 = vsel %vm3154, %v3105, %v1966
  %v3171 = vsel %vm3154, %v3106, %v1968
  %v3172 = vsel %vm3154, %v3107, %v1970
  %v3173 = vsel %vm3154, %v3108, %v1972
  %v3174 = vsel %vm3154, %v3109, %v1974
  %v3175 = vsel %vm3154, %v3110, %v1976
  %v3176 = vsel %vm3154, %v3111, %v1978
  %v3177 = vsel %vm3154, %v3112, %v1980
  %v3178 = vsel %vm3154, %v3113, %v1982
  %v3179 = vsel %vm3154, %v3114, %v1984
  %v3180 = vsel %vm3154, %v3115, %v1986
  %v3181 = vsel %vm3154, %v3116, %v1988
  %v3182 = vsel %vm3154, %v3117, %v1990
  %v3183 = vsel %vm3154, %v3118, %v1992
  %v3184 = vsel %vm3154, %v3119, %v1994
  %v3185 = vsel %vm3154, %v3120, %v1996
  %v3186 = vsel %vm3154, %v3121, %v1998
  %v3187 = vsel %vm3154, %v3122, %v2000
  %v3188 = vsel %vm3154, %v3123, %v2002
  %v3189 = vsel %vm3154, %v3124, %v2004
  %v3190 = vsel %vm3154, %v3125, %v2006
  %v3191 = vsel %vm3154, %v3126, %v2008
  %v3192 = vsel %vm3154, %v3127, %v2010
  %v3193 = vsel %vm3154, %v3128, %v2012
  %v3194 = vsel %vm3154, %v3129, %v2014
  %v3195 = vsel %vm3154, %v3130, %v2016
  %v3196 = vsel %vm3154, %v3131, %v2018
  %v3197 = vsel %vm3154, %v3132, %v2020
  %v3198 = vsel %vm3154, %v3133, %v2022
  %v3199 = vsel %vm3154, %v3134, %v2024
  %v3200 = vsel %vm3154, %v3135, %v2026
  %v3201 = vsel %vm3154, %v3136, %v2028
  %v3202 = vsel %vm3154, %v3137, %v2030
  %v3203 = vsel %vm3154, %v3138, %v2032
  %v3204 = vsel %vm3154, %v3139, %v2034
  %v3205 = vsel %vm3154, %v3140, %v2036
  %v3206 = vsel %vm3154, %v3141, %v2038
  %v3207 = vsel %vm3154, %v3142, %v2040
  %v3208 = vsel %vm3154, %v3143, %v2042
  %v3209 = vsel %vm3154, %v3144, %v2044
  %v3210 = vsel %vm3154, %v3145, %v2046
  %v3211 = vsel %vm3154, %v3146, %v2048
  %v3212 = vsel %vm3154, %v3147, %v2050
  %v3213 = vsel %vm3154, %v3148, %v2052
  %v3214 = vsel %vm3154, %v3149, %v2054
  %v3215 = vsel %vm3154, %v3150, %v2056
  %v3216 = vsel %vm3154, %v3151, %v2058
  %v3217 = vsel %vm3154, %v3152, %v2060
  %v3218 = vsel %vm3154, %v3153, %v2062
  %vm3219 = vcmask 195584
  %v3220 = vsel %vm3219, %v3155, %v2192
  %v3221 = vsel %vm3219, %v3156, %v2194
  %v3222 = vsel %vm3219, %v3157, %v2196
  %v3223 = vsel %vm3219, %v3158, %v2198
  %v3224 = vsel %vm3219, %v3159, %v2200
  %v3225 = vsel %vm3219, %v3160, %v2202
  %v3226 = vsel %vm3219, %v3161, %v2204
  %v3227 = vsel %vm3219, %v3162, %v2206
  %v3228 = vsel %vm3219, %v3163, %v2208
  %v3229 = vsel %vm3219, %v3164, %v2210
  %v3230 = vsel %vm3219, %v3165, %v2212
  %v3231 = vsel %vm3219, %v3166, %v2214
  %v3232 = vsel %vm3219, %v3167, %v2216
  %v3233 = vsel %vm3219, %v3168, %v2218
  %v3234 = vsel %vm3219, %v3169, %v2220
  %v3235 = vsel %vm3219, %v3170, %v2222
  %v3236 = vsel %vm3219, %v3171, %v2224
  %v3237 = vsel %vm3219, %v3172, %v2226
  %v3238 = vsel %vm3219, %v3173, %v2228
  %v3239 = vsel %vm3219, %v3174, %v2230
  %v3240 = vsel %vm3219, %v3175, %v2232
  %v3241 = vsel %vm3219, %v3176, %v2234
  %v3242 = vsel %vm3219, %v3177, %v2236
  %v3243 = vsel %vm3219, %v3178, %v2238
  %v3244 = vsel %vm3219, %v3179, %v2240
  %v3245 = vsel %vm3219, %v3180, %v2242
  %v3246 = vsel %vm3219, %v3181, %v2244
  %v3247 = vsel %vm3219, %v3182, %v2246
  %v3248 = vsel %vm3219, %v3183, %v2248
  %v3249 = vsel %vm3219, %v3184, %v2250
  %v3250 = vsel %vm3219, %v3185, %v2252
  %v3251 = vsel %vm3219, %v3186, %v2254
  %v3252 = vsel %vm3219, %v3187, %v2256
  %v3253 = vsel %vm3219, %v3188, %v2258
  %v3254 = vsel %vm3219, %v3189, %v2260
  %v3255 = vsel %vm3219, %v3190, %v2262
  %v3256 = vsel %vm3219, %v3191, %v2264
  %v3257 = vsel %vm3219, %v3192, %v2266
  %v3258 = vsel %vm3219, %v3193, %v2268
  %v3259 = vsel %vm3219, %v3194, %v2270
  %v3260 = vsel %vm3219, %v3195, %v2272
  %v3261 = vsel %vm3219, %v3196, %v2274
  %v3262 = vsel %vm3219, %v3197, %v2276
  %v3263 = vsel %vm3219, %v3198, %v2278
  %v3264 = vsel %vm3219, %v3199, %v2280
  %v3265 = vsel %vm3219, %v3200, %v2282
  %v3266 = vsel %vm3219, %v3201, %v2284
  %v3267 = vsel %vm3219, %v3202, %v2286
  %v3268 = vsel %vm3219, %v3203, %v2288
  %v3269 = vsel %vm3219, %v3204, %v2290
  %v3270 = vsel %vm3219, %v3205, %v2292
  %v3271 = vsel %vm3219, %v3206, %v2294
  %v3272 = vsel %vm3219, %v3207, %v2296
  %v3273 = vsel %vm3219, %v3208, %v2298
  %v3274 = vsel %vm3219, %v3209, %v2300
  %v3275 = vsel %vm3219, %v3210, %v2302
  %v3276 = vsel %vm3219, %v3211, %v2304
  %v3277 = vsel %vm3219, %v3212, %v2306
  %v3278 = vsel %vm3219, %v3213, %v2308
  %v3279 = vsel %vm3219, %v3214, %v2310
  %v3280 = vsel %vm3219, %v3215, %v2312
  %v3281 = vsel %vm3219, %v3216, %v2314
  %v3282 = vsel %vm3219, %v3217, %v2316
  %v3283 = vsel %vm3219, %v3218, %v2318
  %vm3284 = vcmask 228352
  %v3285 = vsel %vm3284, %v3220, %v2448
  %v3286 = vsel %vm3284, %v3221, %v2450
  %v3287 = vsel %vm3284, %v3222, %v2452
  %v3288 = vsel %vm3284, %v3223, %v2454
  %v3289 = vsel %vm3284, %v3224, %v2456
  %v3290 = vsel %vm3284, %v3225, %v2458
  %v3291 = vsel %vm3284, %v3226, %v2460
  %v3292 = vsel %vm3284, %v3227, %v2462
  %v3293 = vsel %vm3284, %v3228, %v2464
  %v3294 = vsel %vm3284, %v3229, %v2466
  %v3295 = vsel %vm3284, %v3230, %v2468
  %v3296 = vsel %vm3284, %v3231, %v2470
  %v3297 = vsel %vm3284, %v3232, %v2472
  %v3298 = vsel %vm3284, %v3233, %v2474
  %v3299 = vsel %vm3284, %v3234, %v2476
  %v3300 = vsel %vm3284, %v3235, %v2478
  %v3301 = vsel %vm3284, %v3236, %v2480
  %v3302 = vsel %vm3284, %v3237, %v2482
  %v3303 = vsel %vm3284, %v3238, %v2484
  %v3304 = vsel %vm3284, %v3239, %v2486
  %v3305 = vsel %vm3284, %v3240, %v2488
  %v3306 = vsel %vm3284, %v3241, %v2490
  %v3307 = vsel %vm3284, %v3242, %v2492
  %v3308 = vsel %vm3284, %v3243, %v2494
  %v3309 = vsel %vm3284, %v3244, %v2496
  %v3310 = vsel %vm3284, %v3245, %v2498
  %v3311 = vsel %vm3284, %v3246, %v2500
  %v3312 = vsel %vm3284, %v3247, %v2502
  %v3313 = vsel %vm3284, %v3248, %v2504
  %v3314 = vsel %vm3284, %v3249, %v2506
  %v3315 = vsel %vm3284, %v3250, %v2508
  %v3316 = vsel %vm3284, %v3251, %v2510
  %v3317 = vsel %vm3284, %v3252, %v2512
  %v3318 = vsel %vm3284, %v3253, %v2514
  %v3319 = vsel %vm3284, %v3254, %v2516
  %v3320 = vsel %vm3284, %v3255, %v2518
  %v3321 = vsel %vm3284, %v3256, %v2520
  %v3322 = vsel %vm3284, %v3257, %v2522
  %v3323 = vsel %vm3284, %v3258, %v2524
  %v3324 = vsel %vm3284, %v3259, %v2526
  %v3325 = vsel %vm3284, %v3260, %v2528
  %v3326 = vsel %vm3284, %v3261, %v2530
  %v3327 = vsel %vm3284, %v3262, %v2532
  %v3328 = vsel %vm3284, %v3263, %v2534
  %v3329 = vsel %vm3284, %v3264, %v2536
  %v3330 = vsel %vm3284, %v3265, %v2538
  %v3331 = vsel %vm3284, %v3266, %v2540
  %v3332 = vsel %vm3284, %v3267, %v2542
  %v3333 = vsel %vm3284, %v3268, %v2544
  %v3334 = vsel %vm3284, %v3269, %v2546
  %v3335 = vsel %vm3284, %v3270, %v2548
  %v3336 = vsel %vm3284, %v3271, %v2550
  %v3337 = vsel %vm3284, %v3272, %v2552
  %v3338 = vsel %vm3284, %v3273, %v2554
  %v3339 = vsel %vm3284, %v3274, %v2556
  %v3340 = vsel %vm3284, %v3275, %v2558
  %v3341 = vsel %vm3284, %v3276, %v2560
  %v3342 = vsel %vm3284, %v3277, %v2562
  %v3343 = vsel %vm3284, %v3278, %v2564
  %v3344 = vsel %vm3284, %v3279, %v2566
  %v3345 = vsel %vm3284, %v3280, %v2568
  %v3346 = vsel %vm3284, %v3281, %v2570
  %v3347 = vsel %vm3284, %v3282, %v2572
  %v3348 = vsel %vm3284, %v3283, %v2574
  %vm3349 = vcmask 261120
  %v3350 = vsel %vm3349, %v3285, %v2704
  %v3351 = vsel %vm3349, %v3286, %v2706
  %v3352 = vsel %vm3349, %v3287, %v2708
  %v3353 = vsel %vm3349, %v3288, %v2710
  %v3354 = vsel %vm3349, %v3289, %v2712
  %v3355 = vsel %vm3349, %v3290, %v2714
  %v3356 = vsel %vm3349, %v3291, %v2716
  %v3357 = vsel %vm3349, %v3292, %v2718
  %v3358 = vsel %vm3349, %v3293, %v2720
  %v3359 = vsel %vm3349, %v3294, %v2722
  %v3360 = vsel %vm3349, %v3295, %v2724
  %v3361 = vsel %vm3349, %v3296, %v2726
  %v3362 = vsel %vm3349, %v3297, %v2728
  %v3363 = vsel %vm3349, %v3298, %v2730
  %v3364 = vsel %vm3349, %v3299, %v2732
  %v3365 = vsel %vm3349, %v3300, %v2734
  %v3366 = vsel %vm3349, %v3301, %v2736
  %v3367 = vsel %vm3349, %v3302, %v2738
  %v3368 = vsel %vm3349, %v3303, %v2740
  %v3369 = vsel %vm3349, %v3304, %v2742
  %v3370 = vsel %vm3349, %v3305, %v2744
  %v3371 = vsel %vm3349, %v3306, %v2746
  %v3372 = vsel %vm3349, %v3307, %v2748
  %v3373 = vsel %vm3349, %v3308, %v2750
  %v3374 = vsel %vm3349, %v3309, %v2752
  %v3375 = vsel %vm3349, %v3310, %v2754
  %v3376 = vsel %vm3349, %v3311, %v2756
  %v3377 = vsel %vm3349, %v3312, %v2758
  %v3378 = vsel %vm3349, %v3313, %v2760
  %v3379 = vsel %vm3349, %v3314, %v2762
  %v3380 = vsel %vm3349, %v3315, %v2764
  %v3381 = vsel %vm3349, %v3316, %v2766
  %v3382 = vsel %vm3349, %v3317, %v2768
  %v3383 = vsel %vm3349, %v3318, %v2770
  %v3384 = vsel %vm3349, %v3319, %v2772
  %v3385 = vsel %vm3349, %v3320, %v2774
  %v3386 = vsel %vm3349, %v3321, %v2776
  %v3387 = vsel %vm3349, %v3322, %v2778
  %v3388 = vsel %vm3349, %v3323, %v2780
  %v3389 = vsel %vm3349, %v3324, %v2782
  %v3390 = vsel %vm3349, %v3325, %v2784
  %v3391 = vsel %vm3349, %v3326, %v2786
  %v3392 = vsel %vm3349, %v3327, %v2788
  %v3393 = vsel %vm3349, %v3328, %v2790
  %v3394 = vsel %vm3349, %v3329, %v2792
  %v3395 = vsel %vm3349, %v3330, %v2794
  %v3396 = vsel %vm3349, %v3331, %v2796
  %v3397 = vsel %vm3349, %v3332, %v2798
  %v3398 = vsel %vm3349, %v3333, %v2800
  %v3399 = vsel %vm3349, %v3334, %v2802
  %v3400 = vsel %vm3349, %v3335, %v2804
  %v3401 = vsel %vm3349, %v3336, %v2806
  %v3402 = vsel %vm3349, %v3337, %v2808
  %v3403 = vsel %vm3349, %v3338, %v2810
  %v3404 = vsel %vm3349, %v3339, %v2812
  %v3405 = vsel %vm3349, %v3340, %v2814
  %v3406 = vsel %vm3349, %v3341, %v2816
  %v3407 = vsel %vm3349, %v3342, %v2818
  %v3408 = vsel %vm3349, %v3343, %v2820
  %v3409 = vsel %vm3349, %v3344, %v2822
  %v3410 = vsel %vm3349, %v3345, %v2824
  %v3411 = vsel %vm3349, %v3346, %v2826
  %v3412 = vsel %vm3349, %v3347, %v2828
  %v3413 = vsel %vm3349, %v3348, %v2830
  %v3414 = vld [vmem:[%s2] sm:$0xff]
  %v3415 = vld [vmem:[%s2 + $0x8] sm:$0xff]
  %v3416 = vld [vmem:[%s2 + $0x10] sm:$0xff]
  %v3417 = vld [vmem:[%s2 + $0x18] sm:$0xff]
  %v3418 = vld [vmem:[%s2 + $0x20] sm:$0xf]
  %vm3419 = vcmask 293888
  %v3421 = vsel %vm3419, %v3350, 0
  %v3424 = vsel %vm3419, %v3351, 0
  %v3427 = vsel %vm3419, %v3352, 0
  %v3430 = vsel %vm3419, %v3353, 0
  %v3433 = vsel %vm3419, %v3354, 0
  %v3436 = vsel %vm3419, %v3355, 0
  %v3439 = vsel %vm3419, %v3356, 0
  %v3442 = vsel %vm3419, %v3357, 0
  %v3445 = vsel %vm3419, %v3358, 0
  %v3448 = vsel %vm3419, %v3359, 0
  %v3451 = vsel %vm3419, %v3360, 0
  %v3454 = vsel %vm3419, %v3361, 0
  %v3457 = vsel %vm3419, %v3362, 0
  %v3460 = vsel %vm3419, %v3363, 0
  %v3463 = vsel %vm3419, %v3364, 0
  %v3466 = vsel %vm3419, %v3365, 0
  %v3469 = vsel %vm3419, %v3366, 0
  %v3472 = vsel %vm3419, %v3367, 0
  %v3475 = vsel %vm3419, %v3368, 0
  %v3478 = vsel %vm3419, %v3369, 0
  %v3481 = vsel %vm3419, %v3370, 0
  %v3484 = vsel %vm3419, %v3371, 0
  %v3487 = vsel %vm3419, %v3372, 0
  %v3490 = vsel %vm3419, %v3373, 0
  %v3493 = vsel %vm3419, %v3374, 0
  %v3496 = vsel %vm3419, %v3375, 0
  %v3499 = vsel %vm3419, %v3376, 0
  %v3502 = vsel %vm3419, %v3377, 0
  %v3505 = vsel %vm3419, %v3378, 0
  %v3508 = vsel %vm3419, %v3379, 0
  %v3511 = vsel %vm3419, %v3380, 0
  %v3514 = vsel %vm3419, %v3381, 0
  %v3517 = vsel %vm3419, %v3382, 0
  %v3520 = vsel %vm3419, %v3383, 0
  %v3523 = vsel %vm3419, %v3384, 0
  %v3526 = vsel %vm3419, %v3385, 0
  %v3529 = vsel %vm3419, %v3386, 0
  %v3532 = vsel %vm3419, %v3387, 0
  %v3535 = vsel %vm3419, %v3388, 0
  %v3538 = vsel %vm3419, %v3389, 0
  %v3541 = vsel %vm3419, %v3390, 0
  %v3544 = vsel %vm3419, %v3391, 0
  %v3547 = vsel %vm3419, %v3392, 0
  %v3550 = vsel %vm3419, %v3393, 0
  %v3553 = vsel %vm3419, %v3394, 0
  %v3556 = vsel %vm3419, %v3395, 0
  %v3559 = vsel %vm3419, %v3396, 0
  %v3562 = vsel %vm3419, %v3397, 0
  %v3565 = vsel %vm3419, %v3398, 0
  %v3568 = vsel %vm3419, %v3399, 0
  %v3571 = vsel %vm3419, %v3400, 0
  %v3574 = vsel %vm3419, %v3401, 0
  %v3577 = vsel %vm3419, %v3402, 0
  %v3580 = vsel %vm3419, %v3403, 0
  %v3583 = vsel %vm3419, %v3404, 0
  %v3586 = vsel %vm3419, %v3405, 0
  %v3589 = vsel %vm3419, %v3406, 0
  %v3592 = vsel %vm3419, %v3407, 0
  %v3595 = vsel %vm3419, %v3408, 0
  %v3598 = vsel %vm3419, %v3409, 0
  %v3601 = vsel %vm3419, %v3410, 0
  %v3604 = vsel %vm3419, %v3411, 0
  %v3607 = vsel %vm3419, %v3412, 0
  %v3610 = vsel %vm3419, %v3413, 0
  %vm3612 = vcmask 1043456
  %v3614 = vsel %vm3612, %v3418, 0
  %3616 = vmatprep.subr.mxu0 0.0
  %3617 = vmatpush1.msra.mxu0 %v3414
  %3618 = vmatprep.subr.mxu0 0.0
  %3619 = vmatpush1.msra.mxu0 %v3415
  %3620 = vmatprep.subr.mxu0 0.0
  %3621 = vmatpush1.msra.mxu0 %v3416
  %3622 = vmatprep.subr.mxu0 0.0
  %3623 = vmatpush1.msra.mxu0 %v3417
  %3624 = vmatprep.subr.mxu0 0.0
  %3625 = vmatpush1.msra.mxu0 %v3614
  %3626 = vmatprep.subr.mxu0 0.0
  %3627 = vmatpush1.msra.mxu0 0.0
  %3628 = vmatprep.subr.mxu0 0.0
  %3629 = vmatpush1.msra.mxu0 0.0
  %3630 = vmatprep.subr.mxu0 0.0
  %3631 = vmatpush1.msra.mxu0 0.0
  %3632 = vmatprep.subr.mxu0 0.0
  %3633 = vmatpush1.msra.mxu0 0.0
  %3634 = vmatprep.subr.mxu0 0.0
  %3635 = vmatpush1.msra.mxu0 0.0
  %3636 = vmatprep.subr.mxu0 0.0
  %3637 = vmatpush1.msra.mxu0 0.0
  %3638 = vmatprep.subr.mxu0 0.0
  %3639 = vmatpush1.msra.mxu0 0.0
  %3640 = vmatprep.subr.mxu0 0.0
  %3641 = vmatpush1.msra.mxu0 0.0
  %3642 = vmatprep.subr.mxu0 0.0
  %3643 = vmatpush1.msra.mxu0 0.0
  %3644 = vmatprep.subr.mxu0 0.0
  %3645 = vmatpush1.msra.mxu0 0.0
  %3646 = vmatprep.subr.mxu0 0.0
  %3647 = vmatpush1.msra.mxu0 0.0
  %3648 = vmatprep.subr.mxu0 0.0
  %3649 = vmatpush1.msra.mxu0 0.0
  %3650 = vmatprep.subr.mxu0 0.0
  %3651 = vmatpush1.msra.mxu0 0.0
  %3652 = vmatprep.subr.mxu0 0.0
  %3653 = vmatpush1.msra.mxu0 0.0
  %3654 = vmatprep.subr.mxu0 0.0
  %3655 = vmatpush1.msra.mxu0 0.0
  %3656 = vmatprep.subr.mxu0 0.0
  %3657 = vmatpush1.msra.mxu0 0.0
  %3658 = vmatprep.subr.mxu0 0.0
  %3659 = vmatpush1.msra.mxu0 0.0
  %3660 = vmatprep.subr.mxu0 0.0
  %3661 = vmatpush1.msra.mxu0 0.0
  %3662 = vmatprep.subr.mxu0 0.0
  %3663 = vmatpush1.msra.mxu0 0.0
  %3664 = vmatprep.subr.mxu0 0.0
  %3665 = vmatpush1.msra.mxu0 0.0
  %3666 = vmatprep.subr.mxu0 0.0
  %3667 = vmatpush1.msra.mxu0 0.0
  %3668 = vmatprep.subr.mxu0 0.0
  %3669 = vmatpush1.msra.mxu0 0.0
  %3670 = vmatprep.subr.mxu0 0.0
  %3671 = vmatpush1.msra.mxu0 0.0
  %3672 = vmatprep.subr.mxu0 0.0
  %3673 = vmatpush1.msra.mxu0 0.0
  %3674 = vmatprep.subr.mxu0 0.0
  %3675 = vmatpush1.msra.mxu0 0.0
  %3676 = vmatprep.subr.mxu0 0.0
  %3677 = vmatpush1.msra.mxu0 0.0
  %3678 = vmatprep.subr.mxu0 0.0
  %3679 = vmatpush1.msra.mxu0 0.0
  %3680 = vmatprep.mubr.f32.mxu0 0.0
  %3681 = vmatmul.mubr.f32.gmra.mrb[0].mxu0 %v3421
  %v3682 = vpop.f32.mrb[0].mxu0
  %v3683 = vadd.f32 0.0, %v3682
  %v3684 = vpop.f32.mrb[0].mxu0
  %3685 = vmatprep.mubr.f32.mxu0 0.0
  %3686 = vmatmul.mubr.f32.gmra.mrb[0].mxu0 %v3424
  %v3687 = vpop.f32.mrb[0].mxu0
  %v3688 = vadd.f32 0.0, %v3687
  %v3689 = vpop.f32.mrb[0].mxu0
  %3690 = vmatprep.mubr.f32.mxu0 0.0
  %3691 = vmatmul.mubr.f32.gmra.mrb[0].mxu0 %v3427
  %v3692 = vpop.f32.mrb[0].mxu0
  %v3693 = vadd.f32 0.0, %v3692
  %v3694 = vpop.f32.mrb[0].mxu0
  %3695 = vmatprep.mubr.f32.mxu0 0.0
  %3696 = vmatmul.mubr.f32.gmra.mrb[0].mxu0 %v3430
  %v3697 = vpop.f32.mrb[0].mxu0
  %v3698 = vadd.f32 0.0, %v3697
  %v3699 = vpop.f32.mrb[0].mxu0
  %3700 = vmatprep.mubr.f32.mxu0 0.0
  %3701 = vmatmul.mubr.f32.gmra.mrb[0].mxu0 %v3433
  %v3702 = vpop.f32.mrb[0].mxu0
  %v3703 = vadd.f32 0.0, %v3702
  %v3704 = vpop.f32.mrb[0].mxu0
  %3705 = vmatprep.mubr.f32.mxu0 0.0
  %3706 = vmatmul.mubr.f32.gmra.mrb[0].mxu0 %v3436
  %v3707 = vpop.f32.mrb[0].mxu0
  %v3708 = vadd.f32 0.0, %v3707
  %v3709 = vpop.f32.mrb[0].mxu0
  %3710 = vmatprep.mubr.f32.mxu0 0.0
  %3711 = vmatmul.mubr.f32.gmra.mrb[0].mxu0 %v3439
  %v3712 = vpop.f32.mrb[0].mxu0
  %v3713 = vadd.f32 0.0, %v3712
  %v3714 = vpop.f32.mrb[0].mxu0
  %3715 = vmatprep.mubr.f32.mxu0 0.0
  %3716 = vmatmul.mubr.f32.gmra.mrb[0].mxu0 %v3442
  %v3717 = vpop.f32.mrb[0].mxu0
  %v3718 = vadd.f32 0.0, %v3717
  %v3719 = vpop.f32.mrb[0].mxu0
  %3720 = vmatprep.mubr.f32.mxu0 0.0
  %3721 = vmatmul.mubr.f32.gmra.mrb[0].mxu0 %v3445
  %v3722 = vpop.f32.mrb[0].mxu0
  %v3723 = vadd.f32 0.0, %v3722
  %v3724 = vpop.f32.mrb[0].mxu0
  %3725 = vmatprep.mubr.f32.mxu0 0.0
  %3726 = vmatmul.mubr.f32.gmra.mrb[0].mxu0 %v3448
  %v3727 = vpop.f32.mrb[0].mxu0
  %v3728 = vadd.f32 0.0, %v3727
  %v3729 = vpop.f32.mrb[0].mxu0
  %3730 = vmatprep.mubr.f32.mxu0 0.0
  %3731 = vmatmul.mubr.f32.gmra.mrb[0].mxu0 %v3451
  %v3732 = vpop.f32.mrb[0].mxu0
  %v3733 = vadd.f32 0.0, %v3732
  %v3734 = vpop.f32.mrb[0].mxu0
  %3735 = vmatprep.mubr.f32.mxu0 0.0
  %3736 = vmatmul.mubr.f32.gmra.mrb[0].mxu0 %v3454
  %v3737 = vpop.f32.mrb[0].mxu0
  %v3738 = vadd.f32 0.0, %v3737
  %v3739 = vpop.f32.mrb[0].mxu0
  %3740 = vmatprep.mubr.f32.mxu0 0.0
  %3741 = vmatmul.mubr.f32.gmra.mrb[0].mxu0 %v3457
  %v3742 = vpop.f32.mrb[0].mxu0
  %v3743 = vadd.f32 0.0, %v3742
  %v3744 = vpop.f32.mrb[0].mxu0
  %3745 = vmatprep.mubr.f32.mxu0 0.0
  %3746 = vmatmul.mubr.f32.gmra.mrb[0].mxu0 %v3460
  %v3747 = vpop.f32.mrb[0].mxu0
  %v3748 = vadd.f32 0.0, %v3747
  %v3749 = vpop.f32.mrb[0].mxu0
  %3750 = vmatprep.mubr.f32.mxu0 0.0
  %3751 = vmatmul.mubr.f32.gmra.mrb[0].mxu0 %v3463
  %v3752 = vpop.f32.mrb[0].mxu0
  %v3753 = vadd.f32 0.0, %v3752
  %v3754 = vpop.f32.mrb[0].mxu0
  %3755 = vmatprep.mubr.f32.mxu0 0.0
  %3756 = vmatmul.mubr.f32.gmra.mrb[0].mxu0 %v3466
  %v3757 = vpop.f32.mrb[0].mxu0
  %v3758 = vadd.f32 0.0, %v3757
  %v3759 = vpop.f32.mrb[0].mxu0
  %3760 = vmatprep.mubr.f32.mxu0 0.0
  %3761 = vmatmul.mubr.f32.gmra.mrb[0].mxu0 %v3469
  %v3762 = vpop.f32.mrb[0].mxu0
  %v3763 = vadd.f32 0.0, %v3762
  %v3764 = vpop.f32.mrb[0].mxu0
  %3765 = vmatprep.mubr.f32.mxu0 0.0
  %3766 = vmatmul.mubr.f32.gmra.mrb[0].mxu0 %v3472
  %v3767 = vpop.f32.mrb[0].mxu0
  %v3768 = vadd.f32 0.0, %v3767
  %v3769 = vpop.f32.mrb[0].mxu0
  %3770 = vmatprep.mubr.f32.mxu0 0.0
  %3771 = vmatmul.mubr.f32.gmra.mrb[0].mxu0 %v3475
  %v3772 = vpop.f32.mrb[0].mxu0
  %v3773 = vadd.f32 0.0, %v3772
  %v3774 = vpop.f32.mrb[0].mxu0
  %3775 = vmatprep.mubr.f32.mxu0 0.0
  %3776 = vmatmul.mubr.f32.gmra.mrb[0].mxu0 %v3478
  %v3777 = vpop.f32.mrb[0].mxu0
  %v3778 = vadd.f32 0.0, %v3777
  %v3779 = vpop.f32.mrb[0].mxu0
  %3780 = vmatprep.mubr.f32.mxu0 0.0
  %3781 = vmatmul.mubr.f32.gmra.mrb[0].mxu0 %v3481
  %v3782 = vpop.f32.mrb[0].mxu0
  %v3783 = vadd.f32 0.0, %v3782
  %v3784 = vpop.f32.mrb[0].mxu0
  %3785 = vmatprep.mubr.f32.mxu0 0.0
  %3786 = vmatmul.mubr.f32.gmra.mrb[0].mxu0 %v3484
  %v3787 = vpop.f32.mrb[0].mxu0
  %v3788 = vadd.f32 0.0, %v3787
  %v3789 = vpop.f32.mrb[0].mxu0
  %3790 = vmatprep.mubr.f32.mxu0 0.0
  %3791 = vmatmul.mubr.f32.gmra.mrb[0].mxu0 %v3487
  %v3792 = vpop.f32.mrb[0].mxu0
  %v3793 = vadd.f32 0.0, %v3792
  %v3794 = vpop.f32.mrb[0].mxu0
  %3795 = vmatprep.mubr.f32.mxu0 0.0
  %3796 = vmatmul.mubr.f32.gmra.mrb[0].mxu0 %v3490
  %v3797 = vpop.f32.mrb[0].mxu0
  %v3798 = vadd.f32 0.0, %v3797
  %v3799 = vpop.f32.mrb[0].mxu0
  %3800 = vmatprep.mubr.f32.mxu0 0.0
  %3801 = vmatmul.mubr.f32.gmra.mrb[0].mxu0 %v3493
  %v3802 = vpop.f32.mrb[0].mxu0
  %v3803 = vadd.f32 0.0, %v3802
  %v3804 = vpop.f32.mrb[0].mxu0
  %3805 = vmatprep.mubr.f32.mxu0 0.0
  %3806 = vmatmul.mubr.f32.gmra.mrb[0].mxu0 %v3496
  %v3807 = vpop.f32.mrb[0].mxu0
  %v3808 = vadd.f32 0.0, %v3807
  %v3809 = vpop.f32.mrb[0].mxu0
  %3810 = vmatprep.mubr.f32.mxu0 0.0
  %3811 = vmatmul.mubr.f32.gmra.mrb[0].mxu0 %v3499
  %v3812 = vpop.f32.mrb[0].mxu0
  %v3813 = vadd.f32 0.0, %v3812
  %v3814 = vpop.f32.mrb[0].mxu0
  %3815 = vmatprep.mubr.f32.mxu0 0.0
  %3816 = vmatmul.mubr.f32.gmra.mrb[0].mxu0 %v3502
  %v3817 = vpop.f32.mrb[0].mxu0
  %v3818 = vadd.f32 0.0, %v3817
  %v3819 = vpop.f32.mrb[0].mxu0
  %3820 = vmatprep.mubr.f32.mxu0 0.0
  %3821 = vmatmul.mubr.f32.gmra.mrb[0].mxu0 %v3505
  %v3822 = vpop.f32.mrb[0].mxu0
  %v3823 = vadd.f32 0.0, %v3822
  %v3824 = vpop.f32.mrb[0].mxu0
  %3825 = vmatprep.mubr.f32.mxu0 0.0
  %3826 = vmatmul.mubr.f32.gmra.mrb[0].mxu0 %v3508
  %v3827 = vpop.f32.mrb[0].mxu0
  %v3828 = vadd.f32 0.0, %v3827
  %v3829 = vpop.f32.mrb[0].mxu0
  %3830 = vmatprep.mubr.f32.mxu0 0.0
  %3831 = vmatmul.mubr.f32.gmra.mrb[0].mxu0 %v3511
  %v3832 = vpop.f32.mrb[0].mxu0
  %v3833 = vadd.f32 0.0, %v3832
  %v3834 = vpop.f32.mrb[0].mxu0
  %3835 = vmatprep.mubr.f32.mxu0 0.0
  %3836 = vmatmul.mubr.f32.gmra.mrb[0].mxu0 %v3514
  %v3837 = vpop.f32.mrb[0].mxu0
  %v3838 = vadd.f32 0.0, %v3837
  %v3839 = vpop.f32.mrb[0].mxu0
  %3840 = vmatprep.mubr.f32.mxu0 0.0
  %3841 = vmatmul.mubr.f32.gmra.mrb[0].mxu0 %v3517
  %v3842 = vpop.f32.mrb[0].mxu0
  %v3843 = vadd.f32 0.0, %v3842
  %v3844 = vpop.f32.mrb[0].mxu0
  %3845 = vmatprep.mubr.f32.mxu0 0.0
  %3846 = vmatmul.mubr.f32.gmra.mrb[0].mxu0 %v3520
  %v3847 = vpop.f32.mrb[0].mxu0
  %v3848 = vadd.f32 0.0, %v3847
  %v3849 = vpop.f32.mrb[0].mxu0
  %3850 = vmatprep.mubr.f32.mxu0 0.0
  %3851 = vmatmul.mubr.f32.gmra.mrb[0].mxu0 %v3523
  %v3852 = vpop.f32.mrb[0].mxu0
  %v3853 = vadd.f32 0.0, %v3852
  %v3854 = vpop.f32.mrb[0].mxu0
  %3855 = vmatprep.mubr.f32.mxu0 0.0
  %3856 = vmatmul.mubr.f32.gmra.mrb[0].mxu0 %v3526
  %v3857 = vpop.f32.mrb[0].mxu0
  %v3858 = vadd.f32 0.0, %v3857
  %v3859 = vpop.f32.mrb[0].mxu0
  %3860 = vmatprep.mubr.f32.mxu0 0.0
  %3861 = vmatmul.mubr.f32.gmra.mrb[0].mxu0 %v3529
  %v3862 = vpop.f32.mrb[0].mxu0
  %v3863 = vadd.f32 0.0, %v3862
  %v3864 = vpop.f32.mrb[0].mxu0
  %3865 = vmatprep.mubr.f32.mxu0 0.0
  %3866 = vmatmul.mubr.f32.gmra.mrb[0].mxu0 %v3532
  %v3867 = vpop.f32.mrb[0].mxu0
  %v3868 = vadd.f32 0.0, %v3867
  %v3869 = vpop.f32.mrb[0].mxu0
  %3870 = vmatprep.mubr.f32.mxu0 0.0
  %3871 = vmatmul.mubr.f32.gmra.mrb[0].mxu0 %v3535
  %v3872 = vpop.f32.mrb[0].mxu0
  %v3873 = vadd.f32 0.0, %v3872
  %v3874 = vpop.f32.mrb[0].mxu0
  %3875 = vmatprep.mubr.f32.mxu0 0.0
  %3876 = vmatmul.mubr.f32.gmra.mrb[0].mxu0 %v3538
  %v3877 = vpop.f32.mrb[0].mxu0
  %v3878 = vadd.f32 0.0, %v3877
  %v3879 = vpop.f32.mrb[0].mxu0
  %3880 = vmatprep.mubr.f32.mxu0 0.0
  %3881 = vmatmul.mubr.f32.gmra.mrb[0].mxu0 %v3541
  %v3882 = vpop.f32.mrb[0].mxu0
  %v3883 = vadd.f32 0.0, %v3882
  %v3884 = vpop.f32.mrb[0].mxu0
  %3885 = vmatprep.mubr.f32.mxu0 0.0
  %3886 = vmatmul.mubr.f32.gmra.mrb[0].mxu0 %v3544
  %v3887 = vpop.f32.mrb[0].mxu0
  %v3888 = vadd.f32 0.0, %v3887
  %v3889 = vpop.f32.mrb[0].mxu0
  %3890 = vmatprep.mubr.f32.mxu0 0.0
  %3891 = vmatmul.mubr.f32.gmra.mrb[0].mxu0 %v3547
  %v3892 = vpop.f32.mrb[0].mxu0
  %v3893 = vadd.f32 0.0, %v3892
  %v3894 = vpop.f32.mrb[0].mxu0
  %3895 = vmatprep.mubr.f32.mxu0 0.0
  %3896 = vmatmul.mubr.f32.gmra.mrb[0].mxu0 %v3550
  %v3897 = vpop.f32.mrb[0].mxu0
  %v3898 = vadd.f32 0.0, %v3897
  %v3899 = vpop.f32.mrb[0].mxu0
  %3900 = vmatprep.mubr.f32.mxu0 0.0
  %3901 = vmatmul.mubr.f32.gmra.mrb[0].mxu0 %v3553
  %v3902 = vpop.f32.mrb[0].mxu0
  %v3903 = vadd.f32 0.0, %v3902
  %v3904 = vpop.f32.mrb[0].mxu0
  %3905 = vmatprep.mubr.f32.mxu0 0.0
  %3906 = vmatmul.mubr.f32.gmra.mrb[0].mxu0 %v3556
  %v3907 = vpop.f32.mrb[0].mxu0
  %v3908 = vadd.f32 0.0, %v3907
  %v3909 = vpop.f32.mrb[0].mxu0
  %3910 = vmatprep.mubr.f32.mxu0 0.0
  %3911 = vmatmul.mubr.f32.gmra.mrb[0].mxu0 %v3559
  %v3912 = vpop.f32.mrb[0].mxu0
  %v3913 = vadd.f32 0.0, %v3912
  %v3914 = vpop.f32.mrb[0].mxu0
  %3915 = vmatprep.mubr.f32.mxu0 0.0
  %3916 = vmatmul.mubr.f32.gmra.mrb[0].mxu0 %v3562
  %v3917 = vpop.f32.mrb[0].mxu0
  %v3918 = vadd.f32 0.0, %v3917
  %v3919 = vpop.f32.mrb[0].mxu0
  %3920 = vmatprep.mubr.f32.mxu0 0.0
  %3921 = vmatmul.mubr.f32.gmra.mrb[0].mxu0 %v3565
  %v3922 = vpop.f32.mrb[0].mxu0
  %v3923 = vadd.f32 0.0, %v3922
  %v3924 = vpop.f32.mrb[0].mxu0
  %3925 = vmatprep.mubr.f32.mxu0 0.0
  %3926 = vmatmul.mubr.f32.gmra.mrb[0].mxu0 %v3568
  %v3927 = vpop.f32.mrb[0].mxu0
  %v3928 = vadd.f32 0.0, %v3927
  %v3929 = vpop.f32.mrb[0].mxu0
  %3930 = vmatprep.mubr.f32.mxu0 0.0
  %3931 = vmatmul.mubr.f32.gmra.mrb[0].mxu0 %v3571
  %v3932 = vpop.f32.mrb[0].mxu0
  %v3933 = vadd.f32 0.0, %v3932
  %v3934 = vpop.f32.mrb[0].mxu0
  %3935 = vmatprep.mubr.f32.mxu0 0.0
  %3936 = vmatmul.mubr.f32.gmra.mrb[0].mxu0 %v3574
  %v3937 = vpop.f32.mrb[0].mxu0
  %v3938 = vadd.f32 0.0, %v3937
  %v3939 = vpop.f32.mrb[0].mxu0
  %3940 = vmatprep.mubr.f32.mxu0 0.0
  %3941 = vmatmul.mubr.f32.gmra.mrb[0].mxu0 %v3577
  %v3942 = vpop.f32.mrb[0].mxu0
  %v3943 = vadd.f32 0.0, %v3942
  %v3944 = vpop.f32.mrb[0].mxu0
  %3945 = vmatprep.mubr.f32.mxu0 0.0
  %3946 = vmatmul.mubr.f32.gmra.mrb[0].mxu0 %v3580
  %v3947 = vpop.f32.mrb[0].mxu0
  %v3948 = vadd.f32 0.0, %v3947
  %v3949 = vpop.f32.mrb[0].mxu0
  %3950 = vmatprep.mubr.f32.mxu0 0.0
  %3951 = vmatmul.mubr.f32.gmra.mrb[0].mxu0 %v3583
  %v3952 = vpop.f32.mrb[0].mxu0
  %v3953 = vadd.f32 0.0, %v3952
  %v3954 = vpop.f32.mrb[0].mxu0
  %3955 = vmatprep.mubr.f32.mxu0 0.0
  %3956 = vmatmul.mubr.f32.gmra.mrb[0].mxu0 %v3586
  %v3957 = vpop.f32.mrb[0].mxu0
  %v3958 = vadd.f32 0.0, %v3957
  %v3959 = vpop.f32.mrb[0].mxu0
  %3960 = vmatprep.mubr.f32.mxu0 0.0
  %3961 = vmatmul.mubr.f32.gmra.mrb[0].mxu0 %v3589
  %v3962 = vpop.f32.mrb[0].mxu0
  %v3963 = vadd.f32 0.0, %v3962
  %v3964 = vpop.f32.mrb[0].mxu0
  %3965 = vmatprep.mubr.f32.mxu0 0.0
  %3966 = vmatmul.mubr.f32.gmra.mrb[0].mxu0 %v3592
  %v3967 = vpop.f32.mrb[0].mxu0
  %v3968 = vadd.f32 0.0, %v3967
  %v3969 = vpop.f32.mrb[0].mxu0
  %3970 = vmatprep.mubr.f32.mxu0 0.0
  %3971 = vmatmul.mubr.f32.gmra.mrb[0].mxu0 %v3595
  %v3972 = vpop.f32.mrb[0].mxu0
  %v3973 = vadd.f32 0.0, %v3972
  %v3974 = vpop.f32.mrb[0].mxu0
  %3975 = vmatprep.mubr.f32.mxu0 0.0
  %3976 = vmatmul.mubr.f32.gmra.mrb[0].mxu0 %v3598
  %v3977 = vpop.f32.mrb[0].mxu0
  %v3978 = vadd.f32 0.0, %v3977
  %v3979 = vpop.f32.mrb[0].mxu0
  %3980 = vmatprep.mubr.f32.mxu0 0.0
  %3981 = vmatmul.mubr.f32.gmra.mrb[0].mxu0 %v3601
  %v3982 = vpop.f32.mrb[0].mxu0
  %v3983 = vadd.f32 0.0, %v3982
  %v3984 = vpop.f32.mrb[0].mxu0
  %3985 = vmatprep.mubr.f32.mxu0 0.0
  %3986 = vmatmul.mubr.f32.gmra.mrb[0].mxu0 %v3604
  %v3987 = vpop.f32.mrb[0].mxu0
  %v3988 = vadd.f32 0.0, %v3987
  %v3989 = vpop.f32.mrb[0].mxu0
  %3990 = vmatprep.mubr.f32.mxu0 0.0
  %3991 = vmatmul.mubr.f32.gmra.mrb[0].mxu0 %v3607
  %v3992 = vpop.f32.mrb[0].mxu0
  %v3993 = vadd.f32 0.0, %v3992
  %v3994 = vpop.f32.mrb[0].mxu0
  %3995 = vmatprep.mubr.f32.mxu0 0.0
  %3996 = vmatmul.mubr.f32.gmra.mrb[0].mxu0 %v3610
  %v3997 = vpop.f32.mrb[0].mxu0
  %v3998 = vadd.f32 0.0, %v3997
  %v3999 = vpop.f32.mrb[0].mxu0
  %4000 = vdwg.mxu0
  %4001 = vxpose.xlu0.b32.start [1/16] %v3683, 128
  %4002 = vxpose.xlu0.b32.cont [2/16] %v3688, 128
  %4003 = vxpose.xlu0.b32.cont [3/16] %v3693, 128
  %4004 = vxpose.xlu0.b32.cont [4/16] %v3698, 128
  %4005 = vxpose.xlu0.b32.cont [5/16] %v3703, 128
  %4006 = vxpose.xlu0.b32.cont [6/16] %v3708, 128
  %4007 = vxpose.xlu0.b32.cont [7/16] %v3713, 128
  %4008 = vxpose.xlu0.b32.cont [8/16] %v3718, 128
  %4009 = vxpose.xlu0.b32.cont [9/16] %v3723, 128
  %4010 = vxpose.xlu0.b32.cont [10/16] %v3728, 128
  %4011 = vxpose.xlu0.b32.cont [11/16] %v3733, 128
  %4012 = vxpose.xlu0.b32.cont [12/16] %v3738, 128
  %4013 = vxpose.xlu0.b32.cont [13/16] %v3743, 128
  %4014 = vxpose.xlu0.b32.cont [14/16] %v3748, 128
  %4015 = vxpose.xlu0.b32.cont [15/16] %v3753, 128
  %4016 = vxpose.xlu0.b32.end [16/16] %v3758, 128
  %v4017 = vpop.trf.xlu0
  %v4018 = vpop.trf.xlu0
  %v4019 = vpop.trf.xlu0
  %v4020 = vpop.trf.xlu0
  %v4021 = vpop.trf.xlu0
  %v4022 = vpop.trf.xlu0
  %v4023 = vpop.trf.xlu0
  %v4024 = vpop.trf.xlu0
  %v4025 = vpop.trf.xlu0
  %v4026 = vpop.trf.xlu0
  %v4027 = vpop.trf.xlu0
  %v4028 = vpop.trf.xlu0
  %v4029 = vpop.trf.xlu0
  %v4030 = vpop.trf.xlu0
  %v4031 = vpop.trf.xlu0
  %v4032 = vpop.trf.xlu0
  %4033 = vxpose.xlu0.b32.start [1/16] %v3763, 128
  %4034 = vxpose.xlu0.b32.cont [2/16] %v3768, 128
  %4035 = vxpose.xlu0.b32.cont [3/16] %v3773, 128
  %4036 = vxpose.xlu0.b32.cont [4/16] %v3778, 128
  %4037 = vxpose.xlu0.b32.cont [5/16] %v3783, 128
  %4038 = vxpose.xlu0.b32.cont [6/16] %v3788, 128
  %4039 = vxpose.xlu0.b32.cont [7/16] %v3793, 128
  %4040 = vxpose.xlu0.b32.cont [8/16] %v3798, 128
  %4041 = vxpose.xlu0.b32.cont [9/16] %v3803, 128
  %4042 = vxpose.xlu0.b32.cont [10/16] %v3808, 128
  %4043 = vxpose.xlu0.b32.cont [11/16] %v3813, 128
  %4044 = vxpose.xlu0.b32.cont [12/16] %v3818, 128
  %4045 = vxpose.xlu0.b32.cont [13/16] %v3823, 128
  %4046 = vxpose.xlu0.b32.cont [14/16] %v3828, 128
  %4047 = vxpose.xlu0.b32.cont [15/16] %v3833, 128
  %4048 = vxpose.xlu0.b32.end [16/16] %v3838, 128
  %v4049 = vpop.trf.xlu0
  %v4050 = vpop.trf.xlu0
  %v4051 = vpop.trf.xlu0
  %v4052 = vpop.trf.xlu0
  %v4053 = vpop.trf.xlu0
  %v4054 = vpop.trf.xlu0
  %v4055 = vpop.trf.xlu0
  %v4056 = vpop.trf.xlu0
  %v4057 = vpop.trf.xlu0
  %v4058 = vpop.trf.xlu0
  %v4059 = vpop.trf.xlu0
  %v4060 = vpop.trf.xlu0
  %v4061 = vpop.trf.xlu0
  %v4062 = vpop.trf.xlu0
  %v4063 = vpop.trf.xlu0
  %v4064 = vpop.trf.xlu0
  %4065 = vxpose.xlu0.b32.start [1/16] %v3843, 128
  %4066 = vxpose.xlu0.b32.cont [2/16] %v3848, 128
  %4067 = vxpose.xlu0.b32.cont [3/16] %v3853, 128
  %4068 = vxpose.xlu0.b32.cont [4/16] %v3858, 128
  %4069 = vxpose.xlu0.b32.cont [5/16] %v3863, 128
  %4070 = vxpose.xlu0.b32.cont [6/16] %v3868, 128
  %4071 = vxpose.xlu0.b32.cont [7/16] %v3873, 128
  %4072 = vxpose.xlu0.b32.cont [8/16] %v3878, 128
  %4073 = vxpose.xlu0.b32.cont [9/16] %v3883, 128
  %4074 = vxpose.xlu0.b32.cont [10/16] %v3888, 128
  %4075 = vxpose.xlu0.b32.cont [11/16] %v3893, 128
  %4076 = vxpose.xlu0.b32.cont [12/16] %v3898, 128
  %4077 = vxpose.xlu0.b32.cont [13/16] %v3903, 128
  %4078 = vxpose.xlu0.b32.cont [14/16] %v3908, 128
  %4079 = vxpose.xlu0.b32.cont [15/16] %v3913, 128
  %4080 = vxpose.xlu0.b32.end [16/16] %v3918, 128
  %v4081 = vpop.trf.xlu0
  %v4082 = vpop.trf.xlu0
  %v4083 = vpop.trf.xlu0
  %v4084 = vpop.trf.xlu0
  %v4085 = vpop.trf.xlu0
  %v4086 = vpop.trf.xlu0
  %v4087 = vpop.trf.xlu0
  %v4088 = vpop.trf.xlu0
  %v4089 = vpop.trf.xlu0
  %v4090 = vpop.trf.xlu0
  %v4091 = vpop.trf.xlu0
  %v4092 = vpop.trf.xlu0
  %v4093 = vpop.trf.xlu0
  %v4094 = vpop.trf.xlu0
  %v4095 = vpop.trf.xlu0
  %v4096 = vpop.trf.xlu0
  %4097 = vxpose.xlu0.b32.start [1/16] %v3923, 128
  %4098 = vxpose.xlu0.b32.cont [2/16] %v3928, 128
  %4099 = vxpose.xlu0.b32.cont [3/16] %v3933, 128
  %4100 = vxpose.xlu0.b32.cont [4/16] %v3938, 128
  %4101 = vxpose.xlu0.b32.cont [5/16] %v3943, 128
  %4102 = vxpose.xlu0.b32.cont [6/16] %v3948, 128
  %4103 = vxpose.xlu0.b32.cont [7/16] %v3953, 128
  %4104 = vxpose.xlu0.b32.cont [8/16] %v3958, 128
  %4105 = vxpose.xlu0.b32.cont [9/16] %v3963, 128
  %4106 = vxpose.xlu0.b32.cont [10/16] %v3968, 128
  %4107 = vxpose.xlu0.b32.cont [11/16] %v3973, 128
  %4108 = vxpose.xlu0.b32.cont [12/16] %v3978, 128
  %4109 = vxpose.xlu0.b32.cont [13/16] %v3983, 128
  %4110 = vxpose.xlu0.b32.cont [14/16] %v3988, 128
  %4111 = vxpose.xlu0.b32.cont [15/16] %v3993, 128
  %4112 = vxpose.xlu0.b32.end [16/16] %v3998, 128
  %v4113 = vpop.trf.xlu0
  %v4114 = vpop.trf.xlu0
  %v4115 = vpop.trf.xlu0
  %v4116 = vpop.trf.xlu0
  %v4117 = vpop.trf.xlu0
  %v4118 = vpop.trf.xlu0
  %v4119 = vpop.trf.xlu0
  %v4120 = vpop.trf.xlu0
  %v4121 = vpop.trf.xlu0
  %v4122 = vpop.trf.xlu0
  %v4123 = vpop.trf.xlu0
  %v4124 = vpop.trf.xlu0
  %v4125 = vpop.trf.xlu0
  %v4126 = vpop.trf.xlu0
  %v4127 = vpop.trf.xlu0
  %v4128 = vpop.trf.xlu0
  %v4129 = vsel %vm3612, %v4017, 0.0
  %v4130 = vsel %vm3612, %v4049, 0.0
  %v4131 = vadd.f32 %v4129, %v4130
  %v4132 = vsel %vm3612, %v4081, 0.0
  %v4133 = vadd.f32 %v4131, %v4132
  %v4134 = vsel %vm3612, %v4113, 0.0
  %v4135 = vadd.f32 %v4133, %v4134
  %4136 = vadd.xlane.f32.xlu0 %v4135
  %v4137 = vpop.xlane.xlu0 %4136
  %v4138 = vrcp.pop 512.0
  %v4139 = vmul.f32 %v4137, %v4138
  %v4140 = vsub.f32 %v4017, %v4139
  %v4141 = vsub.f32 %v4049, %v4139
  %v4142 = vsub.f32 %v4081, %v4139
  %v4143 = vsub.f32 %v4113, %v4139
  %v4144 = vmul.f32 %v4140, %v4140
  %v4145 = vmul.f32 %v4141, %v4141
  %v4146 = vmul.f32 %v4142, %v4142
  %v4147 = vmul.f32 %v4143, %v4143
  %v4148 = vsel %vm3612, %v4144, 0.0
  %v4149 = vsel %vm3612, %v4145, 0.0
  %v4150 = vadd.f32 %v4148, %v4149
  %v4151 = vsel %vm3612, %v4146, 0.0
  %v4152 = vadd.f32 %v4150, %v4151
  %v4153 = vsel %vm3612, %v4147, 0.0
  %v4154 = vadd.f32 %v4152, %v4153
  %4155 = vadd.xlane.f32.xlu0 %v4154
  %v4156 = vpop.xlane.xlu0 %4155
  %v4157 = vmul.f32 %v4156, %v4138
  %v4158 = vadd.f32 %v4157, 1e-05
  %v4159 = vrsqrt.pop %v4158
  %v4160 = vmul.f32 %v4140, %v4159
  %v4161 = vmul.f32 %v4141, %v4159
  %v4162 = vmul.f32 %v4142, %v4159
  %v4163 = vmul.f32 %v4143, %v4159
  %v4164 = vld [vmem:[%s4] sm:$0xf]
  %4166 = vset.pattern.permute.xlu0 0
  %4167 = vperm.xlu0 %4166, %v4164
  %v4168 = vpop.permute.xlu0 %4167
  %v4170 = vmul.f32 %v4160, %v4168
  %v4171 = vmul.f32 %v4161, %v4168
  %v4172 = vmul.f32 %v4162, %v4168
  %v4173 = vmul.f32 %v4163, %v4168
  %v4174 = vld [vmem:[%s5] sm:$0xf]
  %4176 = vset.pattern.permute.xlu0 0
  %4177 = vperm.xlu0 %4176, %v4174
  %v4178 = vpop.permute.xlu0 %4177
  %v4180 = vadd.f32 %v4170, %v4178
  %v4181 = vadd.f32 %v4171, %v4178
  %v4182 = vadd.f32 %v4172, %v4178
  %v4183 = vadd.f32 %v4173, %v4178
  %v4184 = vmax.f32 %v4180, 0.0
  %v4185 = vmax.f32 %v4181, 0.0
  %v4186 = vmax.f32 %v4182, 0.0
  %v4187 = vmax.f32 %v4183, 0.0
  %v4190 = vcombine.low %v4184, %v4185
  %4192 = vst [vmem:[%s8] sm:$0xff] %v4190
  %v4195 = vcombine.low %v4186, %v4187
  %s4197 = scalar_lea.vmem %s8, 8
  %4198 = vst [vmem:[%s4197] sm:$0xff] %v4195
  %4199 = vst.msk [vmem:[#allocation3] sm:$0xff] %vm31, 0.0
  %4200 = vst.msk [vmem:[#allocation3 + $0x8] sm:$0x3] %vm34, 0.0
  %4201 = vst.msk [vmem:[#allocation3 + $0x10] sm:$0xff] %vm31, 0.0
  %4202 = vst.msk [vmem:[#allocation3 + $0x18] sm:$0x3] %vm34, 0.0
  %4203 = vst.msk [vmem:[#allocation3 + $0x20] sm:$0xff] %vm31, 0.0
  %4204 = vst.msk [vmem:[#allocation3 + $0x28] sm:$0x3] %vm34, 0.0
  %4205 = vst.msk [vmem:[#allocation3 + $0x30] sm:$0xff] %vm31, 0.0
  %4206 = vst.msk [vmem:[#allocation3 + $0x38] sm:$0x3] %vm34, 0.0
  %4207 = vst.msk [vmem:[#allocation3 + $0x40] sm:$0xff] %vm31, 0.0
  %4208 = vst.msk [vmem:[#allocation3 + $0x48] sm:$0x3] %vm34, 0.0
  %4209 = vst.msk [vmem:[#allocation3 + $0x50] sm:$0xff] %vm31, 0.0
  %4210 = vst.msk [vmem:[#allocation3 + $0x58] sm:$0x3] %vm34, 0.0
  %4211 = vst.msk [vmem:[#allocation3 + $0x60] sm:$0xff] %vm31, 0.0
  %4212 = vst.msk [vmem:[#allocation3 + $0x68] sm:$0x3] %vm34, 0.0
  %4213 = vst.msk [vmem:[#allocation3 + $0x70] sm:$0xff] %vm31, 0.0
  %4214 = vst.msk [vmem:[#allocation3 + $0x78] sm:$0x3] %vm34, 0.0
  %4215 = vst.msk [vmem:[#allocation3 + $0x80] sm:$0xff] %vm31, 0.0
  %4216 = vst.msk [vmem:[#allocation3 + $0x88] sm:$0x3] %vm34, 0.0
  %4217 = vst.msk [vmem:[#allocation3 + $0x90] sm:$0xff] %vm31, 0.0
  %4218 = vst.msk [vmem:[#allocation3 + $0x98] sm:$0x3] %vm34, 0.0
  %4219 = vst.msk [vmem:[#allocation3 + $0xa0] sm:$0xff] %vm31, 0.0
  %4220 = vst.msk [vmem:[#allocation3 + $0xa8] sm:$0x3] %vm34, 0.0
  %4221 = vst.msk [vmem:[#allocation3 + $0xb0] sm:$0xff] %vm31, 0.0
  %4222 = vst.msk [vmem:[#allocation3 + $0xb8] sm:$0x3] %vm34, 0.0
  %4223 = vst.msk [vmem:[#allocation3 + $0xc0] sm:$0xff] %vm31, 0.0
  %4224 = vst.msk [vmem:[#allocation3 + $0xc8] sm:$0x3] %vm34, 0.0
  %4225 = vst.msk [vmem:[#allocation3 + $0xd0] sm:$0xff] %vm31, 0.0
  %4226 = vst.msk [vmem:[#allocation3 + $0xd8] sm:$0x3] %vm34, 0.0
  %4227 = vst.msk [vmem:[#allocation3 + $0xe0] sm:$0xff] %vm31, 0.0
  %4228 = vst.msk [vmem:[#allocation3 + $0xe8] sm:$0x3] %vm34, 0.0
  %4229 = vst.msk [vmem:[#allocation3 + $0xf0] sm:$0xff] %vm31, 0.0
  %4230 = vst.msk [vmem:[#allocation3 + $0xf8] sm:$0x3] %vm34, 0.0
  %4231 = vst.msk [vmem:[#allocation3 + $0x100] sm:$0xff] %vm31, 0.0
  %4232 = vst.msk [vmem:[#allocation3 + $0x108] sm:$0x3] %vm34, 0.0
  %4233 = vst.msk [vmem:[#allocation3 + $0x110] sm:$0xff] %vm31, 0.0
  %4234 = vst.msk [vmem:[#allocation3 + $0x118] sm:$0x3] %vm34, 0.0
  %4235 = vst.msk [vmem:[#allocation3 + $0x120] sm:$0xff] %vm31, 0.0
  %4236 = vst.msk [vmem:[#allocation3 + $0x128] sm:$0x3] %vm34, 0.0
  %4237 = vst.msk [vmem:[#allocation3 + $0x130] sm:$0xff] %vm31, 0.0
  %4238 = vst.msk [vmem:[#allocation3 + $0x138] sm:$0x3] %vm34, 0.0
  %v4239 = vld [vmem:[%s1] sm:$0xff]
  %v4240 = vld [vmem:[%s1 + $0x8] sm:$0xff]
  %v4241 = vld [vmem:[%s1 + $0x10] sm:$0xff]
  %v4242 = vld [vmem:[%s1 + $0x18] sm:$0xff]
  %v4243 = vld [vmem:[%s1 + $0x20] sm:$0xff]
  %v4244 = vld [vmem:[%s1 + $0x28] sm:$0xff]
  %v4245 = vld [vmem:[%s1 + $0x30] sm:$0xff]
  %v4246 = vld [vmem:[%s1 + $0x38] sm:$0xff]
  %v4247 = vld [vmem:[%s1 + $0x40] sm:$0xff]
  %v4248 = vld [vmem:[%s1 + $0x48] sm:$0xff]
  %v4249 = vld [vmem:[%s1 + $0x50] sm:$0xff]
  %v4250 = vld [vmem:[%s1 + $0x58] sm:$0xff]
  %v4251 = vld [vmem:[%s1 + $0x60] sm:$0xff]
  %v4252 = vld [vmem:[%s1 + $0x68] sm:$0xff]
  %v4253 = vld [vmem:[%s1 + $0x70] sm:$0xff]
  %v4254 = vld [vmem:[%s1 + $0x78] sm:$0xff]
  %s4255 = scalar_lea.vmem [#allocation3], 16
  %4256 = vst.msk [vmem:[%s4255 + $0x1] sm:$0xff] %vm31, %v4239
  %4257 = vst.msk [vmem:[%s4255 + $0x11] sm:$0xff] %vm31, %v4240
  %4258 = vst.msk [vmem:[%s4255 + $0x21] sm:$0xff] %vm31, %v4241
  %4259 = vst.msk [vmem:[%s4255 + $0x31] sm:$0xff] %vm31, %v4242
  %4260 = vst.msk [vmem:[%s4255 + $0x41] sm:$0xff] %vm31, %v4243
  %4261 = vst.msk [vmem:[%s4255 + $0x51] sm:$0xff] %vm31, %v4244
  %4262 = vst.msk [vmem:[%s4255 + $0x61] sm:$0xff] %vm31, %v4245
  %4263 = vst.msk [vmem:[%s4255 + $0x71] sm:$0xff] %vm31, %v4246
  %4264 = vst.msk [vmem:[%s4255 + $0xa1] sm:$0xff] %vm31, %v4247
  %4265 = vst.msk [vmem:[%s4255 + $0xb1] sm:$0xff] %vm31, %v4248
  %4266 = vst.msk [vmem:[%s4255 + $0xc1] sm:$0xff] %vm31, %v4249
  %4267 = vst.msk [vmem:[%s4255 + $0xd1] sm:$0xff] %vm31, %v4250
  %4268 = vst.msk [vmem:[%s4255 + $0xe1] sm:$0xff] %vm31, %v4251
  %4269 = vst.msk [vmem:[%s4255 + $0xf1] sm:$0xff] %vm31, %v4252
  %4270 = vst.msk [vmem:[%s4255 + $0x101] sm:$0xff] %vm31, %v4253
  %4271 = vst.msk [vmem:[%s4255 + $0x111] sm:$0xff] %vm31, %v4254
  %v4272 = vld [vmem:[#allocation3] sm:$0xff]
  %v4273 = vld [vmem:[#allocation3 + $0x10] sm:$0xff]
  %v4274 = vld [vmem:[#allocation3 + $0x20] sm:$0xff]
  %v4275 = vld [vmem:[#allocation3 + $0x30] sm:$0xff]
  %v4276 = vld [vmem:[#allocation3 + $0x40] sm:$0xff]
  %v4277 = vld [vmem:[#allocation3 + $0x50] sm:$0xff]
  %v4278 = vld [vmem:[#allocation3 + $0x60] sm:$0xff]
  %v4279 = vld [vmem:[#allocation3 + $0x70] sm:$0xff]
  %v4280 = vld [vmem:[#allocation3 + $0xa0] sm:$0xff]
  %v4281 = vld [vmem:[#allocation3 + $0xb0] sm:$0xff]
  %v4282 = vld [vmem:[#allocation3 + $0xc0] sm:$0xff]
  %v4283 = vld [vmem:[#allocation3 + $0xd0] sm:$0xff]
  %v4284 = vld [vmem:[#allocation3 + $0xe0] sm:$0xff]
  %v4285 = vld [vmem:[#allocation3 + $0xf0] sm:$0xff]
  %v4286 = vld [vmem:[#allocation3 + $0x100] sm:$0xff]
  %v4287 = vld [vmem:[#allocation3 + $0x110] sm:$0xff]
  %v4288 = vld [vmem:[#allocation3 + $0x1] sm:$0xff]
  %v4289 = vld [vmem:[#allocation3 + $0x11] sm:$0xff]
  %v4290 = vld [vmem:[#allocation3 + $0x21] sm:$0xff]
  %v4291 = vld [vmem:[#allocation3 + $0x31] sm:$0xff]
  %v4292 = vld [vmem:[#allocation3 + $0x41] sm:$0xff]
  %v4293 = vld [vmem:[#allocation3 + $0x51] sm:$0xff]
  %v4294 = vld [vmem:[#allocation3 + $0x61] sm:$0xff]
  %v4295 = vld [vmem:[#allocation3 + $0x71] sm:$0xff]
  %v4296 = vld [vmem:[#allocation3 + $0xa1] sm:$0xff]
  %v4297 = vld [vmem:[#allocation3 + $0xb1] sm:$0xff]
  %v4298 = vld [vmem:[#allocation3 + $0xc1] sm:$0xff]
  %v4299 = vld [vmem:[#allocation3 + $0xd1] sm:$0xff]
  %v4300 = vld [vmem:[#allocation3 + $0xe1] sm:$0xff]
  %v4301 = vld [vmem:[#allocation3 + $0xf1] sm:$0xff]
  %v4302 = vld [vmem:[#allocation3 + $0x101] sm:$0xff]
  %v4303 = vld [vmem:[#allocation3 + $0x111] sm:$0xff]
  %v4304 = vld [vmem:[#allocation3 + $0x2] sm:$0xff]
  %v4305 = vld [vmem:[#allocation3 + $0x12] sm:$0xff]
  %v4306 = vld [vmem:[#allocation3 + $0x22] sm:$0xff]
  %v4307 = vld [vmem:[#allocation3 + $0x32] sm:$0xff]
  %v4308 = vld [vmem:[#allocation3 + $0x42] sm:$0xff]
  %v4309 = vld [vmem:[#allocation3 + $0x52] sm:$0xff]
  %v4310 = vld [vmem:[#allocation3 + $0x62] sm:$0xff]
  %v4311 = vld [vmem:[#allocation3 + $0x72] sm:$0xff]
  %v4312 = vld [vmem:[#allocation3 + $0xa2] sm:$0xff]
  %v4313 = vld [vmem:[#allocation3 + $0xb2] sm:$0xff]
  %v4314 = vld [vmem:[#allocation3 + $0xc2] sm:$0xff]
  %v4315 = vld [vmem:[#allocation3 + $0xd2] sm:$0xff]
  %v4316 = vld [vmem:[#allocation3 + $0xe2] sm:$0xff]
  %v4317 = vld [vmem:[#allocation3 + $0xf2] sm:$0xff]
  %v4318 = vld [vmem:[#allocation3 + $0x102] sm:$0xff]
  %v4319 = vld [vmem:[#allocation3 + $0x112] sm:$0xff]
  %v4320 = vld [vmem:[%s4255] sm:$0xff]
  %v4321 = vld [vmem:[%s4255 + $0x10] sm:$0xff]
  %v4322 = vld [vmem:[%s4255 + $0x20] sm:$0xff]
  %v4323 = vld [vmem:[%s4255 + $0x30] sm:$0xff]
  %v4324 = vld [vmem:[%s4255 + $0x40] sm:$0xff]
  %v4325 = vld [vmem:[%s4255 + $0x50] sm:$0xff]
  %v4326 = vld [vmem:[%s4255 + $0x60] sm:$0xff]
  %v4327 = vld [vmem:[%s4255 + $0x70] sm:$0xff]
  %v4328 = vld [vmem:[%s4255 + $0xa0] sm:$0xff]
  %v4329 = vld [vmem:[%s4255 + $0xb0] sm:$0xff]
  %v4330 = vld [vmem:[%s4255 + $0xc0] sm:$0xff]
  %v4331 = vld [vmem:[%s4255 + $0xd0] sm:$0xff]
  %v4332 = vld [vmem:[%s4255 + $0xe0] sm:$0xff]
  %v4333 = vld [vmem:[%s4255 + $0xf0] sm:$0xff]
  %v4334 = vld [vmem:[%s4255 + $0x100] sm:$0xff]
  %v4335 = vld [vmem:[%s4255 + $0x110] sm:$0xff]
  %v4336 = vld [vmem:[%s4255 + $0x1] sm:$0xff]
  %v4337 = vld [vmem:[%s4255 + $0x11] sm:$0xff]
  %v4338 = vld [vmem:[%s4255 + $0x21] sm:$0xff]
  %v4339 = vld [vmem:[%s4255 + $0x31] sm:$0xff]
  %v4340 = vld [vmem:[%s4255 + $0x41] sm:$0xff]
  %v4341 = vld [vmem:[%s4255 + $0x51] sm:$0xff]
  %v4342 = vld [vmem:[%s4255 + $0x61] sm:$0xff]
  %v4343 = vld [vmem:[%s4255 + $0x71] sm:$0xff]
  %v4344 = vld [vmem:[%s4255 + $0xa1] sm:$0xff]
  %v4345 = vld [vmem:[%s4255 + $0xb1] sm:$0xff]
  %v4346 = vld [vmem:[%s4255 + $0xc1] sm:$0xff]
  %v4347 = vld [vmem:[%s4255 + $0xd1] sm:$0xff]
  %v4348 = vld [vmem:[%s4255 + $0xe1] sm:$0xff]
  %v4349 = vld [vmem:[%s4255 + $0xf1] sm:$0xff]
  %v4350 = vld [vmem:[%s4255 + $0x101] sm:$0xff]
  %v4351 = vld [vmem:[%s4255 + $0x111] sm:$0xff]
  %v4352 = vld [vmem:[%s4255 + $0x2] sm:$0xff]
  %v4353 = vld [vmem:[%s4255 + $0x12] sm:$0xff]
  %v4354 = vld [vmem:[%s4255 + $0x22] sm:$0xff]
  %v4355 = vld [vmem:[%s4255 + $0x32] sm:$0xff]
  %v4356 = vld [vmem:[%s4255 + $0x42] sm:$0xff]
  %v4357 = vld [vmem:[%s4255 + $0x52] sm:$0xff]
  %v4358 = vld [vmem:[%s4255 + $0x62] sm:$0xff]
  %v4359 = vld [vmem:[%s4255 + $0x72] sm:$0xff]
  %v4360 = vld [vmem:[%s4255 + $0xa2] sm:$0xff]
  %v4361 = vld [vmem:[%s4255 + $0xb2] sm:$0xff]
  %v4362 = vld [vmem:[%s4255 + $0xc2] sm:$0xff]
  %v4363 = vld [vmem:[%s4255 + $0xd2] sm:$0xff]
  %v4364 = vld [vmem:[%s4255 + $0xe2] sm:$0xff]
  %v4365 = vld [vmem:[%s4255 + $0xf2] sm:$0xff]
  %v4366 = vld [vmem:[%s4255 + $0x102] sm:$0xff]
  %v4367 = vld [vmem:[%s4255 + $0x112] sm:$0xff]
  %s4368 = scalar_lea.vmem [#allocation3], 32
  %v4369 = vld [vmem:[%s4368] sm:$0xff]
  %v4370 = vld [vmem:[%s4368 + $0x10] sm:$0xff]
  %v4371 = vld [vmem:[%s4368 + $0x20] sm:$0xff]
  %v4372 = vld [vmem:[%s4368 + $0x30] sm:$0xff]
  %v4373 = vld [vmem:[%s4368 + $0x40] sm:$0xff]
  %v4374 = vld [vmem:[%s4368 + $0x50] sm:$0xff]
  %v4375 = vld [vmem:[%s4368 + $0x60] sm:$0xff]
  %v4376 = vld [vmem:[%s4368 + $0x70] sm:$0xff]
  %v4377 = vld [vmem:[%s4368 + $0xa0] sm:$0xff]
  %v4378 = vld [vmem:[%s4368 + $0xb0] sm:$0xff]
  %v4379 = vld [vmem:[%s4368 + $0xc0] sm:$0xff]
  %v4380 = vld [vmem:[%s4368 + $0xd0] sm:$0xff]
  %v4381 = vld [vmem:[%s4368 + $0xe0] sm:$0xff]
  %v4382 = vld [vmem:[%s4368 + $0xf0] sm:$0xff]
  %v4383 = vld [vmem:[%s4368 + $0x100] sm:$0xff]
  %v4384 = vld [vmem:[%s4368 + $0x110] sm:$0xff]
  %v4385 = vld [vmem:[%s4368 + $0x1] sm:$0xff]
  %v4386 = vld [vmem:[%s4368 + $0x11] sm:$0xff]
  %v4387 = vld [vmem:[%s4368 + $0x21] sm:$0xff]
  %v4388 = vld [vmem:[%s4368 + $0x31] sm:$0xff]
  %v4389 = vld [vmem:[%s4368 + $0x41] sm:$0xff]
  %v4390 = vld [vmem:[%s4368 + $0x51] sm:$0xff]
  %v4391 = vld [vmem:[%s4368 + $0x61] sm:$0xff]
  %v4392 = vld [vmem:[%s4368 + $0x71] sm:$0xff]
  %v4393 = vld [vmem:[%s4368 + $0xa1] sm:$0xff]
  %v4394 = vld [vmem:[%s4368 + $0xb1] sm:$0xff]
  %v4395 = vld [vmem:[%s4368 + $0xc1] sm:$0xff]
  %v4396 = vld [vmem:[%s4368 + $0xd1] sm:$0xff]
  %v4397 = vld [vmem:[%s4368 + $0xe1] sm:$0xff]
  %v4398 = vld [vmem:[%s4368 + $0xf1] sm:$0xff]
  %v4399 = vld [vmem:[%s4368 + $0x101] sm:$0xff]
  %v4400 = vld [vmem:[%s4368 + $0x111] sm:$0xff]
  %v4401 = vld [vmem:[%s4368 + $0x2] sm:$0xff]
  %v4402 = vld [vmem:[%s4368 + $0x12] sm:$0xff]
  %v4403 = vld [vmem:[%s4368 + $0x22] sm:$0xff]
  %v4404 = vld [vmem:[%s4368 + $0x32] sm:$0xff]
  %v4405 = vld [vmem:[%s4368 + $0x42] sm:$0xff]
  %v4406 = vld [vmem:[%s4368 + $0x52] sm:$0xff]
  %v4407 = vld [vmem:[%s4368 + $0x62] sm:$0xff]
  %v4408 = vld [vmem:[%s4368 + $0x72] sm:$0xff]
  %v4409 = vld [vmem:[%s4368 + $0xa2] sm:$0xff]
  %v4410 = vld [vmem:[%s4368 + $0xb2] sm:$0xff]
  %v4411 = vld [vmem:[%s4368 + $0xc2] sm:$0xff]
  %v4412 = vld [vmem:[%s4368 + $0xd2] sm:$0xff]
  %v4413 = vld [vmem:[%s4368 + $0xe2] sm:$0xff]
  %v4414 = vld [vmem:[%s4368 + $0xf2] sm:$0xff]
  %v4415 = vld [vmem:[%s4368 + $0x102] sm:$0xff]
  %v4416 = vld [vmem:[%s4368 + $0x112] sm:$0xff]
  %4433 = vrot.lane.b32.xlu0 %v4288, 4
  %v4434 = vpop.permute.xlu0 %4433
  %4435 = vrot.lane.b32.xlu0 %v4289, 4
  %v4436 = vpop.permute.xlu0 %4435
  %4437 = vrot.lane.b32.xlu0 %v4290, 4
  %v4438 = vpop.permute.xlu0 %4437
  %4439 = vrot.lane.b32.xlu0 %v4291, 4
  %v4440 = vpop.permute.xlu0 %4439
  %4441 = vrot.lane.b32.xlu0 %v4292, 4
  %v4442 = vpop.permute.xlu0 %4441
  %4443 = vrot.lane.b32.xlu0 %v4293, 4
  %v4444 = vpop.permute.xlu0 %4443
  %4445 = vrot.lane.b32.xlu0 %v4294, 4
  %v4446 = vpop.permute.xlu0 %4445
  %4447 = vrot.lane.b32.xlu0 %v4295, 4
  %v4448 = vpop.permute.xlu0 %4447
  %4449 = vrot.lane.b32.xlu0 %v4296, 4
  %v4450 = vpop.permute.xlu0 %4449
  %4451 = vrot.lane.b32.xlu0 %v4297, 4
  %v4452 = vpop.permute.xlu0 %4451
  %4453 = vrot.lane.b32.xlu0 %v4298, 4
  %v4454 = vpop.permute.xlu0 %4453
  %4455 = vrot.lane.b32.xlu0 %v4299, 4
  %v4456 = vpop.permute.xlu0 %4455
  %4457 = vrot.lane.b32.xlu0 %v4300, 4
  %v4458 = vpop.permute.xlu0 %4457
  %4459 = vrot.lane.b32.xlu0 %v4301, 4
  %v4460 = vpop.permute.xlu0 %4459
  %4461 = vrot.lane.b32.xlu0 %v4302, 4
  %v4462 = vpop.permute.xlu0 %4461
  %4463 = vrot.lane.b32.xlu0 %v4303, 4
  %v4464 = vpop.permute.xlu0 %4463
  %4497 = vrot.lane.b32.xlu0 %v4304, 8
  %v4498 = vpop.permute.xlu0 %4497
  %4499 = vrot.lane.b32.xlu0 %v4305, 8
  %v4500 = vpop.permute.xlu0 %4499
  %4501 = vrot.lane.b32.xlu0 %v4306, 8
  %v4502 = vpop.permute.xlu0 %4501
  %4503 = vrot.lane.b32.xlu0 %v4307, 8
  %v4504 = vpop.permute.xlu0 %4503
  %4505 = vrot.lane.b32.xlu0 %v4308, 8
  %v4506 = vpop.permute.xlu0 %4505
  %4507 = vrot.lane.b32.xlu0 %v4309, 8
  %v4508 = vpop.permute.xlu0 %4507
  %4509 = vrot.lane.b32.xlu0 %v4310, 8
  %v4510 = vpop.permute.xlu0 %4509
  %4511 = vrot.lane.b32.xlu0 %v4311, 8
  %v4512 = vpop.permute.xlu0 %4511
  %4513 = vrot.lane.b32.xlu0 %v4312, 8
  %v4514 = vpop.permute.xlu0 %4513
  %4515 = vrot.lane.b32.xlu0 %v4313, 8
  %v4516 = vpop.permute.xlu0 %4515
  %4517 = vrot.lane.b32.xlu0 %v4314, 8
  %v4518 = vpop.permute.xlu0 %4517
  %4519 = vrot.lane.b32.xlu0 %v4315, 8
  %v4520 = vpop.permute.xlu0 %4519
  %4521 = vrot.lane.b32.xlu0 %v4316, 8
  %v4522 = vpop.permute.xlu0 %4521
  %4523 = vrot.lane.b32.xlu0 %v4317, 8
  %v4524 = vpop.permute.xlu0 %4523
  %4525 = vrot.lane.b32.xlu0 %v4318, 8
  %v4526 = vpop.permute.xlu0 %4525
  %4527 = vrot.lane.b32.xlu0 %v4319, 8
  %v4528 = vpop.permute.xlu0 %4527
  %4561 = vrot.lane.b32.xlu0 %v4320, 12
  %v4562 = vpop.permute.xlu0 %4561
  %4563 = vrot.lane.b32.xlu0 %v4321, 12
  %v4564 = vpop.permute.xlu0 %4563
  %4565 = vrot.lane.b32.xlu0 %v4322, 12
  %v4566 = vpop.permute.xlu0 %4565
  %4567 = vrot.lane.b32.xlu0 %v4323, 12
  %v4568 = vpop.permute.xlu0 %4567
  %4569 = vrot.lane.b32.xlu0 %v4324, 12
  %v4570 = vpop.permute.xlu0 %4569
  %4571 = vrot.lane.b32.xlu0 %v4325, 12
  %v4572 = vpop.permute.xlu0 %4571
  %4573 = vrot.lane.b32.xlu0 %v4326, 12
  %v4574 = vpop.permute.xlu0 %4573
  %4575 = vrot.lane.b32.xlu0 %v4327, 12
  %v4576 = vpop.permute.xlu0 %4575
  %4577 = vrot.lane.b32.xlu0 %v4328, 12
  %v4578 = vpop.permute.xlu0 %4577
  %4579 = vrot.lane.b32.xlu0 %v4329, 12
  %v4580 = vpop.permute.xlu0 %4579
  %4581 = vrot.lane.b32.xlu0 %v4330, 12
  %v4582 = vpop.permute.xlu0 %4581
  %4583 = vrot.lane.b32.xlu0 %v4331, 12
  %v4584 = vpop.permute.xlu0 %4583
  %4585 = vrot.lane.b32.xlu0 %v4332, 12
  %v4586 = vpop.permute.xlu0 %4585
  %4587 = vrot.lane.b32.xlu0 %v4333, 12
  %v4588 = vpop.permute.xlu0 %4587
  %4589 = vrot.lane.b32.xlu0 %v4334, 12
  %v4590 = vpop.permute.xlu0 %4589
  %4591 = vrot.lane.b32.xlu0 %v4335, 12
  %v4592 = vpop.permute.xlu0 %4591
  %4625 = vrot.lane.b32.xlu0 %v4336, 16
  %v4626 = vpop.permute.xlu0 %4625
  %4627 = vrot.lane.b32.xlu0 %v4337, 16
  %v4628 = vpop.permute.xlu0 %4627
  %4629 = vrot.lane.b32.xlu0 %v4338, 16
  %v4630 = vpop.permute.xlu0 %4629
  %4631 = vrot.lane.b32.xlu0 %v4339, 16
  %v4632 = vpop.permute.xlu0 %4631
  %4633 = vrot.lane.b32.xlu0 %v4340, 16
  %v4634 = vpop.permute.xlu0 %4633
  %4635 = vrot.lane.b32.xlu0 %v4341, 16
  %v4636 = vpop.permute.xlu0 %4635
  %4637 = vrot.lane.b32.xlu0 %v4342, 16
  %v4638 = vpop.permute.xlu0 %4637
  %4639 = vrot.lane.b32.xlu0 %v4343, 16
  %v4640 = vpop.permute.xlu0 %4639
  %4641 = vrot.lane.b32.xlu0 %v4344, 16
  %v4642 = vpop.permute.xlu0 %4641
  %4643 = vrot.lane.b32.xlu0 %v4345, 16
  %v4644 = vpop.permute.xlu0 %4643
  %4645 = vrot.lane.b32.xlu0 %v4346, 16
  %v4646 = vpop.permute.xlu0 %4645
  %4647 = vrot.lane.b32.xlu0 %v4347, 16
  %v4648 = vpop.permute.xlu0 %4647
  %4649 = vrot.lane.b32.xlu0 %v4348, 16
  %v4650 = vpop.permute.xlu0 %4649
  %4651 = vrot.lane.b32.xlu0 %v4349, 16
  %v4652 = vpop.permute.xlu0 %4651
  %4653 = vrot.lane.b32.xlu0 %v4350, 16
  %v4654 = vpop.permute.xlu0 %4653
  %4655 = vrot.lane.b32.xlu0 %v4351, 16
  %v4656 = vpop.permute.xlu0 %4655
  %4689 = vrot.lane.b32.xlu0 %v4352, 20
  %v4690 = vpop.permute.xlu0 %4689
  %4691 = vrot.lane.b32.xlu0 %v4353, 20
  %v4692 = vpop.permute.xlu0 %4691
  %4693 = vrot.lane.b32.xlu0 %v4354, 20
  %v4694 = vpop.permute.xlu0 %4693
  %4695 = vrot.lane.b32.xlu0 %v4355, 20
  %v4696 = vpop.permute.xlu0 %4695
  %4697 = vrot.lane.b32.xlu0 %v4356, 20
  %v4698 = vpop.permute.xlu0 %4697
  %4699 = vrot.lane.b32.xlu0 %v4357, 20
  %v4700 = vpop.permute.xlu0 %4699
  %4701 = vrot.lane.b32.xlu0 %v4358, 20
  %v4702 = vpop.permute.xlu0 %4701
  %4703 = vrot.lane.b32.xlu0 %v4359, 20
  %v4704 = vpop.permute.xlu0 %4703
  %4705 = vrot.lane.b32.xlu0 %v4360, 20
  %v4706 = vpop.permute.xlu0 %4705
  %4707 = vrot.lane.b32.xlu0 %v4361, 20
  %v4708 = vpop.permute.xlu0 %4707
  %4709 = vrot.lane.b32.xlu0 %v4362, 20
  %v4710 = vpop.permute.xlu0 %4709
  %4711 = vrot.lane.b32.xlu0 %v4363, 20
  %v4712 = vpop.permute.xlu0 %4711
  %4713 = vrot.lane.b32.xlu0 %v4364, 20
  %v4714 = vpop.permute.xlu0 %4713
  %4715 = vrot.lane.b32.xlu0 %v4365, 20
  %v4716 = vpop.permute.xlu0 %4715
  %4717 = vrot.lane.b32.xlu0 %v4366, 20
  %v4718 = vpop.permute.xlu0 %4717
  %4719 = vrot.lane.b32.xlu0 %v4367, 20
  %v4720 = vpop.permute.xlu0 %4719
  %4753 = vrot.lane.b32.xlu0 %v4369, 24
  %v4754 = vpop.permute.xlu0 %4753
  %4755 = vrot.lane.b32.xlu0 %v4370, 24
  %v4756 = vpop.permute.xlu0 %4755
  %4757 = vrot.lane.b32.xlu0 %v4371, 24
  %v4758 = vpop.permute.xlu0 %4757
  %4759 = vrot.lane.b32.xlu0 %v4372, 24
  %v4760 = vpop.permute.xlu0 %4759
  %4761 = vrot.lane.b32.xlu0 %v4373, 24
  %v4762 = vpop.permute.xlu0 %4761
  %4763 = vrot.lane.b32.xlu0 %v4374, 24
  %v4764 = vpop.permute.xlu0 %4763
  %4765 = vrot.lane.b32.xlu0 %v4375, 24
  %v4766 = vpop.permute.xlu0 %4765
  %4767 = vrot.lane.b32.xlu0 %v4376, 24
  %v4768 = vpop.permute.xlu0 %4767
  %4769 = vrot.lane.b32.xlu0 %v4377, 24
  %v4770 = vpop.permute.xlu0 %4769
  %4771 = vrot.lane.b32.xlu0 %v4378, 24
  %v4772 = vpop.permute.xlu0 %4771
  %4773 = vrot.lane.b32.xlu0 %v4379, 24
  %v4774 = vpop.permute.xlu0 %4773
  %4775 = vrot.lane.b32.xlu0 %v4380, 24
  %v4776 = vpop.permute.xlu0 %4775
  %4777 = vrot.lane.b32.xlu0 %v4381, 24
  %v4778 = vpop.permute.xlu0 %4777
  %4779 = vrot.lane.b32.xlu0 %v4382, 24
  %v4780 = vpop.permute.xlu0 %4779
  %4781 = vrot.lane.b32.xlu0 %v4383, 24
  %v4782 = vpop.permute.xlu0 %4781
  %4783 = vrot.lane.b32.xlu0 %v4384, 24
  %v4784 = vpop.permute.xlu0 %4783
  %4817 = vrot.lane.b32.xlu0 %v4385, 28
  %v4818 = vpop.permute.xlu0 %4817
  %4819 = vrot.lane.b32.xlu0 %v4386, 28
  %v4820 = vpop.permute.xlu0 %4819
  %4821 = vrot.lane.b32.xlu0 %v4387, 28
  %v4822 = vpop.permute.xlu0 %4821
  %4823 = vrot.lane.b32.xlu0 %v4388, 28
  %v4824 = vpop.permute.xlu0 %4823
  %4825 = vrot.lane.b32.xlu0 %v4389, 28
  %v4826 = vpop.permute.xlu0 %4825
  %4827 = vrot.lane.b32.xlu0 %v4390, 28
  %v4828 = vpop.permute.xlu0 %4827
  %4829 = vrot.lane.b32.xlu0 %v4391, 28
  %v4830 = vpop.permute.xlu0 %4829
  %4831 = vrot.lane.b32.xlu0 %v4392, 28
  %v4832 = vpop.permute.xlu0 %4831
  %4833 = vrot.lane.b32.xlu0 %v4393, 28
  %v4834 = vpop.permute.xlu0 %4833
  %4835 = vrot.lane.b32.xlu0 %v4394, 28
  %v4836 = vpop.permute.xlu0 %4835
  %4837 = vrot.lane.b32.xlu0 %v4395, 28
  %v4838 = vpop.permute.xlu0 %4837
  %4839 = vrot.lane.b32.xlu0 %v4396, 28
  %v4840 = vpop.permute.xlu0 %4839
  %4841 = vrot.lane.b32.xlu0 %v4397, 28
  %v4842 = vpop.permute.xlu0 %4841
  %4843 = vrot.lane.b32.xlu0 %v4398, 28
  %v4844 = vpop.permute.xlu0 %4843
  %4845 = vrot.lane.b32.xlu0 %v4399, 28
  %v4846 = vpop.permute.xlu0 %4845
  %4847 = vrot.lane.b32.xlu0 %v4400, 28
  %v4848 = vpop.permute.xlu0 %4847
  %4881 = vrot.lane.b32.xlu0 %v4401, 32
  %v4882 = vpop.permute.xlu0 %4881
  %4883 = vrot.lane.b32.xlu0 %v4402, 32
  %v4884 = vpop.permute.xlu0 %4883
  %4885 = vrot.lane.b32.xlu0 %v4403, 32
  %v4886 = vpop.permute.xlu0 %4885
  %4887 = vrot.lane.b32.xlu0 %v4404, 32
  %v4888 = vpop.permute.xlu0 %4887
  %4889 = vrot.lane.b32.xlu0 %v4405, 32
  %v4890 = vpop.permute.xlu0 %4889
  %4891 = vrot.lane.b32.xlu0 %v4406, 32
  %v4892 = vpop.permute.xlu0 %4891
  %4893 = vrot.lane.b32.xlu0 %v4407, 32
  %v4894 = vpop.permute.xlu0 %4893
  %4895 = vrot.lane.b32.xlu0 %v4408, 32
  %v4896 = vpop.permute.xlu0 %4895
  %4897 = vrot.lane.b32.xlu0 %v4409, 32
  %v4898 = vpop.permute.xlu0 %4897
  %4899 = vrot.lane.b32.xlu0 %v4410, 32
  %v4900 = vpop.permute.xlu0 %4899
  %4901 = vrot.lane.b32.xlu0 %v4411, 32
  %v4902 = vpop.permute.xlu0 %4901
  %4903 = vrot.lane.b32.xlu0 %v4412, 32
  %v4904 = vpop.permute.xlu0 %4903
  %4905 = vrot.lane.b32.xlu0 %v4413, 32
  %v4906 = vpop.permute.xlu0 %4905
  %4907 = vrot.lane.b32.xlu0 %v4414, 32
  %v4908 = vpop.permute.xlu0 %4907
  %4909 = vrot.lane.b32.xlu0 %v4415, 32
  %v4910 = vpop.permute.xlu0 %4909
  %4911 = vrot.lane.b32.xlu0 %v4416, 32
  %v4912 = vpop.permute.xlu0 %4911
  %v4929 = vsel %vm31, %v4272, %v4434
  %v4930 = vsel %vm31, %v4273, %v4436
  %v4931 = vsel %vm31, %v4274, %v4438
  %v4932 = vsel %vm31, %v4275, %v4440
  %v4933 = vsel %vm31, %v4276, %v4442
  %v4934 = vsel %vm31, %v4277, %v4444
  %v4935 = vsel %vm31, %v4278, %v4446
  %v4936 = vsel %vm31, %v4279, %v4448
  %v4937 = vsel %vm31, %v4280, %v4450
  %v4938 = vsel %vm31, %v4281, %v4452
  %v4939 = vsel %vm31, %v4282, %v4454
  %v4940 = vsel %vm31, %v4283, %v4456
  %v4941 = vsel %vm31, %v4284, %v4458
  %v4942 = vsel %vm31, %v4285, %v4460
  %v4943 = vsel %vm31, %v4286, %v4462
  %v4944 = vsel %vm31, %v4287, %v4464
  %v4945 = vsel %vm2959, %v4929, %v4498
  %v4946 = vsel %vm2959, %v4930, %v4500
  %v4947 = vsel %vm2959, %v4931, %v4502
  %v4948 = vsel %vm2959, %v4932, %v4504
  %v4949 = vsel %vm2959, %v4933, %v4506
  %v4950 = vsel %vm2959, %v4934, %v4508
  %v4951 = vsel %vm2959, %v4935, %v4510
  %v4952 = vsel %vm2959, %v4936, %v4512
  %v4953 = vsel %vm2959, %v4937, %v4514
  %v4954 = vsel %vm2959, %v4938, %v4516
  %v4955 = vsel %vm2959, %v4939, %v4518
  %v4956 = vsel %vm2959, %v4940, %v4520
  %v4957 = vsel %vm2959, %v4941, %v4522
  %v4958 = vsel %vm2959, %v4942, %v4524
  %v4959 = vsel %vm2959, %v4943, %v4526
  %v4960 = vsel %vm2959, %v4944, %v4528
  %v4961 = vsel %vm3024, %v4945, %v4562
  %v4962 = vsel %vm3024, %v4946, %v4564
  %v4963 = vsel %vm3024, %v4947, %v4566
  %v4964 = vsel %vm3024, %v4948, %v4568
  %v4965 = vsel %vm3024, %v4949, %v4570
  %v4966 = vsel %vm3024, %v4950, %v4572
  %v4967 = vsel %vm3024, %v4951, %v4574
  %v4968 = vsel %vm3024, %v4952, %v4576
  %v4969 = vsel %vm3024, %v4953, %v4578
  %v4970 = vsel %vm3024, %v4954, %v4580
  %v4971 = vsel %vm3024, %v4955, %v4582
  %v4972 = vsel %vm3024, %v4956, %v4584
  %v4973 = vsel %vm3024, %v4957, %v4586
  %v4974 = vsel %vm3024, %v4958, %v4588
  %v4975 = vsel %vm3024, %v4959, %v4590
  %v4976 = vsel %vm3024, %v4960, %v4592
  %v4977 = vsel %vm3089, %v4961, %v4626
  %v4978 = vsel %vm3089, %v4962, %v4628
  %v4979 = vsel %vm3089, %v4963, %v4630
  %v4980 = vsel %vm3089, %v4964, %v4632
  %v4981 = vsel %vm3089, %v4965, %v4634
  %v4982 = vsel %vm3089, %v4966, %v4636
  %v4983 = vsel %vm3089, %v4967, %v4638
  %v4984 = vsel %vm3089, %v4968, %v4640
  %v4985 = vsel %vm3089, %v4969, %v4642
  %v4986 = vsel %vm3089, %v4970, %v4644
  %v4987 = vsel %vm3089, %v4971, %v4646
  %v4988 = vsel %vm3089, %v4972, %v4648
  %v4989 = vsel %vm3089, %v4973, %v4650
  %v4990 = vsel %vm3089, %v4974, %v4652
  %v4991 = vsel %vm3089, %v4975, %v4654
  %v4992 = vsel %vm3089, %v4976, %v4656
  %v4993 = vsel %vm3154, %v4977, %v4690
  %v4994 = vsel %vm3154, %v4978, %v4692
  %v4995 = vsel %vm3154, %v4979, %v4694
  %v4996 = vsel %vm3154, %v4980, %v4696
  %v4997 = vsel %vm3154, %v4981, %v4698
  %v4998 = vsel %vm3154, %v4982, %v4700
  %v4999 = vsel %vm3154, %v4983, %v4702
  %v5000 = vsel %vm3154, %v4984, %v4704
  %v5001 = vsel %vm3154, %v4985, %v4706
  %v5002 = vsel %vm3154, %v4986, %v4708
  %v5003 = vsel %vm3154, %v4987, %v4710
  %v5004 = vsel %vm3154, %v4988, %v4712
  %v5005 = vsel %vm3154, %v4989, %v4714
  %v5006 = vsel %vm3154, %v4990, %v4716
  %v5007 = vsel %vm3154, %v4991, %v4718
  %v5008 = vsel %vm3154, %v4992, %v4720
  %v5009 = vsel %vm3219, %v4993, %v4754
  %v5010 = vsel %vm3219, %v4994, %v4756
  %v5011 = vsel %vm3219, %v4995, %v4758
  %v5012 = vsel %vm3219, %v4996, %v4760
  %v5013 = vsel %vm3219, %v4997, %v4762
  %v5014 = vsel %vm3219, %v4998, %v4764
  %v5015 = vsel %vm3219, %v4999, %v4766
  %v5016 = vsel %vm3219, %v5000, %v4768
  %v5017 = vsel %vm3219, %v5001, %v4770
  %v5018 = vsel %vm3219, %v5002, %v4772
  %v5019 = vsel %vm3219, %v5003, %v4774
  %v5020 = vsel %vm3219, %v5004, %v4776
  %v5021 = vsel %vm3219, %v5005, %v4778
  %v5022 = vsel %vm3219, %v5006, %v4780
  %v5023 = vsel %vm3219, %v5007, %v4782
  %v5024 = vsel %vm3219, %v5008, %v4784
  %v5025 = vsel %vm3284, %v5009, %v4818
  %v5026 = vsel %vm3284, %v5010, %v4820
  %v5027 = vsel %vm3284, %v5011, %v4822
  %v5028 = vsel %vm3284, %v5012, %v4824
  %v5029 = vsel %vm3284, %v5013, %v4826
  %v5030 = vsel %vm3284, %v5014, %v4828
  %v5031 = vsel %vm3284, %v5015, %v4830
  %v5032 = vsel %vm3284, %v5016, %v4832
  %v5033 = vsel %vm3284, %v5017, %v4834
  %v5034 = vsel %vm3284, %v5018, %v4836
  %v5035 = vsel %vm3284, %v5019, %v4838
  %v5036 = vsel %vm3284, %v5020, %v4840
  %v5037 = vsel %vm3284, %v5021, %v4842
  %v5038 = vsel %vm3284, %v5022, %v4844
  %v5039 = vsel %vm3284, %v5023, %v4846
  %v5040 = vsel %vm3284, %v5024, %v4848
  %v5041 = vsel %vm3349, %v5025, %v4882
  %v5042 = vsel %vm3349, %v5026, %v4884
  %v5043 = vsel %vm3349, %v5027, %v4886
  %v5044 = vsel %vm3349, %v5028, %v4888
  %v5045 = vsel %vm3349, %v5029, %v4890
  %v5046 = vsel %vm3349, %v5030, %v4892
  %v5047 = vsel %vm3349, %v5031, %v4894
  %v5048 = vsel %vm3349, %v5032, %v4896
  %v5049 = vsel %vm3349, %v5033, %v4898
  %v5050 = vsel %vm3349, %v5034, %v4900
  %v5051 = vsel %vm3349, %v5035, %v4902
  %v5052 = vsel %vm3349, %v5036, %v4904
  %v5053 = vsel %vm3349, %v5037, %v4906
  %v5054 = vsel %vm3349, %v5038, %v4908
  %v5055 = vsel %vm3349, %v5039, %v4910
  %v5056 = vsel %vm3349, %v5040, %v4912
  %v5057 = vld [vmem:[%s3] sm:$0xff]
  %v5058 = vld [vmem:[%s3 + $0x8] sm:$0xff]
  %v5059 = vld [vmem:[%s3 + $0x10] sm:$0xff]
  %v5060 = vld [vmem:[%s3 + $0x18] sm:$0xff]
  %v5061 = vld [vmem:[%s3 + $0x20] sm:$0xf]
  %v5063 = vsel %vm3419, %v5041, 0
  %v5066 = vsel %vm3419, %v5042, 0
  %v5069 = vsel %vm3419, %v5043, 0
  %v5072 = vsel %vm3419, %v5044, 0
  %v5075 = vsel %vm3419, %v5045, 0
  %v5078 = vsel %vm3419, %v5046, 0
  %v5081 = vsel %vm3419, %v5047, 0
  %v5084 = vsel %vm3419, %v5048, 0
  %v5087 = vsel %vm3419, %v5049, 0
  %v5090 = vsel %vm3419, %v5050, 0
  %v5093 = vsel %vm3419, %v5051, 0
  %v5096 = vsel %vm3419, %v5052, 0
  %v5099 = vsel %vm3419, %v5053, 0
  %v5102 = vsel %vm3419, %v5054, 0
  %v5105 = vsel %vm3419, %v5055, 0
  %v5108 = vsel %vm3419, %v5056, 0
  %v5111 = vsel %vm3612, %v5061, 0
  %5113 = vmatprep.subr.mxu0 0.0
  %5114 = vmatpush1.msra.mxu0 %v5057
  %5115 = vmatprep.subr.mxu0 0.0
  %5116 = vmatpush1.msra.mxu0 %v5058
  %5117 = vmatprep.subr.mxu0 0.0
  %5118 = vmatpush1.msra.mxu0 %v5059
  %5119 = vmatprep.subr.mxu0 0.0
  %5120 = vmatpush1.msra.mxu0 %v5060
  %5121 = vmatprep.subr.mxu0 0.0
  %5122 = vmatpush1.msra.mxu0 %v5111
  %5123 = vmatprep.subr.mxu0 0.0
  %5124 = vmatpush1.msra.mxu0 0.0
  %5125 = vmatprep.subr.mxu0 0.0
  %5126 = vmatpush1.msra.mxu0 0.0
  %5127 = vmatprep.subr.mxu0 0.0
  %5128 = vmatpush1.msra.mxu0 0.0
  %5129 = vmatprep.subr.mxu0 0.0
  %5130 = vmatpush1.msra.mxu0 0.0
  %5131 = vmatprep.subr.mxu0 0.0
  %5132 = vmatpush1.msra.mxu0 0.0
  %5133 = vmatprep.subr.mxu0 0.0
  %5134 = vmatpush1.msra.mxu0 0.0
  %5135 = vmatprep.subr.mxu0 0.0
  %5136 = vmatpush1.msra.mxu0 0.0
  %5137 = vmatprep.subr.mxu0 0.0
  %5138 = vmatpush1.msra.mxu0 0.0
  %5139 = vmatprep.subr.mxu0 0.0
  %5140 = vmatpush1.msra.mxu0 0.0
  %5141 = vmatprep.subr.mxu0 0.0
  %5142 = vmatpush1.msra.mxu0 0.0
  %5143 = vmatprep.subr.mxu0 0.0
  %5144 = vmatpush1.msra.mxu0 0.0
  %5145 = vmatprep.subr.mxu0 0.0
  %5146 = vmatpush1.msra.mxu0 0.0
  %5147 = vmatprep.subr.mxu0 0.0
  %5148 = vmatpush1.msra.mxu0 0.0
  %5149 = vmatprep.subr.mxu0 0.0
  %5150 = vmatpush1.msra.mxu0 0.0
  %5151 = vmatprep.subr.mxu0 0.0
  %5152 = vmatpush1.msra.mxu0 0.0
  %5153 = vmatprep.subr.mxu0 0.0
  %5154 = vmatpush1.msra.mxu0 0.0
  %5155 = vmatprep.subr.mxu0 0.0
  %5156 = vmatpush1.msra.mxu0 0.0
  %5157 = vmatprep.subr.mxu0 0.0
  %5158 = vmatpush1.msra.mxu0 0.0
  %5159 = vmatprep.subr.mxu0 0.0
  %5160 = vmatpush1.msra.mxu0 0.0
  %5161 = vmatprep.subr.mxu0 0.0
  %5162 = vmatpush1.msra.mxu0 0.0
  %5163 = vmatprep.subr.mxu0 0.0
  %5164 = vmatpush1.msra.mxu0 0.0
  %5165 = vmatprep.subr.mxu0 0.0
  %5166 = vmatpush1.msra.mxu0 0.0
  %5167 = vmatprep.subr.mxu0 0.0
  %5168 = vmatpush1.msra.mxu0 0.0
  %5169 = vmatprep.subr.mxu0 0.0
  %5170 = vmatpush1.msra.mxu0 0.0
  %5171 = vmatprep.subr.mxu0 0.0
  %5172 = vmatpush1.msra.mxu0 0.0
  %5173 = vmatprep.subr.mxu0 0.0
  %5174 = vmatpush1.msra.mxu0 0.0
  %5175 = vmatprep.subr.mxu0 0.0
  %5176 = vmatpush1.msra.mxu0 0.0
  %5177 = vmatprep.mubr.f32.mxu0 0.0
  %5178 = vmatmul.mubr.f32.gmra.mrb[0].mxu0 %v5063
  %v5179 = vpop.f32.mrb[0].mxu0
  %v5180 = vadd.f32 0.0, %v5179
  %v5181 = vpop.f32.mrb[0].mxu0
  %5182 = vmatprep.mubr.f32.mxu0 0.0
  %5183 = vmatmul.mubr.f32.gmra.mrb[0].mxu0 %v5066
  %v5184 = vpop.f32.mrb[0].mxu0
  %v5185 = vadd.f32 0.0, %v5184
  %v5186 = vpop.f32.mrb[0].mxu0
  %5187 = vmatprep.mubr.f32.mxu0 0.0
  %5188 = vmatmul.mubr.f32.gmra.mrb[0].mxu0 %v5069
  %v5189 = vpop.f32.mrb[0].mxu0
  %v5190 = vadd.f32 0.0, %v5189
  %v5191 = vpop.f32.mrb[0].mxu0
  %5192 = vmatprep.mubr.f32.mxu0 0.0
  %5193 = vmatmul.mubr.f32.gmra.mrb[0].mxu0 %v5072
  %v5194 = vpop.f32.mrb[0].mxu0
  %v5195 = vadd.f32 0.0, %v5194
  %v5196 = vpop.f32.mrb[0].mxu0
  %5197 = vmatprep.mubr.f32.mxu0 0.0
  %5198 = vmatmul.mubr.f32.gmra.mrb[0].mxu0 %v5075
  %v5199 = vpop.f32.mrb[0].mxu0
  %v5200 = vadd.f32 0.0, %v5199
  %v5201 = vpop.f32.mrb[0].mxu0
  %5202 = vmatprep.mubr.f32.mxu0 0.0
  %5203 = vmatmul.mubr.f32.gmra.mrb[0].mxu0 %v5078
  %v5204 = vpop.f32.mrb[0].mxu0
  %v5205 = vadd.f32 0.0, %v5204
  %v5206 = vpop.f32.mrb[0].mxu0
  %5207 = vmatprep.mubr.f32.mxu0 0.0
  %5208 = vmatmul.mubr.f32.gmra.mrb[0].mxu0 %v5081
  %v5209 = vpop.f32.mrb[0].mxu0
  %v5210 = vadd.f32 0.0, %v5209
  %v5211 = vpop.f32.mrb[0].mxu0
  %5212 = vmatprep.mubr.f32.mxu0 0.0
  %5213 = vmatmul.mubr.f32.gmra.mrb[0].mxu0 %v5084
  %v5214 = vpop.f32.mrb[0].mxu0
  %v5215 = vadd.f32 0.0, %v5214
  %v5216 = vpop.f32.mrb[0].mxu0
  %5217 = vmatprep.mubr.f32.mxu0 0.0
  %5218 = vmatmul.mubr.f32.gmra.mrb[0].mxu0 %v5087
  %v5219 = vpop.f32.mrb[0].mxu0
  %v5220 = vadd.f32 0.0, %v5219
  %v5221 = vpop.f32.mrb[0].mxu0
  %5222 = vmatprep.mubr.f32.mxu0 0.0
  %5223 = vmatmul.mubr.f32.gmra.mrb[0].mxu0 %v5090
  %v5224 = vpop.f32.mrb[0].mxu0
  %v5225 = vadd.f32 0.0, %v5224
  %v5226 = vpop.f32.mrb[0].mxu0
  %5227 = vmatprep.mubr.f32.mxu0 0.0
  %5228 = vmatmul.mubr.f32.gmra.mrb[0].mxu0 %v5093
  %v5229 = vpop.f32.mrb[0].mxu0
  %v5230 = vadd.f32 0.0, %v5229
  %v5231 = vpop.f32.mrb[0].mxu0
  %5232 = vmatprep.mubr.f32.mxu0 0.0
  %5233 = vmatmul.mubr.f32.gmra.mrb[0].mxu0 %v5096
  %v5234 = vpop.f32.mrb[0].mxu0
  %v5235 = vadd.f32 0.0, %v5234
  %v5236 = vpop.f32.mrb[0].mxu0
  %5237 = vmatprep.mubr.f32.mxu0 0.0
  %5238 = vmatmul.mubr.f32.gmra.mrb[0].mxu0 %v5099
  %v5239 = vpop.f32.mrb[0].mxu0
  %v5240 = vadd.f32 0.0, %v5239
  %v5241 = vpop.f32.mrb[0].mxu0
  %5242 = vmatprep.mubr.f32.mxu0 0.0
  %5243 = vmatmul.mubr.f32.gmra.mrb[0].mxu0 %v5102
  %v5244 = vpop.f32.mrb[0].mxu0
  %v5245 = vadd.f32 0.0, %v5244
  %v5246 = vpop.f32.mrb[0].mxu0
  %5247 = vmatprep.mubr.f32.mxu0 0.0
  %5248 = vmatmul.mubr.f32.gmra.mrb[0].mxu0 %v5105
  %v5249 = vpop.f32.mrb[0].mxu0
  %v5250 = vadd.f32 0.0, %v5249
  %v5251 = vpop.f32.mrb[0].mxu0
  %5252 = vmatprep.mubr.f32.mxu0 0.0
  %5253 = vmatmul.mubr.f32.gmra.mrb[0].mxu0 %v5108
  %v5254 = vpop.f32.mrb[0].mxu0
  %v5255 = vadd.f32 0.0, %v5254
  %v5256 = vpop.f32.mrb[0].mxu0
  %5257 = vdwg.mxu0
  %5258 = vxpose.xlu0.b32.start [1/16] %v5180, 128
  %5259 = vxpose.xlu0.b32.cont [2/16] %v5185, 128
  %5260 = vxpose.xlu0.b32.cont [3/16] %v5190, 128
  %5261 = vxpose.xlu0.b32.cont [4/16] %v5195, 128
  %5262 = vxpose.xlu0.b32.cont [5/16] %v5200, 128
  %5263 = vxpose.xlu0.b32.cont [6/16] %v5205, 128
  %5264 = vxpose.xlu0.b32.cont [7/16] %v5210, 128
  %5265 = vxpose.xlu0.b32.cont [8/16] %v5215, 128
  %5266 = vxpose.xlu0.b32.cont [9/16] %v5220, 128
  %5267 = vxpose.xlu0.b32.cont [10/16] %v5225, 128
  %5268 = vxpose.xlu0.b32.cont [11/16] %v5230, 128
  %5269 = vxpose.xlu0.b32.cont [12/16] %v5235, 128
  %5270 = vxpose.xlu0.b32.cont [13/16] %v5240, 128
  %5271 = vxpose.xlu0.b32.cont [14/16] %v5245, 128
  %5272 = vxpose.xlu0.b32.cont [15/16] %v5250, 128
  %5273 = vxpose.xlu0.b32.end [16/16] %v5255, 128
  %v5274 = vpop.trf.xlu0
  %v5275 = vpop.trf.xlu0
  %v5276 = vpop.trf.xlu0
  %v5277 = vpop.trf.xlu0
  %v5278 = vpop.trf.xlu0
  %v5279 = vpop.trf.xlu0
  %v5280 = vpop.trf.xlu0
  %v5281 = vpop.trf.xlu0
  %v5282 = vpop.trf.xlu0
  %v5283 = vpop.trf.xlu0
  %v5284 = vpop.trf.xlu0
  %v5285 = vpop.trf.xlu0
  %v5286 = vpop.trf.xlu0
  %v5287 = vpop.trf.xlu0
  %v5288 = vpop.trf.xlu0
  %v5289 = vpop.trf.xlu0
  %v5290 = vsel %vm3612, %v5274, 0.0
  %5291 = vadd.xlane.f32.xlu0 %v5290
  %v5292 = vpop.xlane.xlu0 %5291
  %v5293 = vrcp.pop 128.0
  %v5294 = vmul.f32 %v5292, %v5293
  %v5295 = vsub.f32 %v5274, %v5294
  %v5296 = vmul.f32 %v5295, %v5295
  %v5297 = vsel %vm3612, %v5296, 0.0
  %5298 = vadd.xlane.f32.xlu0 %v5297
  %v5299 = vpop.xlane.xlu0 %5298
  %v5300 = vmul.f32 %v5299, %v5293
  %v5301 = vadd.f32 %v5300, 1e-05
  %v5302 = vrsqrt.pop %v5301
  %v5303 = vmul.f32 %v5295, %v5302
  %v5304 = vld [vmem:[%s6] sm:$0xf]
  %5306 = vset.pattern.permute.xlu0 0
  %5307 = vperm.xlu0 %5306, %v5304
  %v5308 = vpop.permute.xlu0 %5307
  %v5310 = vmul.f32 %v5303, %v5308
  %v5311 = vld [vmem:[%s7] sm:$0xf]
  %5313 = vset.pattern.permute.xlu0 0
  %5314 = vperm.xlu0 %5313, %v5311
  %v5315 = vpop.permute.xlu0 %5314
  %v5317 = vadd.f32 %v5310, %v5315
  %v5318 = vmax.f32 %v5317, 0.0
  %vm5319 = vcmask 519168
  %5320 = vst.msk [vmem:[%s9] sm:$0xf] %vm5319, %v5318
  %5322 = vrot.lane.b32.xlu0 %v5318, 64
  %v5323 = vpop.permute.xlu0 %5322
  %s5325 = scalar_lea.vmem %s9, 4
  %5326 = vst.msk [vmem:[%s5325] sm:$0xf] %vm5319, %v5323
  // Predicated region
  $region34: #{_first_octave_cbr_impl.1} parent=0 // pred_check
    _
  $region35: #{_first_octave_cbr_impl.1} parent=0 // pred_check_branch
    %5328 = sbr.rel (0) target = $region37
  $region36: #{_first_octave_cbr_impl.1} parent=0 // pred_region
    _
  $region37: #{_first_octave_cbr_impl.1} parent=0 // pred_fallthru
    _
  // Predicated region
  $region38: #{_first_octave_cbr_impl.1} parent=0 // pred_check
    _
  $region39: #{_first_octave_cbr_impl.1} parent=0 // pred_check_branch
    %5330 = sbr.rel (0) target = $region41
  $region40: #{_first_octave_cbr_impl.1} parent=0 // pred_region
    _
  $region41: #{_first_octave_cbr_impl.1} parent=0 // pred_fallthru
    _
  // Predicated region
  $region42: #{_first_octave_cbr_impl.1} parent=0 // pred_check
    _
  $region43: #{_first_octave_cbr_impl.1} parent=0 // pred_check_branch
    %5332 = sbr.rel (0) target = $region45
  $region44: #{_first_octave_cbr_impl.1} parent=0 // pred_region
    _
  $region45: #{_first_octave_cbr_impl.1} parent=0 // pred_fallthru
    _
  // Predicated region
  $region46: #{_first_octave_cbr_impl.1} parent=0 // pred_check
    _
  $region47: #{_first_octave_cbr_impl.1} parent=0 // pred_check_branch
    %5334 = sbr.rel (0) target = $region49
  $region48: #{_first_octave_cbr_impl.1} parent=0 // pred_region
    _
  $region49: #{_first_octave_cbr_impl.1} parent=0 // pred_fallthru
    _

</llo_original>
